<compile_context>
chip_gen: v5e
topology: v5e:2x2
jax: 0.10.0
libtpu: 0.0.40
codegen_flags: <defaults>
</compile_context>

<pallas_src>
import jax
import jax.numpy as jnp
from jax.experimental import pallas as pl
from jax.experimental.pallas import tpu as pltpu
import numpy as np


def _lstm_linear_kernel(x_ref, wih0_ref, whh0_ref, b0_ref,
                        wih1_ref, whh1_ref, b1_ref,
                        wlin_ref, blin_ref, out_ref,
                        h0_ref, c0_ref, h1_ref, c1_ref, h0seq_ref):
    B, TT, F = x_ref.shape
    H = whh0_ref.shape[0]
    G = 4 * H

    @pl.when(pl.program_id(0) == 0)
    def _init():
        h0_ref[...] = jnp.zeros_like(h0_ref)
        c0_ref[...] = jnp.zeros_like(c0_ref)
        h1_ref[...] = jnp.zeros_like(h1_ref)
        c1_ref[...] = jnp.zeros_like(c1_ref)

    def cell(gates, c):
        # Full-width transcendentals over (B, 4H) on the EUP, then slice.
        sg = jax.nn.sigmoid(gates)
        tg = jnp.tanh(gates)
        i_g = sg[:, 0:H]
        f_g = sg[:, H:2 * H]
        o_g = sg[:, 3 * H:4 * H]
        g_g = tg[:, 2 * H:3 * H]
        c_new = f_g * c + i_g * g_g
        h_new = o_g * jnp.tanh(c_new)
        return h_new, c_new

    # ---- layer 0: input projection hoisted out of the recurrence -------------
    x_flat = x_ref[...].reshape(B * TT, F)                    # rows: b*TT + t
    xg0 = (jnp.dot(x_flat, wih0_ref[...], preferred_element_type=jnp.float32)
           + b0_ref[...])                                     # bias broadcast once
    xg0 = xg0.reshape(B, TT, G)

    whh0 = whh0_ref[...]
    h, c = h0_ref[...], c0_ref[...]
    for t in range(TT):                                       # fully unrolled
        gates = xg0[:, t, :] + jnp.dot(h, whh0, preferred_element_type=jnp.float32)
        h, c = cell(gates, c)
        h0seq_ref[t * B:(t + 1) * B, :] = h                   # time-major staging
    h0_ref[...] = h
    c0_ref[...] = c

    # ---- layer 1: input projection over the staged layer-0 sequence ----------
    # TODO(synk): nn.LSTM applies dropout(p=0.2) to the layer-0 outputs only in
    # training mode; inference semantics (no dropout) are implemented here.
    xg1 = (jnp.dot(h0seq_ref[...], wih1_ref[...], preferred_element_type=jnp.float32)
           + b1_ref[...])                                     # (TT*B, 4H), rows: t*B + b

    whh1 = whh1_ref[...]
    h, c = h1_ref[...], c1_ref[...]
    for t in range(TT):                                       # fully unrolled
        gates = (xg1[t * B:(t + 1) * B, :]
                 + jnp.dot(h, whh1, preferred_element_type=jnp.float32))
        h, c = cell(gates, c)
    h1_ref[...] = h
    c1_ref[...] = c

    # hidden[-1] -> last layer's h, then Linear(H -> 48); written once at the end.
    @pl.when(pl.program_id(0) == pl.num_programs(0) - 1)
    def _finalize():
        out_ref[...] = (jnp.dot(h1_ref[...], wlin_ref[...],
                                preferred_element_type=jnp.float32)
                        + blin_ref[...])


def ts_model_forward(x_btf, params, *, time_tile=8):
    """x_btf: (B, T, F) float32, batch_first like the PyTorch module."""
    (wih0, whh0, b0, wih1, whh1, b1, wlin, blin) = params
    x = x_btf.astype(jnp.float32)
    B, T, F = x.shape
    H = whh0.shape[0]
    n_out = wlin.shape[1]
    TT = min(time_tile, T)
    assert T % TT == 0, "sequence length must be a multiple of the time tile"
    nt = T // TT

    def w_spec(a):
        zeros = (0,) * a.ndim
        return pl.BlockSpec(a.shape, lambda t: zeros)         # resident, fetched once

    inputs = (x, wih0, whh0, b0, wih1, whh1, b1, wlin, blin)
    grid_spec = pltpu.PrefetchScalarGridSpec(
        num_scalar_prefetch=0,
        grid=(nt,),
        in_specs=[pl.BlockSpec((B, TT, F), lambda t: (0, t, 0))]
                 + [w_spec(a) for a in inputs[1:]],
        out_specs=pl.BlockSpec((B, n_out), lambda t: (0, 0)),
        scratch_shapes=[pltpu.VMEM((B, H), jnp.float32),        # h0 carry
                        pltpu.VMEM((B, H), jnp.float32),        # c0 carry
                        pltpu.VMEM((B, H), jnp.float32),        # h1 carry
                        pltpu.VMEM((B, H), jnp.float32),        # c1 carry
                        pltpu.VMEM((TT * B, H), jnp.float32)],  # layer-0 h sequence
    )
    # Note: for B >= 16 on v7x, a leading batch grid axis marked "parallel" would
    # shard the recurrence across the two TensorCores; omitted at this batch size.
    return pl.pallas_call(
        _lstm_linear_kernel,
        out_shape=jax.ShapeDtypeStruct((B, n_out), jnp.float32),
        grid_spec=grid_spec,
        compiler_params=pltpu.CompilerParams(
            dimension_semantics=("arbitrary",),    # state carried across time tiles
            vmem_limit_bytes=48 * 1024 * 1024),
    )(*inputs)


def init_params(key, n_features, n_hidden, n_out=48):
    """Deterministic init mirroring nn.LSTM(2 layers) + nn.Linear shapes."""
    k = 1.0 / np.sqrt(n_hidden)
    keys = jax.random.split(key, 12)
    u = lambda kk, shape: jax.random.uniform(kk, shape, jnp.float32, -k, k)

    # layer 0: W_ih (4H, F), W_hh (4H, H), biases (4H,)
    w_ih0 = u(keys[0], (4 * n_hidden, n_features))
    w_hh0 = u(keys[1], (4 * n_hidden, n_hidden))
    b_ih0 = u(keys[2], (4 * n_hidden,))
    b_hh0 = u(keys[3], (4 * n_hidden,))
    # layer 1: input size = n_hidden
    w_ih1 = u(keys[4], (4 * n_hidden, n_hidden))
    w_hh1 = u(keys[5], (4 * n_hidden, n_hidden))
    b_ih1 = u(keys[6], (4 * n_hidden,))
    b_hh1 = u(keys[7], (4 * n_hidden,))
    # linear: (48, H), (48,)
    w_lin = u(keys[8], (n_out, n_hidden))
    b_lin = u(keys[9], (n_out,))

    # Pre-transpose / fuse biases for the kernel (gate order i|f|g|o as in torch).
    return (
        w_ih0.T,                                    # (F, 4H)
        w_hh0.T,                                    # (H, 4H)
        (b_ih0 + b_hh0).reshape(1, -1),             # (1, 4H)
        w_ih1.T,                                    # (H, 4H)
        w_hh1.T,                                    # (H, 4H)
        (b_ih1 + b_hh1).reshape(1, -1),             # (1, 4H)
        w_lin.T,                                    # (H, 48)
        b_lin.reshape(1, -1),                       # (1, 48)
    )


def _reference_forward(x_btf, params):
    """Pure-JAX reference of the same math (sanity check)."""
    (wih0, whh0, b0, wih1, whh1, b1, wlin, blin) = params
    B, T, F = x_btf.shape
    H = whh0.shape[0]

    def cell(x_t, h, c, wih, whh, b):
        gates = x_t @ wih + h @ whh + b
        i = jax.nn.sigmoid(gates[:, 0:H])
        f = jax.nn.sigmoid(gates[:, H:2 * H])
        g = jnp.tanh(gates[:, 2 * H:3 * H])
        o = jax.nn.sigmoid(gates[:, 3 * H:4 * H])
        c = f * c + i * g
        return o * jnp.tanh(c), c

    h0 = c0 = h1 = c1 = jnp.zeros((B, H), jnp.float32)
    for t in range(T):
        h0, c0 = cell(x_btf[:, t, :], h0, c0, wih0, whh0, b0)
        h1, c1 = cell(h0, h1, c1, wih1, whh1, b1)
    return h1 @ wlin + blin


if __name__ == "__main__":
    # batch=8 (full sublane group), seq=16 (2 time tiles), n_features=4,
    # n_hidden=64 (module default, 4H = 256 = v6e/v7x MXU width).
    B, T, F, H = 8, 16, 4, 64
    key = jax.random.PRNGKey(0)
    kx, kp = jax.random.split(key)
    x = jax.random.normal(kx, (B, T, F), jnp.float32)          # batch_first (B, T, F)
    params = init_params(kp, n_features=F, n_hidden=H, n_out=48)

    y = ts_model_forward(x, params)
    y = jax.block_until_ready(y)

    y_ref = _reference_forward(x, params)
    np.testing.assert_allclose(np.asarray(y), np.asarray(y_ref), rtol=5e-4, atol=5e-5)
    assert y.shape == (B, 48)
    print("KERNEL_OK")
</pallas_src>

<mosaic_0001>
module attributes {stable_mosaic.version = 11 : i64} {
  func.func @_lstm_linear_kernel(%arg0: i32, %arg1: memref<8x8x4xf32, #tpu.memory_space<vmem>>, %arg2: memref<4x256xf32, #tpu.memory_space<vmem>>, %arg3: memref<64x256xf32, #tpu.memory_space<vmem>>, %arg4: memref<1x256xf32, #tpu.memory_space<vmem>>, %arg5: memref<64x256xf32, #tpu.memory_space<vmem>>, %arg6: memref<64x256xf32, #tpu.memory_space<vmem>>, %arg7: memref<1x256xf32, #tpu.memory_space<vmem>>, %arg8: memref<64x48xf32, #tpu.memory_space<vmem>>, %arg9: memref<1x48xf32, #tpu.memory_space<vmem>>, %arg10: memref<8x48xf32, #tpu.memory_space<vmem>>, %arg11: memref<8x64xf32, #tpu.memory_space<vmem>>, %arg12: memref<8x64xf32, #tpu.memory_space<vmem>>, %arg13: memref<8x64xf32, #tpu.memory_space<vmem>>, %arg14: memref<8x64xf32, #tpu.memory_space<vmem>>, %arg15: memref<64x64xf32, #tpu.memory_space<vmem>>) attributes {dimension_semantics = [#tpu.dimension_semantics<arbitrary>], iteration_bounds = array<i64: 2>, scalar_prefetch = 0 : i64, scratch_operands = 5 : i64, tpu.core_type = #tpu.core_type<tc>, window_params = [{transform_indices = @transform_0, window_bounds = array<i64: 8, 8, 4>}, {pipeline_mode = #tpu.pipeline_mode<synchronous>, transform_indices = @transform_1, window_bounds = array<i64: 4, 256>}, {pipeline_mode = #tpu.pipeline_mode<synchronous>, transform_indices = @transform_2, window_bounds = array<i64: 64, 256>}, {pipeline_mode = #tpu.pipeline_mode<synchronous>, transform_indices = @transform_3, window_bounds = array<i64: 1, 256>}, {pipeline_mode = #tpu.pipeline_mode<synchronous>, transform_indices = @transform_4, window_bounds = array<i64: 64, 256>}, {pipeline_mode = #tpu.pipeline_mode<synchronous>, transform_indices = @transform_5, window_bounds = array<i64: 64, 256>}, {pipeline_mode = #tpu.pipeline_mode<synchronous>, transform_indices = @transform_6, window_bounds = array<i64: 1, 256>}, {pipeline_mode = #tpu.pipeline_mode<synchronous>, transform_indices = @transform_7, window_bounds = array<i64: 64, 48>}, {pipeline_mode = #tpu.pipeline_mode<synchronous>, transform_indices = @transform_8, window_bounds = array<i64: 1, 48>}, {pipeline_mode = #tpu.pipeline_mode<synchronous>, transform_indices = @transform_9, window_bounds = array<i64: 8, 48>}]} {
    %c0_i32 = arith.constant 0 : i32
    %0 = arith.cmpi eq, %arg0, %c0_i32 : i32
    %1 = arith.extui %0 : i1 to i32
    %c0_i32_0 = arith.constant 0 : i32
    %2 = arith.cmpi ne, %1, %c0_i32_0 : i32
    scf.if %2 {
      %cst_76 = arith.constant 0.000000e+00 : f32
      %334 = vector.broadcast %cst_76 : f32 to vector<8x64xf32>
      %c0_77 = arith.constant 0 : index
      %c0_78 = arith.constant 0 : index
      %335 = vector.load %arg11[%c0_77, %c0_78] : memref<8x64xf32, #tpu.memory_space<vmem>>, vector<8x64xf32>
      tpu.vector_store %arg11[%c0_77, %c0_78], %334 {strides = array<i32>} : memref<8x64xf32, #tpu.memory_space<vmem>>, vector<8x64xf32>,
      %cst_79 = arith.constant 0.000000e+00 : f32
      %336 = vector.broadcast %cst_79 : f32 to vector<8x64xf32>
      %c0_80 = arith.constant 0 : index
      %c0_81 = arith.constant 0 : index
      %337 = vector.load %arg12[%c0_80, %c0_81] : memref<8x64xf32, #tpu.memory_space<vmem>>, vector<8x64xf32>
      tpu.vector_store %arg12[%c0_80, %c0_81], %336 {strides = array<i32>} : memref<8x64xf32, #tpu.memory_space<vmem>>, vector<8x64xf32>,
      %cst_82 = arith.constant 0.000000e+00 : f32
      %338 = vector.broadcast %cst_82 : f32 to vector<8x64xf32>
      %c0_83 = arith.constant 0 : index
      %c0_84 = arith.constant 0 : index
      %339 = vector.load %arg13[%c0_83, %c0_84] : memref<8x64xf32, #tpu.memory_space<vmem>>, vector<8x64xf32>
      tpu.vector_store %arg13[%c0_83, %c0_84], %338 {strides = array<i32>} : memref<8x64xf32, #tpu.memory_space<vmem>>, vector<8x64xf32>,
      %cst_85 = arith.constant 0.000000e+00 : f32
      %340 = vector.broadcast %cst_85 : f32 to vector<8x64xf32>
      %c0_86 = arith.constant 0 : index
      %c0_87 = arith.constant 0 : index
      %341 = vector.load %arg14[%c0_86, %c0_87] : memref<8x64xf32, #tpu.memory_space<vmem>>, vector<8x64xf32>
      tpu.vector_store %arg14[%c0_86, %c0_87], %340 {strides = array<i32>} : memref<8x64xf32, #tpu.memory_space<vmem>>, vector<8x64xf32>,
    } else {
    }
    %c0 = arith.constant 0 : index
    %c0_1 = arith.constant 0 : index
    %c0_2 = arith.constant 0 : index
    %3 = vector.load %arg1[%c0, %c0_1, %c0_2] : memref<8x8x4xf32, #tpu.memory_space<vmem>>, vector<8x8x4xf32>
    %4 = vector.shape_cast %3 : vector<8x8x4xf32> to vector<64x4xf32>
    %c0_3 = arith.constant 0 : index
    %c0_4 = arith.constant 0 : index
    %5 = vector.load %arg2[%c0_3, %c0_4] : memref<4x256xf32, #tpu.memory_space<vmem>>, vector<4x256xf32>
    %cst = arith.constant dense<0.000000e+00> : vector<64x256xf32>
    %6 = tpu.matmul %4, %5, %cst {dimension_numbers = #tpu.dot_dimension_numbers<[1], [0], [0], [1], [0, 0, 1, 1], [], []>} : vector<64x4xf32>, vector<4x256xf32>, vector<64x256xf32> -> vector<64x256xf32>
    %c0_5 = arith.constant 0 : index
    %c0_6 = arith.constant 0 : index
    %7 = vector.load %arg4[%c0_5, %c0_6] : memref<1x256xf32, #tpu.memory_space<vmem>>, vector<1x256xf32>
    %8 = vector.broadcast %7 : vector<1x256xf32> to vector<64x256xf32>
    %9 = arith.addf %6, %8 : vector<64x256xf32>
    %10 = vector.shape_cast %9 : vector<64x256xf32> to vector<8x8x256xf32>
    %c0_7 = arith.constant 0 : index
    %c0_8 = arith.constant 0 : index
    %11 = vector.load %arg3[%c0_7, %c0_8] : memref<64x256xf32, #tpu.memory_space<vmem>>, vector<64x256xf32>
    %c0_9 = arith.constant 0 : index
    %c0_10 = arith.constant 0 : index
    %12 = vector.load %arg11[%c0_9, %c0_10] : memref<8x64xf32, #tpu.memory_space<vmem>>, vector<8x64xf32>
    %c0_11 = arith.constant 0 : index
    %c0_12 = arith.constant 0 : index
    %13 = vector.load %arg12[%c0_11, %c0_12] : memref<8x64xf32, #tpu.memory_space<vmem>>, vector<8x64xf32>
    %14 = vector.extract_strided_slice %10 {offsets = [0, 0, 0], sizes = [8, 1, 256], strides = [1, 1, 1]} : vector<8x8x256xf32> to vector<8x1x256xf32>
    %15 = vector.shape_cast %14 : vector<8x1x256xf32> to vector<8x256xf32>
    %cst_13 = arith.constant dense<0.000000e+00> : vector<8x256xf32>
    %16 = tpu.matmul %12, %11, %cst_13 {dimension_numbers = #tpu.dot_dimension_numbers<[1], [0], [0], [1], [0, 0, 1, 1], [], []>} : vector<8x64xf32>, vector<64x256xf32>, vector<8x256xf32> -> vector<8x256xf32>
    %17 = arith.addf %15, %16 : vector<8x256xf32>
    %18 = arith.negf %17 : vector<8x256xf32>
    %19 = math.exp %18 : vector<8x256xf32>
    %cst_14 = arith.constant 1.000000e+00 : f32
    %20 = vector.broadcast %cst_14 : f32 to vector<8x256xf32>
    %21 = arith.addf %20, %19 : vector<8x256xf32>
    %22 = arith.divf %20, %21 : vector<8x256xf32>
    %23 = math.tanh %17 : vector<8x256xf32>
    %24 = vector.extract_strided_slice %22 {offsets = [0, 0], sizes = [8, 64], strides = [1, 1]} : vector<8x256xf32> to vector<8x64xf32>
    %25 = vector.extract_strided_slice %22 {offsets = [0, 64], sizes = [8, 64], strides = [1, 1]} : vector<8x256xf32> to vector<8x64xf32>
    %26 = vector.extract_strided_slice %22 {offsets = [0, 192], sizes = [8, 64], strides = [1, 1]} : vector<8x256xf32> to vector<8x64xf32>
    %27 = vector.extract_strided_slice %23 {offsets = [0, 128], sizes = [8, 64], strides = [1, 1]} : vector<8x256xf32> to vector<8x64xf32>
    %28 = arith.mulf %25, %13 : vector<8x64xf32>
    %29 = arith.mulf %24, %27 : vector<8x64xf32>
    %30 = arith.addf %28, %29 : vector<8x64xf32>
    %31 = math.tanh %30 : vector<8x64xf32>
    %32 = arith.mulf %26, %31 : vector<8x64xf32>
    %c0_15 = arith.constant 0 : index
    %c0_16 = arith.constant 0 : index
    %33 = vector.load %arg15[%c0_15, %c0_16] : memref<64x64xf32, #tpu.memory_space<vmem>>, vector<8x64xf32>
    tpu.vector_store %arg15[%c0_15, %c0_16], %32 {strides = array<i32>} : memref<64x64xf32, #tpu.memory_space<vmem>>, vector<8x64xf32>,
    %34 = vector.extract_strided_slice %10 {offsets = [0, 1, 0], sizes = [8, 1, 256], strides = [1, 1, 1]} : vector<8x8x256xf32> to vector<8x1x256xf32>
    %35 = vector.shape_cast %34 : vector<8x1x256xf32> to vector<8x256xf32>
    %cst_17 = arith.constant dense<0.000000e+00> : vector<8x256xf32>
    %36 = tpu.matmul %32, %11, %cst_17 {dimension_numbers = #tpu.dot_dimension_numbers<[1], [0], [0], [1], [0, 0, 1, 1], [], []>} : vector<8x64xf32>, vector<64x256xf32>, vector<8x256xf32> -> vector<8x256xf32>
    %37 = arith.addf %35, %36 : vector<8x256xf32>
    %38 = arith.negf %37 : vector<8x256xf32>
    %39 = math.exp %38 : vector<8x256xf32>
    %cst_18 = arith.constant 1.000000e+00 : f32
    %40 = vector.broadcast %cst_18 : f32 to vector<8x256xf32>
    %41 = arith.addf %40, %39 : vector<8x256xf32>
    %42 = arith.divf %40, %41 : vector<8x256xf32>
    %43 = math.tanh %37 : vector<8x256xf32>
    %44 = vector.extract_strided_slice %42 {offsets = [0, 0], sizes = [8, 64], strides = [1, 1]} : vector<8x256xf32> to vector<8x64xf32>
    %45 = vector.extract_strided_slice %42 {offsets = [0, 64], sizes = [8, 64], strides = [1, 1]} : vector<8x256xf32> to vector<8x64xf32>
    %46 = vector.extract_strided_slice %42 {offsets = [0, 192], sizes = [8, 64], strides = [1, 1]} : vector<8x256xf32> to vector<8x64xf32>
    %47 = vector.extract_strided_slice %43 {offsets = [0, 128], sizes = [8, 64], strides = [1, 1]} : vector<8x256xf32> to vector<8x64xf32>
    %48 = arith.mulf %45, %30 : vector<8x64xf32>
    %49 = arith.mulf %44, %47 : vector<8x64xf32>
    %50 = arith.addf %48, %49 : vector<8x64xf32>
    %51 = math.tanh %50 : vector<8x64xf32>
    %52 = arith.mulf %46, %51 : vector<8x64xf32>
    %c8 = arith.constant 8 : index
    %c0_19 = arith.constant 0 : index
    %53 = vector.load %arg15[%c8, %c0_19] : memref<64x64xf32, #tpu.memory_space<vmem>>, vector<8x64xf32>
    tpu.vector_store %arg15[%c8, %c0_19], %52 {strides = array<i32>} : memref<64x64xf32, #tpu.memory_space<vmem>>, vector<8x64xf32>,
    %54 = vector.extract_strided_slice %10 {offsets = [0, 2, 0], sizes = [8, 1, 256], strides = [1, 1, 1]} : vector<8x8x256xf32> to vector<8x1x256xf32>
    %55 = vector.shape_cast %54 : vector<8x1x256xf32> to vector<8x256xf32>
    %cst_20 = arith.constant dense<0.000000e+00> : vector<8x256xf32>
    %56 = tpu.matmul %52, %11, %cst_20 {dimension_numbers = #tpu.dot_dimension_numbers<[1], [0], [0], [1], [0, 0, 1, 1], [], []>} : vector<8x64xf32>, vector<64x256xf32>, vector<8x256xf32> -> vector<8x256xf32>
    %57 = arith.addf %55, %56 : vector<8x256xf32>
    %58 = arith.negf %57 : vector<8x256xf32>
    %59 = math.exp %58 : vector<8x256xf32>
    %cst_21 = arith.constant 1.000000e+00 : f32
    %60 = vector.broadcast %cst_21 : f32 to vector<8x256xf32>
    %61 = arith.addf %60, %59 : vector<8x256xf32>
    %62 = arith.divf %60, %61 : vector<8x256xf32>
    %63 = math.tanh %57 : vector<8x256xf32>
    %64 = vector.extract_strided_slice %62 {offsets = [0, 0], sizes = [8, 64], strides = [1, 1]} : vector<8x256xf32> to vector<8x64xf32>
    %65 = vector.extract_strided_slice %62 {offsets = [0, 64], sizes = [8, 64], strides = [1, 1]} : vector<8x256xf32> to vector<8x64xf32>
    %66 = vector.extract_strided_slice %62 {offsets = [0, 192], sizes = [8, 64], strides = [1, 1]} : vector<8x256xf32> to vector<8x64xf32>
    %67 = vector.extract_strided_slice %63 {offsets = [0, 128], sizes = [8, 64], strides = [1, 1]} : vector<8x256xf32> to vector<8x64xf32>
    %68 = arith.mulf %65, %50 : vector<8x64xf32>
    %69 = arith.mulf %64, %67 : vector<8x64xf32>
    %70 = arith.addf %68, %69 : vector<8x64xf32>
    %71 = math.tanh %70 : vector<8x64xf32>
    %72 = arith.mulf %66, %71 : vector<8x64xf32>
    %c16 = arith.constant 16 : index
    %c0_22 = arith.constant 0 : index
    %73 = vector.load %arg15[%c16, %c0_22] : memref<64x64xf32, #tpu.memory_space<vmem>>, vector<8x64xf32>
    tpu.vector_store %arg15[%c16, %c0_22], %72 {strides = array<i32>} : memref<64x64xf32, #tpu.memory_space<vmem>>, vector<8x64xf32>,
    %74 = vector.extract_strided_slice %10 {offsets = [0, 3, 0], sizes = [8, 1, 256], strides = [1, 1, 1]} : vector<8x8x256xf32> to vector<8x1x256xf32>
    %75 = vector.shape_cast %74 : vector<8x1x256xf32> to vector<8x256xf32>
    %cst_23 = arith.constant dense<0.000000e+00> : vector<8x256xf32>
    %76 = tpu.matmul %72, %11, %cst_23 {dimension_numbers = #tpu.dot_dimension_numbers<[1], [0], [0], [1], [0, 0, 1, 1], [], []>} : vector<8x64xf32>, vector<64x256xf32>, vector<8x256xf32> -> vector<8x256xf32>
    %77 = arith.addf %75, %76 : vector<8x256xf32>
    %78 = arith.negf %77 : vector<8x256xf32>
    %79 = math.exp %78 : vector<8x256xf32>
    %cst_24 = arith.constant 1.000000e+00 : f32
    %80 = vector.broadcast %cst_24 : f32 to vector<8x256xf32>
    %81 = arith.addf %80, %79 : vector<8x256xf32>
    %82 = arith.divf %80, %81 : vector<8x256xf32>
    %83 = math.tanh %77 : vector<8x256xf32>
    %84 = vector.extract_strided_slice %82 {offsets = [0, 0], sizes = [8, 64], strides = [1, 1]} : vector<8x256xf32> to vector<8x64xf32>
    %85 = vector.extract_strided_slice %82 {offsets = [0, 64], sizes = [8, 64], strides = [1, 1]} : vector<8x256xf32> to vector<8x64xf32>
    %86 = vector.extract_strided_slice %82 {offsets = [0, 192], sizes = [8, 64], strides = [1, 1]} : vector<8x256xf32> to vector<8x64xf32>
    %87 = vector.extract_strided_slice %83 {offsets = [0, 128], sizes = [8, 64], strides = [1, 1]} : vector<8x256xf32> to vector<8x64xf32>
    %88 = arith.mulf %85, %70 : vector<8x64xf32>
    %89 = arith.mulf %84, %87 : vector<8x64xf32>
    %90 = arith.addf %88, %89 : vector<8x64xf32>
    %91 = math.tanh %90 : vector<8x64xf32>
    %92 = arith.mulf %86, %91 : vector<8x64xf32>
    %c24 = arith.constant 24 : index
    %c0_25 = arith.constant 0 : index
    %93 = vector.load %arg15[%c24, %c0_25] : memref<64x64xf32, #tpu.memory_space<vmem>>, vector<8x64xf32>
    tpu.vector_store %arg15[%c24, %c0_25], %92 {strides = array<i32>} : memref<64x64xf32, #tpu.memory_space<vmem>>, vector<8x64xf32>,
    %94 = vector.extract_strided_slice %10 {offsets = [0, 4, 0], sizes = [8, 1, 256], strides = [1, 1, 1]} : vector<8x8x256xf32> to vector<8x1x256xf32>
    %95 = vector.shape_cast %94 : vector<8x1x256xf32> to vector<8x256xf32>
    %cst_26 = arith.constant dense<0.000000e+00> : vector<8x256xf32>
    %96 = tpu.matmul %92, %11, %cst_26 {dimension_numbers = #tpu.dot_dimension_numbers<[1], [0], [0], [1], [0, 0, 1, 1], [], []>} : vector<8x64xf32>, vector<64x256xf32>, vector<8x256xf32> -> vector<8x256xf32>
    %97 = arith.addf %95, %96 : vector<8x256xf32>
    %98 = arith.negf %97 : vector<8x256xf32>
    %99 = math.exp %98 : vector<8x256xf32>
    %cst_27 = arith.constant 1.000000e+00 : f32
    %100 = vector.broadcast %cst_27 : f32 to vector<8x256xf32>
    %101 = arith.addf %100, %99 : vector<8x256xf32>
    %102 = arith.divf %100, %101 : vector<8x256xf32>
    %103 = math.tanh %97 : vector<8x256xf32>
    %104 = vector.extract_strided_slice %102 {offsets = [0, 0], sizes = [8, 64], strides = [1, 1]} : vector<8x256xf32> to vector<8x64xf32>
    %105 = vector.extract_strided_slice %102 {offsets = [0, 64], sizes = [8, 64], strides = [1, 1]} : vector<8x256xf32> to vector<8x64xf32>
    %106 = vector.extract_strided_slice %102 {offsets = [0, 192], sizes = [8, 64], strides = [1, 1]} : vector<8x256xf32> to vector<8x64xf32>
    %107 = vector.extract_strided_slice %103 {offsets = [0, 128], sizes = [8, 64], strides = [1, 1]} : vector<8x256xf32> to vector<8x64xf32>
    %108 = arith.mulf %105, %90 : vector<8x64xf32>
    %109 = arith.mulf %104, %107 : vector<8x64xf32>
    %110 = arith.addf %108, %109 : vector<8x64xf32>
    %111 = math.tanh %110 : vector<8x64xf32>
    %112 = arith.mulf %106, %111 : vector<8x64xf32>
    %c32 = arith.constant 32 : index
    %c0_28 = arith.constant 0 : index
    %113 = vector.load %arg15[%c32, %c0_28] : memref<64x64xf32, #tpu.memory_space<vmem>>, vector<8x64xf32>
    tpu.vector_store %arg15[%c32, %c0_28], %112 {strides = array<i32>} : memref<64x64xf32, #tpu.memory_space<vmem>>, vector<8x64xf32>,
    %114 = vector.extract_strided_slice %10 {offsets = [0, 5, 0], sizes = [8, 1, 256], strides = [1, 1, 1]} : vector<8x8x256xf32> to vector<8x1x256xf32>
    %115 = vector.shape_cast %114 : vector<8x1x256xf32> to vector<8x256xf32>
    %cst_29 = arith.constant dense<0.000000e+00> : vector<8x256xf32>
    %116 = tpu.matmul %112, %11, %cst_29 {dimension_numbers = #tpu.dot_dimension_numbers<[1], [0], [0], [1], [0, 0, 1, 1], [], []>} : vector<8x64xf32>, vector<64x256xf32>, vector<8x256xf32> -> vector<8x256xf32>
    %117 = arith.addf %115, %116 : vector<8x256xf32>
    %118 = arith.negf %117 : vector<8x256xf32>
    %119 = math.exp %118 : vector<8x256xf32>
    %cst_30 = arith.constant 1.000000e+00 : f32
    %120 = vector.broadcast %cst_30 : f32 to vector<8x256xf32>
    %121 = arith.addf %120, %119 : vector<8x256xf32>
    %122 = arith.divf %120, %121 : vector<8x256xf32>
    %123 = math.tanh %117 : vector<8x256xf32>
    %124 = vector.extract_strided_slice %122 {offsets = [0, 0], sizes = [8, 64], strides = [1, 1]} : vector<8x256xf32> to vector<8x64xf32>
    %125 = vector.extract_strided_slice %122 {offsets = [0, 64], sizes = [8, 64], strides = [1, 1]} : vector<8x256xf32> to vector<8x64xf32>
    %126 = vector.extract_strided_slice %122 {offsets = [0, 192], sizes = [8, 64], strides = [1, 1]} : vector<8x256xf32> to vector<8x64xf32>
    %127 = vector.extract_strided_slice %123 {offsets = [0, 128], sizes = [8, 64], strides = [1, 1]} : vector<8x256xf32> to vector<8x64xf32>
    %128 = arith.mulf %125, %110 : vector<8x64xf32>
    %129 = arith.mulf %124, %127 : vector<8x64xf32>
    %130 = arith.addf %128, %129 : vector<8x64xf32>
    %131 = math.tanh %130 : vector<8x64xf32>
    %132 = arith.mulf %126, %131 : vector<8x64xf32>
    %c40 = arith.constant 40 : index
    %c0_31 = arith.constant 0 : index
    %133 = vector.load %arg15[%c40, %c0_31] : memref<64x64xf32, #tpu.memory_space<vmem>>, vector<8x64xf32>
    tpu.vector_store %arg15[%c40, %c0_31], %132 {strides = array<i32>} : memref<64x64xf32, #tpu.memory_space<vmem>>, vector<8x64xf32>,
    %134 = vector.extract_strided_slice %10 {offsets = [0, 6, 0], sizes = [8, 1, 256], strides = [1, 1, 1]} : vector<8x8x256xf32> to vector<8x1x256xf32>
    %135 = vector.shape_cast %134 : vector<8x1x256xf32> to vector<8x256xf32>
    %cst_32 = arith.constant dense<0.000000e+00> : vector<8x256xf32>
    %136 = tpu.matmul %132, %11, %cst_32 {dimension_numbers = #tpu.dot_dimension_numbers<[1], [0], [0], [1], [0, 0, 1, 1], [], []>} : vector<8x64xf32>, vector<64x256xf32>, vector<8x256xf32> -> vector<8x256xf32>
    %137 = arith.addf %135, %136 : vector<8x256xf32>
    %138 = arith.negf %137 : vector<8x256xf32>
    %139 = math.exp %138 : vector<8x256xf32>
    %cst_33 = arith.constant 1.000000e+00 : f32
    %140 = vector.broadcast %cst_33 : f32 to vector<8x256xf32>
    %141 = arith.addf %140, %139 : vector<8x256xf32>
    %142 = arith.divf %140, %141 : vector<8x256xf32>
    %143 = math.tanh %137 : vector<8x256xf32>
    %144 = vector.extract_strided_slice %142 {offsets = [0, 0], sizes = [8, 64], strides = [1, 1]} : vector<8x256xf32> to vector<8x64xf32>
    %145 = vector.extract_strided_slice %142 {offsets = [0, 64], sizes = [8, 64], strides = [1, 1]} : vector<8x256xf32> to vector<8x64xf32>
    %146 = vector.extract_strided_slice %142 {offsets = [0, 192], sizes = [8, 64], strides = [1, 1]} : vector<8x256xf32> to vector<8x64xf32>
    %147 = vector.extract_strided_slice %143 {offsets = [0, 128], sizes = [8, 64], strides = [1, 1]} : vector<8x256xf32> to vector<8x64xf32>
    %148 = arith.mulf %145, %130 : vector<8x64xf32>
    %149 = arith.mulf %144, %147 : vector<8x64xf32>
    %150 = arith.addf %148, %149 : vector<8x64xf32>
    %151 = math.tanh %150 : vector<8x64xf32>
    %152 = arith.mulf %146, %151 : vector<8x64xf32>
    %c48 = arith.constant 48 : index
    %c0_34 = arith.constant 0 : index
    %153 = vector.load %arg15[%c48, %c0_34] : memref<64x64xf32, #tpu.memory_space<vmem>>, vector<8x64xf32>
    tpu.vector_store %arg15[%c48, %c0_34], %152 {strides = array<i32>} : memref<64x64xf32, #tpu.memory_space<vmem>>, vector<8x64xf32>,
    %154 = vector.extract_strided_slice %10 {offsets = [0, 7, 0], sizes = [8, 1, 256], strides = [1, 1, 1]} : vector<8x8x256xf32> to vector<8x1x256xf32>
    %155 = vector.shape_cast %154 : vector<8x1x256xf32> to vector<8x256xf32>
    %cst_35 = arith.constant dense<0.000000e+00> : vector<8x256xf32>
    %156 = tpu.matmul %152, %11, %cst_35 {dimension_numbers = #tpu.dot_dimension_numbers<[1], [0], [0], [1], [0, 0, 1, 1], [], []>} : vector<8x64xf32>, vector<64x256xf32>, vector<8x256xf32> -> vector<8x256xf32>
    %157 = arith.addf %155, %156 : vector<8x256xf32>
    %158 = arith.negf %157 : vector<8x256xf32>
    %159 = math.exp %158 : vector<8x256xf32>
    %cst_36 = arith.constant 1.000000e+00 : f32
    %160 = vector.broadcast %cst_36 : f32 to vector<8x256xf32>
    %161 = arith.addf %160, %159 : vector<8x256xf32>
    %162 = arith.divf %160, %161 : vector<8x256xf32>
    %163 = math.tanh %157 : vector<8x256xf32>
    %164 = vector.extract_strided_slice %162 {offsets = [0, 0], sizes = [8, 64], strides = [1, 1]} : vector<8x256xf32> to vector<8x64xf32>
    %165 = vector.extract_strided_slice %162 {offsets = [0, 64], sizes = [8, 64], strides = [1, 1]} : vector<8x256xf32> to vector<8x64xf32>
    %166 = vector.extract_strided_slice %162 {offsets = [0, 192], sizes = [8, 64], strides = [1, 1]} : vector<8x256xf32> to vector<8x64xf32>
    %167 = vector.extract_strided_slice %163 {offsets = [0, 128], sizes = [8, 64], strides = [1, 1]} : vector<8x256xf32> to vector<8x64xf32>
    %168 = arith.mulf %165, %150 : vector<8x64xf32>
    %169 = arith.mulf %164, %167 : vector<8x64xf32>
    %170 = arith.addf %168, %169 : vector<8x64xf32>
    %171 = math.tanh %170 : vector<8x64xf32>
    %172 = arith.mulf %166, %171 : vector<8x64xf32>
    %c56 = arith.constant 56 : index
    %c0_37 = arith.constant 0 : index
    %173 = vector.load %arg15[%c56, %c0_37] : memref<64x64xf32, #tpu.memory_space<vmem>>, vector<8x64xf32>
    tpu.vector_store %arg15[%c56, %c0_37], %172 {strides = array<i32>} : memref<64x64xf32, #tpu.memory_space<vmem>>, vector<8x64xf32>,
    %c0_38 = arith.constant 0 : index
    %c0_39 = arith.constant 0 : index
    %174 = vector.load %arg11[%c0_38, %c0_39] : memref<8x64xf32, #tpu.memory_space<vmem>>, vector<8x64xf32>
    tpu.vector_store %arg11[%c0_38, %c0_39], %172 {strides = array<i32>} : memref<8x64xf32, #tpu.memory_space<vmem>>, vector<8x64xf32>,
    %c0_40 = arith.constant 0 : index
    %c0_41 = arith.constant 0 : index
    %175 = vector.load %arg12[%c0_40, %c0_41] : memref<8x64xf32, #tpu.memory_space<vmem>>, vector<8x64xf32>
    tpu.vector_store %arg12[%c0_40, %c0_41], %170 {strides = array<i32>} : memref<8x64xf32, #tpu.memory_space<vmem>>, vector<8x64xf32>,
    %c0_42 = arith.constant 0 : index
    %c0_43 = arith.constant 0 : index
    %176 = vector.load %arg15[%c0_42, %c0_43] : memref<64x64xf32, #tpu.memory_space<vmem>>, vector<64x64xf32>
    %c0_44 = arith.constant 0 : index
    %c0_45 = arith.constant 0 : index
    %177 = vector.load %arg5[%c0_44, %c0_45] : memref<64x256xf32, #tpu.memory_space<vmem>>, vector<64x256xf32>
    %cst_46 = arith.constant dense<0.000000e+00> : vector<64x256xf32>
    %178 = tpu.matmul %176, %177, %cst_46 {dimension_numbers = #tpu.dot_dimension_numbers<[1], [0], [0], [1], [0, 0, 1, 1], [], []>} : vector<64x64xf32>, vector<64x256xf32>, vector<64x256xf32> -> vector<64x256xf32>
    %c0_47 = arith.constant 0 : index
    %c0_48 = arith.constant 0 : index
    %179 = vector.load %arg7[%c0_47, %c0_48] : memref<1x256xf32, #tpu.memory_space<vmem>>, vector<1x256xf32>
    %180 = vector.broadcast %179 : vector<1x256xf32> to vector<64x256xf32>
    %181 = arith.addf %178, %180 : vector<64x256xf32>
    %c0_49 = arith.constant 0 : index
    %c0_50 = arith.constant 0 : index
    %182 = vector.load %arg6[%c0_49, %c0_50] : memref<64x256xf32, #tpu.memory_space<vmem>>, vector<64x256xf32>
    %c0_51 = arith.constant 0 : index
    %c0_52 = arith.constant 0 : index
    %183 = vector.load %arg13[%c0_51, %c0_52] : memref<8x64xf32, #tpu.memory_space<vmem>>, vector<8x64xf32>
    %c0_53 = arith.constant 0 : index
    %c0_54 = arith.constant 0 : index
    %184 = vector.load %arg14[%c0_53, %c0_54] : memref<8x64xf32, #tpu.memory_space<vmem>>, vector<8x64xf32>
    %185 = vector.extract_strided_slice %181 {offsets = [0, 0], sizes = [8, 256], strides = [1, 1]} : vector<64x256xf32> to vector<8x256xf32>
    %cst_55 = arith.constant dense<0.000000e+00> : vector<8x256xf32>
    %186 = tpu.matmul %183, %182, %cst_55 {dimension_numbers = #tpu.dot_dimension_numbers<[1], [0], [0], [1], [0, 0, 1, 1], [], []>} : vector<8x64xf32>, vector<64x256xf32>, vector<8x256xf32> -> vector<8x256xf32>
    %187 = arith.addf %185, %186 : vector<8x256xf32>
    %188 = arith.negf %187 : vector<8x256xf32>
    %189 = math.exp %188 : vector<8x256xf32>
    %cst_56 = arith.constant 1.000000e+00 : f32
    %190 = vector.broadcast %cst_56 : f32 to vector<8x256xf32>
    %191 = arith.addf %190, %189 : vector<8x256xf32>
    %192 = arith.divf %190, %191 : vector<8x256xf32>
    %193 = math.tanh %187 : vector<8x256xf32>
    %194 = vector.extract_strided_slice %192 {offsets = [0, 0], sizes = [8, 64], strides = [1, 1]} : vector<8x256xf32> to vector<8x64xf32>
    %195 = vector.extract_strided_slice %192 {offsets = [0, 64], sizes = [8, 64], strides = [1, 1]} : vector<8x256xf32> to vector<8x64xf32>
    %196 = vector.extract_strided_slice %192 {offsets = [0, 192], sizes = [8, 64], strides = [1, 1]} : vector<8x256xf32> to vector<8x64xf32>
    %197 = vector.extract_strided_slice %193 {offsets = [0, 128], sizes = [8, 64], strides = [1, 1]} : vector<8x256xf32> to vector<8x64xf32>
    %198 = arith.mulf %195, %184 : vector<8x64xf32>
    %199 = arith.mulf %194, %197 : vector<8x64xf32>
    %200 = arith.addf %198, %199 : vector<8x64xf32>
    %201 = math.tanh %200 : vector<8x64xf32>
    %202 = arith.mulf %196, %201 : vector<8x64xf32>
    %203 = vector.extract_strided_slice %181 {offsets = [8, 0], sizes = [8, 256], strides = [1, 1]} : vector<64x256xf32> to vector<8x256xf32>
    %cst_57 = arith.constant dense<0.000000e+00> : vector<8x256xf32>
    %204 = tpu.matmul %202, %182, %cst_57 {dimension_numbers = #tpu.dot_dimension_numbers<[1], [0], [0], [1], [0, 0, 1, 1], [], []>} : vector<8x64xf32>, vector<64x256xf32>, vector<8x256xf32> -> vector<8x256xf32>
    %205 = arith.addf %203, %204 : vector<8x256xf32>
    %206 = arith.negf %205 : vector<8x256xf32>
    %207 = math.exp %206 : vector<8x256xf32>
    %cst_58 = arith.constant 1.000000e+00 : f32
    %208 = vector.broadcast %cst_58 : f32 to vector<8x256xf32>
    %209 = arith.addf %208, %207 : vector<8x256xf32>
    %210 = arith.divf %208, %209 : vector<8x256xf32>
    %211 = math.tanh %205 : vector<8x256xf32>
    %212 = vector.extract_strided_slice %210 {offsets = [0, 0], sizes = [8, 64], strides = [1, 1]} : vector<8x256xf32> to vector<8x64xf32>
    %213 = vector.extract_strided_slice %210 {offsets = [0, 64], sizes = [8, 64], strides = [1, 1]} : vector<8x256xf32> to vector<8x64xf32>
    %214 = vector.extract_strided_slice %210 {offsets = [0, 192], sizes = [8, 64], strides = [1, 1]} : vector<8x256xf32> to vector<8x64xf32>
    %215 = vector.extract_strided_slice %211 {offsets = [0, 128], sizes = [8, 64], strides = [1, 1]} : vector<8x256xf32> to vector<8x64xf32>
    %216 = arith.mulf %213, %200 : vector<8x64xf32>
    %217 = arith.mulf %212, %215 : vector<8x64xf32>
    %218 = arith.addf %216, %217 : vector<8x64xf32>
    %219 = math.tanh %218 : vector<8x64xf32>
    %220 = arith.mulf %214, %219 : vector<8x64xf32>
    %221 = vector.extract_strided_slice %181 {offsets = [16, 0], sizes = [8, 256], strides = [1, 1]} : vector<64x256xf32> to vector<8x256xf32>
    %cst_59 = arith.constant dense<0.000000e+00> : vector<8x256xf32>
    %222 = tpu.matmul %220, %182, %cst_59 {dimension_numbers = #tpu.dot_dimension_numbers<[1], [0], [0], [1], [0, 0, 1, 1], [], []>} : vector<8x64xf32>, vector<64x256xf32>, vector<8x256xf32> -> vector<8x256xf32>
    %223 = arith.addf %221, %222 : vector<8x256xf32>
    %224 = arith.negf %223 : vector<8x256xf32>
    %225 = math.exp %224 : vector<8x256xf32>
    %cst_60 = arith.constant 1.000000e+00 : f32
    %226 = vector.broadcast %cst_60 : f32 to vector<8x256xf32>
    %227 = arith.addf %226, %225 : vector<8x256xf32>
    %228 = arith.divf %226, %227 : vector<8x256xf32>
    %229 = math.tanh %223 : vector<8x256xf32>
    %230 = vector.extract_strided_slice %228 {offsets = [0, 0], sizes = [8, 64], strides = [1, 1]} : vector<8x256xf32> to vector<8x64xf32>
    %231 = vector.extract_strided_slice %228 {offsets = [0, 64], sizes = [8, 64], strides = [1, 1]} : vector<8x256xf32> to vector<8x64xf32>
    %232 = vector.extract_strided_slice %228 {offsets = [0, 192], sizes = [8, 64], strides = [1, 1]} : vector<8x256xf32> to vector<8x64xf32>
    %233 = vector.extract_strided_slice %229 {offsets = [0, 128], sizes = [8, 64], strides = [1, 1]} : vector<8x256xf32> to vector<8x64xf32>
    %234 = arith.mulf %231, %218 : vector<8x64xf32>
    %235 = arith.mulf %230, %233 : vector<8x64xf32>
    %236 = arith.addf %234, %235 : vector<8x64xf32>
    %237 = math.tanh %236 : vector<8x64xf32>
    %238 = arith.mulf %232, %237 : vector<8x64xf32>
    %239 = vector.extract_strided_slice %181 {offsets = [24, 0], sizes = [8, 256], strides = [1, 1]} : vector<64x256xf32> to vector<8x256xf32>
    %cst_61 = arith.constant dense<0.000000e+00> : vector<8x256xf32>
    %240 = tpu.matmul %238, %182, %cst_61 {dimension_numbers = #tpu.dot_dimension_numbers<[1], [0], [0], [1], [0, 0, 1, 1], [], []>} : vector<8x64xf32>, vector<64x256xf32>, vector<8x256xf32> -> vector<8x256xf32>
    %241 = arith.addf %239, %240 : vector<8x256xf32>
    %242 = arith.negf %241 : vector<8x256xf32>
    %243 = math.exp %242 : vector<8x256xf32>
    %cst_62 = arith.constant 1.000000e+00 : f32
    %244 = vector.broadcast %cst_62 : f32 to vector<8x256xf32>
    %245 = arith.addf %244, %243 : vector<8x256xf32>
    %246 = arith.divf %244, %245 : vector<8x256xf32>
    %247 = math.tanh %241 : vector<8x256xf32>
    %248 = vector.extract_strided_slice %246 {offsets = [0, 0], sizes = [8, 64], strides = [1, 1]} : vector<8x256xf32> to vector<8x64xf32>
    %249 = vector.extract_strided_slice %246 {offsets = [0, 64], sizes = [8, 64], strides = [1, 1]} : vector<8x256xf32> to vector<8x64xf32>
    %250 = vector.extract_strided_slice %246 {offsets = [0, 192], sizes = [8, 64], strides = [1, 1]} : vector<8x256xf32> to vector<8x64xf32>
    %251 = vector.extract_strided_slice %247 {offsets = [0, 128], sizes = [8, 64], strides = [1, 1]} : vector<8x256xf32> to vector<8x64xf32>
    %252 = arith.mulf %249, %236 : vector<8x64xf32>
    %253 = arith.mulf %248, %251 : vector<8x64xf32>
    %254 = arith.addf %252, %253 : vector<8x64xf32>
    %255 = math.tanh %254 : vector<8x64xf32>
    %256 = arith.mulf %250, %255 : vector<8x64xf32>
    %257 = vector.extract_strided_slice %181 {offsets = [32, 0], sizes = [8, 256], strides = [1, 1]} : vector<64x256xf32> to vector<8x256xf32>
    %cst_63 = arith.constant dense<0.000000e+00> : vector<8x256xf32>
    %258 = tpu.matmul %256, %182, %cst_63 {dimension_numbers = #tpu.dot_dimension_numbers<[1], [0], [0], [1], [0, 0, 1, 1], [], []>} : vector<8x64xf32>, vector<64x256xf32>, vector<8x256xf32> -> vector<8x256xf32>
    %259 = arith.addf %257, %258 : vector<8x256xf32>
    %260 = arith.negf %259 : vector<8x256xf32>
    %261 = math.exp %260 : vector<8x256xf32>
    %cst_64 = arith.constant 1.000000e+00 : f32
    %262 = vector.broadcast %cst_64 : f32 to vector<8x256xf32>
    %263 = arith.addf %262, %261 : vector<8x256xf32>
    %264 = arith.divf %262, %263 : vector<8x256xf32>
    %265 = math.tanh %259 : vector<8x256xf32>
    %266 = vector.extract_strided_slice %264 {offsets = [0, 0], sizes = [8, 64], strides = [1, 1]} : vector<8x256xf32> to vector<8x64xf32>
    %267 = vector.extract_strided_slice %264 {offsets = [0, 64], sizes = [8, 64], strides = [1, 1]} : vector<8x256xf32> to vector<8x64xf32>
    %268 = vector.extract_strided_slice %264 {offsets = [0, 192], sizes = [8, 64], strides = [1, 1]} : vector<8x256xf32> to vector<8x64xf32>
    %269 = vector.extract_strided_slice %265 {offsets = [0, 128], sizes = [8, 64], strides = [1, 1]} : vector<8x256xf32> to vector<8x64xf32>
    %270 = arith.mulf %267, %254 : vector<8x64xf32>
    %271 = arith.mulf %266, %269 : vector<8x64xf32>
    %272 = arith.addf %270, %271 : vector<8x64xf32>
    %273 = math.tanh %272 : vector<8x64xf32>
    %274 = arith.mulf %268, %273 : vector<8x64xf32>
    %275 = vector.extract_strided_slice %181 {offsets = [40, 0], sizes = [8, 256], strides = [1, 1]} : vector<64x256xf32> to vector<8x256xf32>
    %cst_65 = arith.constant dense<0.000000e+00> : vector<8x256xf32>
    %276 = tpu.matmul %274, %182, %cst_65 {dimension_numbers = #tpu.dot_dimension_numbers<[1], [0], [0], [1], [0, 0, 1, 1], [], []>} : vector<8x64xf32>, vector<64x256xf32>, vector<8x256xf32> -> vector<8x256xf32>
    %277 = arith.addf %275, %276 : vector<8x256xf32>
    %278 = arith.negf %277 : vector<8x256xf32>
    %279 = math.exp %278 : vector<8x256xf32>
    %cst_66 = arith.constant 1.000000e+00 : f32
    %280 = vector.broadcast %cst_66 : f32 to vector<8x256xf32>
    %281 = arith.addf %280, %279 : vector<8x256xf32>
    %282 = arith.divf %280, %281 : vector<8x256xf32>
    %283 = math.tanh %277 : vector<8x256xf32>
    %284 = vector.extract_strided_slice %282 {offsets = [0, 0], sizes = [8, 64], strides = [1, 1]} : vector<8x256xf32> to vector<8x64xf32>
    %285 = vector.extract_strided_slice %282 {offsets = [0, 64], sizes = [8, 64], strides = [1, 1]} : vector<8x256xf32> to vector<8x64xf32>
    %286 = vector.extract_strided_slice %282 {offsets = [0, 192], sizes = [8, 64], strides = [1, 1]} : vector<8x256xf32> to vector<8x64xf32>
    %287 = vector.extract_strided_slice %283 {offsets = [0, 128], sizes = [8, 64], strides = [1, 1]} : vector<8x256xf32> to vector<8x64xf32>
    %288 = arith.mulf %285, %272 : vector<8x64xf32>
    %289 = arith.mulf %284, %287 : vector<8x64xf32>
    %290 = arith.addf %288, %289 : vector<8x64xf32>
    %291 = math.tanh %290 : vector<8x64xf32>
    %292 = arith.mulf %286, %291 : vector<8x64xf32>
    %293 = vector.extract_strided_slice %181 {offsets = [48, 0], sizes = [8, 256], strides = [1, 1]} : vector<64x256xf32> to vector<8x256xf32>
    %cst_67 = arith.constant dense<0.000000e+00> : vector<8x256xf32>
    %294 = tpu.matmul %292, %182, %cst_67 {dimension_numbers = #tpu.dot_dimension_numbers<[1], [0], [0], [1], [0, 0, 1, 1], [], []>} : vector<8x64xf32>, vector<64x256xf32>, vector<8x256xf32> -> vector<8x256xf32>
    %295 = arith.addf %293, %294 : vector<8x256xf32>
    %296 = arith.negf %295 : vector<8x256xf32>
    %297 = math.exp %296 : vector<8x256xf32>
    %cst_68 = arith.constant 1.000000e+00 : f32
    %298 = vector.broadcast %cst_68 : f32 to vector<8x256xf32>
    %299 = arith.addf %298, %297 : vector<8x256xf32>
    %300 = arith.divf %298, %299 : vector<8x256xf32>
    %301 = math.tanh %295 : vector<8x256xf32>
    %302 = vector.extract_strided_slice %300 {offsets = [0, 0], sizes = [8, 64], strides = [1, 1]} : vector<8x256xf32> to vector<8x64xf32>
    %303 = vector.extract_strided_slice %300 {offsets = [0, 64], sizes = [8, 64], strides = [1, 1]} : vector<8x256xf32> to vector<8x64xf32>
    %304 = vector.extract_strided_slice %300 {offsets = [0, 192], sizes = [8, 64], strides = [1, 1]} : vector<8x256xf32> to vector<8x64xf32>
    %305 = vector.extract_strided_slice %301 {offsets = [0, 128], sizes = [8, 64], strides = [1, 1]} : vector<8x256xf32> to vector<8x64xf32>
    %306 = arith.mulf %303, %290 : vector<8x64xf32>
    %307 = arith.mulf %302, %305 : vector<8x64xf32>
    %308 = arith.addf %306, %307 : vector<8x64xf32>
    %309 = math.tanh %308 : vector<8x64xf32>
    %310 = arith.mulf %304, %309 : vector<8x64xf32>
    %311 = vector.extract_strided_slice %181 {offsets = [56, 0], sizes = [8, 256], strides = [1, 1]} : vector<64x256xf32> to vector<8x256xf32>
    %cst_69 = arith.constant dense<0.000000e+00> : vector<8x256xf32>
    %312 = tpu.matmul %310, %182, %cst_69 {dimension_numbers = #tpu.dot_dimension_numbers<[1], [0], [0], [1], [0, 0, 1, 1], [], []>} : vector<8x64xf32>, vector<64x256xf32>, vector<8x256xf32> -> vector<8x256xf32>
    %313 = arith.addf %311, %312 : vector<8x256xf32>
    %314 = arith.negf %313 : vector<8x256xf32>
    %315 = math.exp %314 : vector<8x256xf32>
    %cst_70 = arith.constant 1.000000e+00 : f32
    %316 = vector.broadcast %cst_70 : f32 to vector<8x256xf32>
    %317 = arith.addf %316, %315 : vector<8x256xf32>
    %318 = arith.divf %316, %317 : vector<8x256xf32>
    %319 = math.tanh %313 : vector<8x256xf32>
    %320 = vector.extract_strided_slice %318 {offsets = [0, 0], sizes = [8, 64], strides = [1, 1]} : vector<8x256xf32> to vector<8x64xf32>
    %321 = vector.extract_strided_slice %318 {offsets = [0, 64], sizes = [8, 64], strides = [1, 1]} : vector<8x256xf32> to vector<8x64xf32>
    %322 = vector.extract_strided_slice %318 {offsets = [0, 192], sizes = [8, 64], strides = [1, 1]} : vector<8x256xf32> to vector<8x64xf32>
    %323 = vector.extract_strided_slice %319 {offsets = [0, 128], sizes = [8, 64], strides = [1, 1]} : vector<8x256xf32> to vector<8x64xf32>
    %324 = arith.mulf %321, %308 : vector<8x64xf32>
    %325 = arith.mulf %320, %323 : vector<8x64xf32>
    %326 = arith.addf %324, %325 : vector<8x64xf32>
    %327 = math.tanh %326 : vector<8x64xf32>
    %328 = arith.mulf %322, %327 : vector<8x64xf32>
    %c0_71 = arith.constant 0 : index
    %c0_72 = arith.constant 0 : index
    %329 = vector.load %arg13[%c0_71, %c0_72] : memref<8x64xf32, #tpu.memory_space<vmem>>, vector<8x64xf32>
    tpu.vector_store %arg13[%c0_71, %c0_72], %328 {strides = array<i32>} : memref<8x64xf32, #tpu.memory_space<vmem>>, vector<8x64xf32>,
    %c0_73 = arith.constant 0 : index
    %c0_74 = arith.constant 0 : index
    %330 = vector.load %arg14[%c0_73, %c0_74] : memref<8x64xf32, #tpu.memory_space<vmem>>, vector<8x64xf32>
    tpu.vector_store %arg14[%c0_73, %c0_74], %326 {strides = array<i32>} : memref<8x64xf32, #tpu.memory_space<vmem>>, vector<8x64xf32>,
    %c1_i32 = arith.constant 1 : i32
    %331 = arith.cmpi eq, %arg0, %c1_i32 : i32
    %332 = arith.extui %331 : i1 to i32
    %c0_i32_75 = arith.constant 0 : i32
    %333 = arith.cmpi ne, %332, %c0_i32_75 : i32
    scf.if %333 {
      %c0_76 = arith.constant 0 : index
      %c0_77 = arith.constant 0 : index
      %334 = vector.load %arg13[%c0_76, %c0_77] : memref<8x64xf32, #tpu.memory_space<vmem>>, vector<8x64xf32>
      %c0_78 = arith.constant 0 : index
      %c0_79 = arith.constant 0 : index
      %335 = vector.load %arg8[%c0_78, %c0_79] : memref<64x48xf32, #tpu.memory_space<vmem>>, vector<64x48xf32>
      %cst_80 = arith.constant dense<0.000000e+00> : vector<8x48xf32>
      %336 = tpu.matmul %334, %335, %cst_80 {dimension_numbers = #tpu.dot_dimension_numbers<[1], [0], [0], [1], [0, 0, 1, 1], [], []>} : vector<8x64xf32>, vector<64x48xf32>, vector<8x48xf32> -> vector<8x48xf32>
      %c0_81 = arith.constant 0 : index
      %c0_82 = arith.constant 0 : index
      %337 = vector.load %arg9[%c0_81, %c0_82] : memref<1x48xf32, #tpu.memory_space<vmem>>, vector<1x48xf32>
      %338 = vector.broadcast %337 : vector<1x48xf32> to vector<8x48xf32>
      %339 = arith.addf %336, %338 : vector<8x48xf32>
      %c0_83 = arith.constant 0 : index
      %c0_84 = arith.constant 0 : index
      %340 = vector.load %arg10[%c0_83, %c0_84] : memref<8x48xf32, #tpu.memory_space<vmem>>, vector<8x48xf32>
      tpu.vector_store %arg10[%c0_83, %c0_84], %339 {strides = array<i32>} : memref<8x48xf32, #tpu.memory_space<vmem>>, vector<8x48xf32>,
    } else {
    }
    return
  }
  func.func @transform_0(%arg0: i32) -> (i32, i32, i32) {
    %c0_i32 = arith.constant 0 : i32
    %c0_i32_0 = arith.constant 0 : i32
    %c0_i32_1 = arith.constant 0 : i32
    return %c0_i32, %arg0, %c0_i32_0 : i32, i32, i32
  }
  func.func @transform_1(%arg0: i32) -> (i32, i32) {
    %c0_i32 = arith.constant 0 : i32
    %c0_i32_0 = arith.constant 0 : i32
    %c0_i32_1 = arith.constant 0 : i32
    return %c0_i32, %c0_i32_0 : i32, i32
  }
  func.func @transform_2(%arg0: i32) -> (i32, i32) {
    %c0_i32 = arith.constant 0 : i32
    %c0_i32_0 = arith.constant 0 : i32
    %c0_i32_1 = arith.constant 0 : i32
    return %c0_i32, %c0_i32_0 : i32, i32
  }
  func.func @transform_3(%arg0: i32) -> (i32, i32) {
    %c0_i32 = arith.constant 0 : i32
    %c0_i32_0 = arith.constant 0 : i32
    %c0_i32_1 = arith.constant 0 : i32
    return %c0_i32, %c0_i32_0 : i32, i32
  }
  func.func @transform_4(%arg0: i32) -> (i32, i32) {
    %c0_i32 = arith.constant 0 : i32
    %c0_i32_0 = arith.constant 0 : i32
    %c0_i32_1 = arith.constant 0 : i32
    return %c0_i32, %c0_i32_0 : i32, i32
  }
  func.func @transform_5(%arg0: i32) -> (i32, i32) {
    %c0_i32 = arith.constant 0 : i32
    %c0_i32_0 = arith.constant 0 : i32
    %c0_i32_1 = arith.constant 0 : i32
    return %c0_i32, %c0_i32_0 : i32, i32
  }
  func.func @transform_6(%arg0: i32) -> (i32, i32) {
    %c0_i32 = arith.constant 0 : i32
    %c0_i32_0 = arith.constant 0 : i32
    %c0_i32_1 = arith.constant 0 : i32
    return %c0_i32, %c0_i32_0 : i32, i32
  }
  func.func @transform_7(%arg0: i32) -> (i32, i32) {
    %c0_i32 = arith.constant 0 : i32
    %c0_i32_0 = arith.constant 0 : i32
    %c0_i32_1 = arith.constant 0 : i32
    return %c0_i32, %c0_i32_0 : i32, i32
  }
  func.func @transform_8(%arg0: i32) -> (i32, i32) {
    %c0_i32 = arith.constant 0 : i32
    %c0_i32_0 = arith.constant 0 : i32
    %c0_i32_1 = arith.constant 0 : i32
    return %c0_i32, %c0_i32_0 : i32, i32
  }
  func.func @transform_9(%arg0: i32) -> (i32, i32) {
    %c0_i32 = arith.constant 0 : i32
    %c0_i32_0 = arith.constant 0 : i32
    %c0_i32_1 = arith.constant 0 : i32
    return %c0_i32, %c0_i32_0 : i32, i32
  }
}

</mosaic_0001>

<llo_original>
// kernel: tpu_custom_call.1
$region0: #{tpu_custom_call.1}
  #allocation0 [shape = 'u32[]', space=smem, size = 0x4, offset = 0x4, fixed_abs, tag = 'smem constant byte address 0x4 - core index']
  #allocation1 [shape = 'u32[72,128]{1,0:T(1,128)}', space=vmem, size = 0x9000, scoped, tag = 'internal scratch']
  #allocation2 [shape = 'f32[8,64]{1,0:T(8,128)}', space=vmem, size = 0x1000, scoped, tag = 'scratch operand']
  #allocation3 [shape = 'f32[8,64]{1,0:T(8,128)}', space=vmem, size = 0x1000, scoped, tag = 'scratch operand']
  #allocation4 [shape = 'f32[8,64]{1,0:T(8,128)}', space=vmem, size = 0x1000, scoped, tag = 'scratch operand']
  #allocation5 [shape = 'f32[8,64]{1,0:T(8,128)}', space=vmem, size = 0x1000, scoped, tag = 'scratch operand']
  #allocation6 [shape = 'f32[64,64]{1,0:T(8,128)}', space=vmem, size = 0x8000, scoped, tag = 'scratch operand']
  %s0 = inlined_call_operand.vmem [shape: f32[8,16,4], index: 0, kind: input, shape index: {}]
  %s1 = inlined_call_operand.vmem [shape: f32[4,256], index: 1, kind: input, shape index: {}]
  %s2 = inlined_call_operand.vmem [shape: f32[64,256], index: 2, kind: input, shape index: {}]
  %s3 = inlined_call_operand.vmem [shape: f32[1,256], index: 3, kind: input, shape index: {}]
  %s4 = inlined_call_operand.hbm [shape: f32[64,256], index: 4, kind: input, shape index: {}]
  %s5 = inlined_call_operand.hbm [shape: f32[64,256], index: 5, kind: input, shape index: {}]
  %s6 = inlined_call_operand.vmem [shape: f32[1,256], index: 6, kind: input, shape index: {}]
  %s7 = inlined_call_operand.vmem [shape: f32[64,48], index: 7, kind: input, shape index: {}]
  %s8 = inlined_call_operand.vmem [shape: f32[1,48], index: 8, kind: input, shape index: {}]
  %s9 = inlined_call_operand.hbm [shape: f32[8,48], index: 9, kind: output, shape index: {}]
  %s10 = sld [smem:[#allocation0]]
  $region123: #{tpu_custom_call.1} parent=0
    _
  %s12 = ssub.s32 1, %s10
  %s13 = scalar_select 0, %s12, %s10
  $region1: #{tpu_custom_call.1} parent=0
    #allocation7 [shape = 'u8[65536]{0}', space=vmem, size = 0x10000, scoped, tag = 'input window, operand 0']
    #allocation8 [shape = 'u8[65536]{0}', space=vmem, size = 0x10000, scoped, tag = 'input window, operand 4, single buffered']
    #allocation9 [shape = 's32[2]{0}', space=sflag, size = 0x8, scoped, tag = 'scoped memory for tpu_custom_call.1']
    #allocation10 [shape = 's32[2]{0}', space=sflag, size = 0x8, scoped, tag = 'scoped memory for tpu_custom_call.1']
    #allocation11 [shape = 'u8[65536]{0}', space=vmem, size = 0x10000, scoped, tag = 'input window, operand 5, single buffered']
    #allocation12 [shape = 's32[1]{0}', space=sflag, size = 0x4, scoped, tag = 'scoped memory for tpu_custom_call.1']
    #allocation13 [shape = 'u8[4096]{0}', space=vmem, size = 0x1000, scoped, tag = 'output window, operand 0, single buffered']
    %14 = vsyncpa [#allocation9], 0
    %15 = vsyncpa [#allocation12], 0
    %16 = vsyncpa [#allocation10], 0
    loop: start=0, step=1, limit=4
    $region2: #{tpu_custom_call.1} parent=1 // loop_pre_header
      _
    $region3: #{tpu_custom_call.1} parent=1 // loop_header
      %s18 = sphi 0, %s22
      %p19 = scmp.ge.s32.totalorder %s18, 4
      %s28 = sphi 0, %s30
      %s31 = sphi 0, %s28
      %s32 = sphi 0, %s31
      %s48 = sphi 0, %s32
      %s52 = sphi 0, %s52
      %s54 = sphi 0, %s52
      %s55 = sphi 0, %s54
      %s69 = sphi 0, %s55
      %s73 = sphi 0, %s73
      %s75 = sphi 0, %s73
      %s76 = sphi 0, %s75
      %s90 = sphi 0, %s76
      %s94 = sphi 0, %s94
      %s96 = sphi 0, %s94
      %s97 = sphi 0, %s96
      %s111 = sphi 0, %s97
      %s115 = sphi 0, %s115
      %s117 = sphi 0, %s115
      %s118 = sphi 0, %s117
      %s132 = sphi 0, %s118
      %s136 = sphi 0, %s136
      %s138 = sphi 0, %s136
      %s139 = sphi 0, %s138
      %s153 = sphi 0, %s139
      %s157 = sphi 0, %s157
      %s159 = sphi 0, %s157
      %s160 = sphi 0, %s159
      %s174 = sphi 0, %s160
      %s178 = sphi 0, %s178
      %s180 = sphi 0, %s178
      %s181 = sphi 0, %s180
      %s195 = sphi 0, %s181
      %s199 = sphi 0, %s199
      %s201 = sphi 0, %s199
      %s202 = sphi 0, %s201
      %s216 = sphi 0, %s202
      %s220 = sphi 0, %s220
      %s222 = sphi 0, %s220
      %s223 = sphi 0, %s222
      %s237 = sphi 0, %s223
    $region4: #{tpu_custom_call.1} parent=1 // loop_header_branch
      %21 = sbr.rel (%p19) target = $region8
    $region5: #{tpu_custom_call.1} parent=1 // loop_body
      %s23 = ssub.s32 %s18, 1
      %s24 = ssub.s32 %s18, 2
      %s25 = sadd.s32 %s18, 1
      %s26 = ssub.s32 %s18, %s25
      %p27 = scmp.eq.s32.totalorder %s26, 0
      %s29 = sadd.s32 %s28, 1
      %s30 = scalar_select %p27, %s28, %s29
      %p33 = pneg %p27
      %p34 = scmp.eq.s32.totalorder %s18, 1
      %p35 = por %p33, %p34
      %p36 = scmp.ne.s32.totalorder %s28, %s31
      %p37 = scmp.eq.s32.totalorder %s18, 0
      %p38 = por %p36, %p37
      %p39 = scmp.ne.s32.totalorder %s28, %s31
      %p40 = scmp.eq.s32.totalorder %s23, 1
      %p41 = por %p39, %p40
      %p42 = scmp.ne.s32.totalorder %s31, %s32
      %p43 = scmp.eq.s32.totalorder %s23, 0
      %p44 = por %p42, %p43
      %p45 = scmp.ne.s32.totalorder %s31, %s32
      %p46 = scmp.eq.s32.totalorder %s24, 1
      %p47 = por %p45, %p46
      %p49 = scmp.ne.s32.totalorder %s32, %s48
      %p50 = scmp.eq.s32.totalorder %s24, 0
      %p51 = por %p49, %p50
      %s53 = sadd.s32 %s52, 1
      %p56 = scmp.eq.s32.totalorder %s18, 1
      %p57 = scmp.ne.s32.totalorder %s52, %s54
      %p58 = scmp.eq.s32.totalorder %s18, 0
      %p59 = por %p57, %p58
      %p60 = scmp.ne.s32.totalorder %s52, %s54
      %p61 = scmp.eq.s32.totalorder %s23, 1
      %p62 = por %p60, %p61
      %p63 = scmp.ne.s32.totalorder %s54, %s55
      %p64 = scmp.eq.s32.totalorder %s23, 0
      %p65 = por %p63, %p64
      %p66 = scmp.ne.s32.totalorder %s54, %s55
      %p67 = scmp.eq.s32.totalorder %s24, 1
      %p68 = por %p66, %p67
      %p70 = scmp.ne.s32.totalorder %s55, %s69
      %p71 = scmp.eq.s32.totalorder %s24, 0
      %p72 = por %p70, %p71
      %s74 = sadd.s32 %s73, 1
      %p77 = scmp.eq.s32.totalorder %s18, 1
      %p78 = scmp.ne.s32.totalorder %s73, %s75
      %p79 = scmp.eq.s32.totalorder %s18, 0
      %p80 = por %p78, %p79
      %p81 = scmp.ne.s32.totalorder %s73, %s75
      %p82 = scmp.eq.s32.totalorder %s23, 1
      %p83 = por %p81, %p82
      %p84 = scmp.ne.s32.totalorder %s75, %s76
      %p85 = scmp.eq.s32.totalorder %s23, 0
      %p86 = por %p84, %p85
      %p87 = scmp.ne.s32.totalorder %s75, %s76
      %p88 = scmp.eq.s32.totalorder %s24, 1
      %p89 = por %p87, %p88
      %p91 = scmp.ne.s32.totalorder %s76, %s90
      %p92 = scmp.eq.s32.totalorder %s24, 0
      %p93 = por %p91, %p92
      %s95 = sadd.s32 %s94, 1
      %p98 = scmp.eq.s32.totalorder %s18, 1
      %p99 = scmp.ne.s32.totalorder %s94, %s96
      %p100 = scmp.eq.s32.totalorder %s18, 0
      %p101 = por %p99, %p100
      %p102 = scmp.ne.s32.totalorder %s94, %s96
      %p103 = scmp.eq.s32.totalorder %s23, 1
      %p104 = por %p102, %p103
      %p105 = scmp.ne.s32.totalorder %s96, %s97
      %p106 = scmp.eq.s32.totalorder %s23, 0
      %p107 = por %p105, %p106
      %p108 = scmp.ne.s32.totalorder %s96, %s97
      %p109 = scmp.eq.s32.totalorder %s24, 1
      %p110 = por %p108, %p109
      %p112 = scmp.ne.s32.totalorder %s97, %s111
      %p113 = scmp.eq.s32.totalorder %s24, 0
      %p114 = por %p112, %p113
      %s116 = sadd.s32 %s115, 1
      %p119 = scmp.eq.s32.totalorder %s18, 1
      %p120 = scmp.ne.s32.totalorder %s115, %s117
      %p121 = scmp.eq.s32.totalorder %s18, 0
      %p122 = por %p120, %p121
      %p123 = scmp.ne.s32.totalorder %s115, %s117
      %p124 = scmp.eq.s32.totalorder %s23, 1
      %p125 = por %p123, %p124
      %p126 = scmp.ne.s32.totalorder %s117, %s118
      %p127 = scmp.eq.s32.totalorder %s23, 0
      %p128 = por %p126, %p127
      %p129 = scmp.ne.s32.totalorder %s117, %s118
      %p130 = scmp.eq.s32.totalorder %s24, 1
      %p131 = por %p129, %p130
      %p133 = scmp.ne.s32.totalorder %s118, %s132
      %p134 = scmp.eq.s32.totalorder %s24, 0
      %p135 = por %p133, %p134
      %s137 = sadd.s32 %s136, 1
      %p140 = scmp.eq.s32.totalorder %s18, 1
      %p141 = scmp.ne.s32.totalorder %s136, %s138
      %p142 = scmp.eq.s32.totalorder %s18, 0
      %p143 = por %p141, %p142
      %p144 = scmp.ne.s32.totalorder %s136, %s138
      %p145 = scmp.eq.s32.totalorder %s23, 1
      %p146 = por %p144, %p145
      %p147 = scmp.ne.s32.totalorder %s138, %s139
      %p148 = scmp.eq.s32.totalorder %s23, 0
      %p149 = por %p147, %p148
      %p150 = scmp.ne.s32.totalorder %s138, %s139
      %p151 = scmp.eq.s32.totalorder %s24, 1
      %p152 = por %p150, %p151
      %p154 = scmp.ne.s32.totalorder %s139, %s153
      %p155 = scmp.eq.s32.totalorder %s24, 0
      %p156 = por %p154, %p155
      %s158 = sadd.s32 %s157, 1
      %p161 = scmp.eq.s32.totalorder %s18, 1
      %p162 = scmp.ne.s32.totalorder %s157, %s159
      %p163 = scmp.eq.s32.totalorder %s18, 0
      %p164 = por %p162, %p163
      %p165 = scmp.ne.s32.totalorder %s157, %s159
      %p166 = scmp.eq.s32.totalorder %s23, 1
      %p167 = por %p165, %p166
      %p168 = scmp.ne.s32.totalorder %s159, %s160
      %p169 = scmp.eq.s32.totalorder %s23, 0
      %p170 = por %p168, %p169
      %p171 = scmp.ne.s32.totalorder %s159, %s160
      %p172 = scmp.eq.s32.totalorder %s24, 1
      %p173 = por %p171, %p172
      %p175 = scmp.ne.s32.totalorder %s160, %s174
      %p176 = scmp.eq.s32.totalorder %s24, 0
      %p177 = por %p175, %p176
      %s179 = sadd.s32 %s178, 1
      %p182 = scmp.eq.s32.totalorder %s18, 1
      %p183 = scmp.ne.s32.totalorder %s178, %s180
      %p184 = scmp.eq.s32.totalorder %s18, 0
      %p185 = por %p183, %p184
      %p186 = scmp.ne.s32.totalorder %s178, %s180
      %p187 = scmp.eq.s32.totalorder %s23, 1
      %p188 = por %p186, %p187
      %p189 = scmp.ne.s32.totalorder %s180, %s181
      %p190 = scmp.eq.s32.totalorder %s23, 0
      %p191 = por %p189, %p190
      %p192 = scmp.ne.s32.totalorder %s180, %s181
      %p193 = scmp.eq.s32.totalorder %s24, 1
      %p194 = por %p192, %p193
      %p196 = scmp.ne.s32.totalorder %s181, %s195
      %p197 = scmp.eq.s32.totalorder %s24, 0
      %p198 = por %p196, %p197
      %s200 = sadd.s32 %s199, 1
      %p203 = scmp.eq.s32.totalorder %s18, 1
      %p204 = scmp.ne.s32.totalorder %s199, %s201
      %p205 = scmp.eq.s32.totalorder %s18, 0
      %p206 = por %p204, %p205
      %p207 = scmp.ne.s32.totalorder %s199, %s201
      %p208 = scmp.eq.s32.totalorder %s23, 1
      %p209 = por %p207, %p208
      %p210 = scmp.ne.s32.totalorder %s201, %s202
      %p211 = scmp.eq.s32.totalorder %s23, 0
      %p212 = por %p210, %p211
      %p213 = scmp.ne.s32.totalorder %s201, %s202
      %p214 = scmp.eq.s32.totalorder %s24, 1
      %p215 = por %p213, %p214
      %p217 = scmp.ne.s32.totalorder %s202, %s216
      %p218 = scmp.eq.s32.totalorder %s24, 0
      %p219 = por %p217, %p218
      %s221 = sadd.s32 %s220, 1
      %p224 = scmp.eq.s32.totalorder %s18, 1
      %p225 = scmp.ne.s32.totalorder %s220, %s222
      %p226 = scmp.eq.s32.totalorder %s18, 0
      %p227 = por %p225, %p226
      %p228 = scmp.ne.s32.totalorder %s220, %s222
      %p229 = scmp.eq.s32.totalorder %s23, 1
      %p230 = por %p228, %p229
      %p231 = scmp.ne.s32.totalorder %s222, %s223
      %p232 = scmp.eq.s32.totalorder %s23, 0
      %p233 = por %p231, %p232
      %p234 = scmp.ne.s32.totalorder %s222, %s223
      %p235 = scmp.eq.s32.totalorder %s24, 1
      %p236 = por %p234, %p235
      %p238 = scmp.ne.s32.totalorder %s223, %s237
      %p239 = scmp.eq.s32.totalorder %s24, 0
      %p240 = por %p238, %p239
      %p241 = scmp.le.s32.totalorder 1, %s18
      %p242 = scmp.lt.s32.totalorder %s18, 3
      %p243 = pnand %p241, %p242
      %p244 = pneg %p243
      // Predicated region
      $region9: #{tpu_custom_call.1} parent=5 // pred_check
        _
      $region10: #{tpu_custom_call.1} parent=5 // pred_check_branch
        %246 = sbr.rel (%p243) target = $region12
      $region11: #{tpu_custom_call.1} parent=5 // pred_region
        %s247 = ssub.s32 %s18, 1
        // Predicated region
        $region13: #{tpu_custom_call.1} parent=11 // pred_check
          %p248 = pneg %p65
        $region14: #{tpu_custom_call.1} parent=11 // pred_check_branch
          %250 = sbr.rel (%p248) target = $region16
        $region15: #{tpu_custom_call.1} parent=11 // pred_region
          _
        $region16: #{tpu_custom_call.1} parent=11 // pred_fallthru
          _
        // Predicated region
        $region17: #{tpu_custom_call.1} parent=11 // pred_check
          %p251 = pneg %p86
        $region18: #{tpu_custom_call.1} parent=11 // pred_check_branch
          %253 = sbr.rel (%p251) target = $region20
        $region19: #{tpu_custom_call.1} parent=11 // pred_region
          _
        $region20: #{tpu_custom_call.1} parent=11 // pred_fallthru
          _
        // Predicated region
        $region21: #{tpu_custom_call.1} parent=11 // pred_check
          %p254 = pneg %p107
        $region22: #{tpu_custom_call.1} parent=11 // pred_check_branch
          %256 = sbr.rel (%p254) target = $region24
        $region23: #{tpu_custom_call.1} parent=11 // pred_region
          _
        $region24: #{tpu_custom_call.1} parent=11 // pred_fallthru
          _
        // Predicated region
        $region25: #{tpu_custom_call.1} parent=11 // pred_check
          %p257 = pneg %p128
        $region26: #{tpu_custom_call.1} parent=11 // pred_check_branch
          %259 = sbr.rel (%p257) target = $region28
        $region27: #{tpu_custom_call.1} parent=11 // pred_region
          %261 = vsyncadd [#allocation9], 0
          %s262 = sshll.u32 %s4, 4
          %s263 = int_to_ptr.hbm [resolvable:$true] %s262
          %s264 = sshll.u32 [#allocation8], 4
          %s265 = int_to_ptr.vmem [resolvable:$true] %s264
          %270 = dma.hbm_to_vmem [thread:$0]  %s263, 2048, %s265, [#allocation9], 256, 256, 16
        $region28: #{tpu_custom_call.1} parent=11 // pred_fallthru
          _
        // Predicated region
        $region29: #{tpu_custom_call.1} parent=11 // pred_check
          %p271 = pneg %p149
        $region30: #{tpu_custom_call.1} parent=11 // pred_check_branch
          %273 = sbr.rel (%p271) target = $region32
        $region31: #{tpu_custom_call.1} parent=11 // pred_region
          %275 = vsyncadd [#allocation12], 0
          %s276 = sshll.u32 %s5, 4
          %s277 = int_to_ptr.hbm [resolvable:$true] %s276
          %s278 = sshll.u32 [#allocation11], 4
          %s279 = int_to_ptr.vmem [resolvable:$true] %s278
          %284 = dma.hbm_to_vmem [thread:$0]  %s277, 2048, %s279, [#allocation12], 256, 256, 16
        $region32: #{tpu_custom_call.1} parent=11 // pred_fallthru
          _
        // Predicated region
        $region33: #{tpu_custom_call.1} parent=11 // pred_check
          %p285 = pneg %p170
        $region34: #{tpu_custom_call.1} parent=11 // pred_check_branch
          %287 = sbr.rel (%p285) target = $region36
        $region35: #{tpu_custom_call.1} parent=11 // pred_region
          _
        $region36: #{tpu_custom_call.1} parent=11 // pred_fallthru
          _
        // Predicated region
        $region37: #{tpu_custom_call.1} parent=11 // pred_check
          %p288 = pneg %p191
        $region38: #{tpu_custom_call.1} parent=11 // pred_check_branch
          %290 = sbr.rel (%p288) target = $region40
        $region39: #{tpu_custom_call.1} parent=11 // pred_region
          _
        $region40: #{tpu_custom_call.1} parent=11 // pred_fallthru
          _
        // Predicated region
        $region41: #{tpu_custom_call.1} parent=11 // pred_check
          %p291 = pneg %p212
        $region42: #{tpu_custom_call.1} parent=11 // pred_check_branch
          %293 = sbr.rel (%p291) target = $region44
        $region43: #{tpu_custom_call.1} parent=11 // pred_region
          _
        $region44: #{tpu_custom_call.1} parent=11 // pred_fallthru
          _
      $region12: #{tpu_custom_call.1} parent=5 // pred_fallthru
        _
      %p294 = scmp.lt.s32.totalorder %s18, 2
      // Predicated region
      $region45: #{tpu_custom_call.1} parent=5 // pred_check
        %p295 = pneg %p294
      $region46: #{tpu_custom_call.1} parent=5 // pred_check_branch
        %297 = sbr.rel (%p295) target = $region48
      $region47: #{tpu_custom_call.1} parent=5 // pred_region
        // Predicated region
        $region49: #{tpu_custom_call.1} parent=47 // pred_check
          %p298 = pneg %p38
        $region50: #{tpu_custom_call.1} parent=47 // pred_check_branch
          %300 = sbr.rel (%p298) target = $region52
        $region51: #{tpu_custom_call.1} parent=47 // pred_region
          %s301 = sand.u32 %s28, 1
          %s302 = sand.u32 %s28, 1
          %s303 = smul.addr %s302, 64
          %s304 = scalar_lea.vmem [#allocation7], %s303
          %s305 = smul.addr %s18, 8
          %s306 = scalar_lea.vmem %s0, %s305
          // Predicated region
          $region53: #{tpu_custom_call.1} parent=51 // pred_check
            _
          $region54: #{tpu_custom_call.1} parent=51 // pred_check_branch
            %308 = sbr.rel (0) target = $region56
          $region55: #{tpu_custom_call.1} parent=51 // pred_region
            // Predicated region
            $region57: #{tpu_custom_call.1} parent=55 // pred_check
              _
            $region58: #{tpu_custom_call.1} parent=55 // pred_check_branch
              %310 = sbr.rel (0) target = $region60
            $region59: #{tpu_custom_call.1} parent=55 // pred_region
              // Predicated region
              $region72: #{tpu_custom_call.1} parent=59 // pred_check
                _
              $region73: #{tpu_custom_call.1} parent=59 // pred_check_branch
                %340 = sbr.rel (0) target = $region75
              $region74: #{tpu_custom_call.1} parent=59 // pred_region
                loop: start=0, step=1, limit=1
                $region76: #{tpu_custom_call.1} parent=74 // loop_pre_header
                  _
                $region77: #{tpu_custom_call.1} parent=74 // loop_header
                  %s342 = sphi 0, %s346
                  %p343 = scmp.ge.s32.totalorder %s342, 1
                  %s347 = sphi %s306, %s306
                  %s348 = sphi %s304, %s304
                $region78: #{tpu_custom_call.1} parent=74 // loop_header_branch
                  %345 = sbr.rel (%p343) target = $region82
                $region79: #{tpu_custom_call.1} parent=74 // loop_body
                  %v349 = vld [vmem:[%s347] sm:$0xff]
                  %350 = vst [vmem:[%s348] sm:$0xff] %v349
                  %v351 = vld [vmem:[%s347 + $0x10] sm:$0xff]
                  %352 = vst [vmem:[%s348 + $0x8] sm:$0xff] %v351
                  %v353 = vld [vmem:[%s347 + $0x20] sm:$0xff]
                  %354 = vst [vmem:[%s348 + $0x10] sm:$0xff] %v353
                  %v355 = vld [vmem:[%s347 + $0x30] sm:$0xff]
                  %356 = vst [vmem:[%s348 + $0x18] sm:$0xff] %v355
                  %v357 = vld [vmem:[%s347 + $0x40] sm:$0xff]
                  %358 = vst [vmem:[%s348 + $0x20] sm:$0xff] %v357
                  %v359 = vld [vmem:[%s347 + $0x50] sm:$0xff]
                  %360 = vst [vmem:[%s348 + $0x28] sm:$0xff] %v359
                  %v361 = vld [vmem:[%s347 + $0x60] sm:$0xff]
                  %362 = vst [vmem:[%s348 + $0x30] sm:$0xff] %v361
                  %v363 = vld [vmem:[%s347 + $0x70] sm:$0xff]
                  %364 = vst [vmem:[%s348 + $0x38] sm:$0xff] %v363
                $region80: #{tpu_custom_call.1} parent=74 // loop_footer
                  %s346 = sadd.s32 1, %s342
                $region81: #{tpu_custom_call.1} parent=74 // loop_footer_branch
                  %341 = sbr.rel target = $region77
                $region82: #{tpu_custom_call.1} parent=74 // loop_exit
                  _
              $region75: #{tpu_custom_call.1} parent=59 // pred_fallthru
                _
              // Predicated region
              $region83: #{tpu_custom_call.1} parent=59 // pred_check
                _
              $region84: #{tpu_custom_call.1} parent=59 // pred_check_branch
                %366 = sbr.rel target = $region86
              $region85: #{tpu_custom_call.1} parent=59 // pred_region
                _
              $region86: #{tpu_custom_call.1} parent=59 // pred_fallthru
                _
            $region60: #{tpu_custom_call.1} parent=55 // pred_fallthru
              _
            // Predicated region
            $region61: #{tpu_custom_call.1} parent=55 // pred_check
              _
            $region62: #{tpu_custom_call.1} parent=55 // pred_check_branch
              %312 = sbr.rel target = $region64
            $region63: #{tpu_custom_call.1} parent=55 // pred_region
              %s314 = ssub.s32 256, 1
              loop: start=0, step=1, limit=1
              $region65: #{tpu_custom_call.1} parent=63 // loop_pre_header
                _
              $region66: #{tpu_custom_call.1} parent=63 // loop_header
                %s316 = sphi 0, %s320
                %p317 = scmp.ge.s32.totalorder %s316, 1
                %s321 = sphi %s306, %s306
                %s322 = sphi %s304, %s304
              $region67: #{tpu_custom_call.1} parent=63 // loop_header_branch
                %319 = sbr.rel (%p317) target = $region71
              $region68: #{tpu_custom_call.1} parent=63 // loop_body
                %v323 = vld [vmem:[%s321] sm:%s314]
                %324 = vst [vmem:[%s322] sm:%s314] %v323
                %v325 = vld [vmem:[%s321 + $0x10] sm:%s314]
                %326 = vst [vmem:[%s322 + $0x8] sm:%s314] %v325
                %v327 = vld [vmem:[%s321 + $0x20] sm:%s314]
                %328 = vst [vmem:[%s322 + $0x10] sm:%s314] %v327
                %v329 = vld [vmem:[%s321 + $0x30] sm:%s314]
                %330 = vst [vmem:[%s322 + $0x18] sm:%s314] %v329
                %v331 = vld [vmem:[%s321 + $0x40] sm:%s314]
                %332 = vst [vmem:[%s322 + $0x20] sm:%s314] %v331
                %v333 = vld [vmem:[%s321 + $0x50] sm:%s314]
                %334 = vst [vmem:[%s322 + $0x28] sm:%s314] %v333
                %v335 = vld [vmem:[%s321 + $0x60] sm:%s314]
                %336 = vst [vmem:[%s322 + $0x30] sm:%s314] %v335
                %v337 = vld [vmem:[%s321 + $0x70] sm:%s314]
                %338 = vst [vmem:[%s322 + $0x38] sm:%s314] %v337
              $region69: #{tpu_custom_call.1} parent=63 // loop_footer
                %s320 = sadd.s32 1, %s316
              $region70: #{tpu_custom_call.1} parent=63 // loop_footer_branch
                %315 = sbr.rel target = $region66
              $region71: #{tpu_custom_call.1} parent=63 // loop_exit
                _
            $region64: #{tpu_custom_call.1} parent=55 // pred_fallthru
              _
          $region56: #{tpu_custom_call.1} parent=51 // pred_fallthru
            _
          %367 = vnop
        $region52: #{tpu_custom_call.1} parent=47 // pred_fallthru
          _
      $region48: #{tpu_custom_call.1} parent=5 // pred_fallthru
        _
      %p368 = scmp.le.s32.totalorder 1, %s18
      %p369 = scmp.lt.s32.totalorder %s18, 3
      %p370 = pnand %p368, %p369
      %p371 = pneg %p370
      // Predicated region
      $region87: #{tpu_custom_call.1} parent=5 // pred_check
        _
      $region88: #{tpu_custom_call.1} parent=5 // pred_check_branch
        %373 = sbr.rel (%p370) target = $region90
      $region89: #{tpu_custom_call.1} parent=5 // pred_region
        %s374 = ssub.s32 %s18, 1
        %s375 = sand.u32 %s31, 1
        %s376 = sand.u32 %s31, 1
        %s377 = smul.addr %s376, 64
        %s378 = scalar_lea.vmem [#allocation7], %s377
        // Predicated region
        $region91: #{tpu_custom_call.1} parent=89 // pred_check
          %p379 = pneg %p44
        $region92: #{tpu_custom_call.1} parent=89 // pred_check_branch
          %381 = sbr.rel (%p379) target = $region94
        $region93: #{tpu_custom_call.1} parent=89 // pred_region
          _
        $region94: #{tpu_custom_call.1} parent=89 // pred_fallthru
          _
        // Predicated region
        $region95: #{tpu_custom_call.1} parent=89 // pred_check
          %p382 = pneg %p128
        $region96: #{tpu_custom_call.1} parent=89 // pred_check_branch
          %384 = sbr.rel (%p382) target = $region98
        $region97: #{tpu_custom_call.1} parent=89 // pred_region
          %386 = dma.done [#allocation9], 2048
        $region98: #{tpu_custom_call.1} parent=89 // pred_fallthru
          _
        // Predicated region
        $region99: #{tpu_custom_call.1} parent=89 // pred_check
          %p387 = pneg %p149
        $region100: #{tpu_custom_call.1} parent=89 // pred_check_branch
          %389 = sbr.rel (%p387) target = $region102
        $region101: #{tpu_custom_call.1} parent=89 // pred_region
          %391 = dma.done [#allocation12], 2048
        $region102: #{tpu_custom_call.1} parent=89 // pred_fallthru
          _
        %s392 = sand.u32 %s31, 1
        %s393 = sand.u32 %s31, 1
        %s394 = smul.addr %s393, 64
        %s395 = scalar_lea.vmem [#allocation7], %s394
        %p396 = pneg %p44
        %p397 = pneg %p41
        %p398 = pneg %p65
        %p399 = pneg %p62
        %p400 = pneg %p86
        %p401 = pneg %p83
        %p402 = pneg %p107
        %p403 = pneg %p104
        %p404 = pneg %p128
        %p405 = pneg %p125
        %p406 = pneg %p149
        %p407 = pneg %p146
        %p408 = pneg %p170
        %p409 = pneg %p167
        %p410 = pneg %p191
        %p411 = pneg %p188
        %p412 = pneg %p212
        %p413 = pneg %p209
        %p414 = pneg %p233
        %p415 = pneg %p230
        %p416 = scmp.eq.s32.totalorder %s23, 0
        // Predicated region
        $region103: #{tpu_custom_call.1} parent=89 // pred_check
          %p417 = pneg %p416
        $region104: #{tpu_custom_call.1} parent=89 // pred_check_branch
          %419 = sbr.rel (%p417) target = $region106
        $region105: #{tpu_custom_call.1} parent=89 // pred_region
          %vm420 = vcmask 523264
          %421 = vst.msk [vmem:[#allocation2] sm:$0xff] %vm420, 0.0
          %422 = vst.msk [vmem:[#allocation3] sm:$0xff] %vm420, 0.0
          %423 = vst.msk [vmem:[#allocation4] sm:$0xff] %vm420, 0.0
          %424 = vst.msk [vmem:[#allocation5] sm:$0xff] %vm420, 0.0
        $region106: #{tpu_custom_call.1} parent=89 // pred_fallthru
          _
        %v425 = vld [vmem:[%s378] sm:$0xff]
        %v426 = vld [vmem:[%s378 + $0x8] sm:$0xff]
        %v427 = vld [vmem:[%s378 + $0x10] sm:$0xff]
        %v428 = vld [vmem:[%s378 + $0x18] sm:$0xff]
        %v429 = vld [vmem:[%s378 + $0x20] sm:$0xff]
        %v430 = vld [vmem:[%s378 + $0x28] sm:$0xff]
        %v431 = vld [vmem:[%s378 + $0x30] sm:$0xff]
        %v432 = vld [vmem:[%s378 + $0x38] sm:$0xff]
        %v433 = vld [vmem:[%s1] sm:$0xff]
        %v434 = vld [vmem:[%s3] sm:$0x3]
        %v436 = vperm.slane %v434, 0
        %v437 = vperm.slane %v434, 1
        %441 = vst [vmem:[#allocation1] ss:$2 sm:$0xff] %v433
        %v442 = vld.sshfl [vmem:[#allocation1] sm:$0xff pattern:$0x75316420]
        %v443 = vld.sshfl [vmem:[#allocation1 + $0x8] sm:$0xff pattern:$0x75316420]
        %vm444 = vcmask 31744
        %v446 = vsel %vm444, %v425, 0
        %v449 = vsel %vm444, %v426, 0
        %v452 = vsel %vm444, %v427, 0
        %v455 = vsel %vm444, %v428, 0
        %v458 = vsel %vm444, %v429, 0
        %v461 = vsel %vm444, %v430, 0
        %v464 = vsel %vm444, %v431, 0
        %v467 = vsel %vm444, %v432, 0
        %vm469 = vcmask 1043456
        %v470 = vsel %vm469, %v442, 0
        %v472 = vsel %vm469, %v443, 0
        %474 = vmatpush.msra.mxu0 0.0
        %475 = vmatpush.msra.mxu0 0.0
        %476 = vmatpush.msra.mxu0 0.0
        %477 = vmatpush.msra.mxu0 0.0
        %478 = vmatpush.msra.mxu0 0.0
        %479 = vmatpush.msra.mxu0 0.0
        %480 = vmatpush.msra.mxu0 0.0
        %481 = vmatpush.msra.mxu0 0.0
        %482 = vmatpush.msra.mxu0 0.0
        %483 = vmatpush.msra.mxu0 0.0
        %484 = vmatpush.msra.mxu0 0.0
        %485 = vmatpush.msra.mxu0 0.0
        %486 = vmatpush.msra.mxu0 0.0
        %487 = vmatpush.msra.mxu0 0.0
        %488 = vmatpush.msra.mxu0 0.0
        %489 = vmatpush.msra.mxu0 %v470
        %490 = vmatmul.f32.gmra.mxu0 %v446
        %v491 = vpop.f32.mrf.mxu0
        %v492 = vadd.f32 %v436, %v491
        %493 = vmatmul.f32.gmra.mxu0 %v449
        %v494 = vpop.f32.mrf.mxu0
        %v495 = vadd.f32 %v436, %v494
        %496 = vmatmul.f32.gmra.mxu0 %v452
        %v497 = vpop.f32.mrf.mxu0
        %v498 = vadd.f32 %v436, %v497
        %499 = vmatmul.f32.gmra.mxu0 %v455
        %v500 = vpop.f32.mrf.mxu0
        %v501 = vadd.f32 %v436, %v500
        %502 = vmatmul.f32.gmra.mxu0 %v458
        %v503 = vpop.f32.mrf.mxu0
        %v504 = vadd.f32 %v436, %v503
        %505 = vmatmul.f32.gmra.mxu0 %v461
        %v506 = vpop.f32.mrf.mxu0
        %v507 = vadd.f32 %v436, %v506
        %508 = vmatmul.f32.gmra.mxu0 %v464
        %v509 = vpop.f32.mrf.mxu0
        %v510 = vadd.f32 %v436, %v509
        %511 = vmatmul.f32.gmra.mxu0 %v467
        %v512 = vpop.f32.mrf.mxu0
        %v513 = vadd.f32 %v436, %v512
        %514 = vdwg.mxu0
        %515 = vmatpush.msra.mxu0 0.0
        %516 = vmatpush.msra.mxu0 0.0
        %517 = vmatpush.msra.mxu0 0.0
        %518 = vmatpush.msra.mxu0 0.0
        %519 = vmatpush.msra.mxu0 0.0
        %520 = vmatpush.msra.mxu0 0.0
        %521 = vmatpush.msra.mxu0 0.0
        %522 = vmatpush.msra.mxu0 0.0
        %523 = vmatpush.msra.mxu0 0.0
        %524 = vmatpush.msra.mxu0 0.0
        %525 = vmatpush.msra.mxu0 0.0
        %526 = vmatpush.msra.mxu0 0.0
        %527 = vmatpush.msra.mxu0 0.0
        %528 = vmatpush.msra.mxu0 0.0
        %529 = vmatpush.msra.mxu0 0.0
        %530 = vmatpush.msra.mxu0 %v472
        %531 = vmatmul.f32.gmra.mxu0 %v446
        %v532 = vpop.f32.mrf.mxu0
        %v533 = vadd.f32 %v437, %v532
        %534 = vmatmul.f32.gmra.mxu0 %v449
        %v535 = vpop.f32.mrf.mxu0
        %v536 = vadd.f32 %v437, %v535
        %537 = vmatmul.f32.gmra.mxu0 %v452
        %v538 = vpop.f32.mrf.mxu0
        %v539 = vadd.f32 %v437, %v538
        %540 = vmatmul.f32.gmra.mxu0 %v455
        %v541 = vpop.f32.mrf.mxu0
        %v542 = vadd.f32 %v437, %v541
        %543 = vmatmul.f32.gmra.mxu0 %v458
        %v544 = vpop.f32.mrf.mxu0
        %v545 = vadd.f32 %v437, %v544
        %546 = vmatmul.f32.gmra.mxu0 %v461
        %v547 = vpop.f32.mrf.mxu0
        %v548 = vadd.f32 %v437, %v547
        %549 = vmatmul.f32.gmra.mxu0 %v464
        %v550 = vpop.f32.mrf.mxu0
        %v551 = vadd.f32 %v437, %v550
        %552 = vmatmul.f32.gmra.mxu0 %v467
        %v553 = vpop.f32.mrf.mxu0
        %v554 = vadd.f32 %v437, %v553
        %555 = vdwg.mxu0
        %v556 = vld [vmem:[%s2] sm:$0xff]
        %v557 = vld [vmem:[%s2 + $0x8] sm:$0xff]
        %v558 = vld [vmem:[%s2 + $0x10] sm:$0xff]
        %v559 = vld [vmem:[%s2 + $0x18] sm:$0xff]
        %v560 = vld [vmem:[%s2 + $0x20] sm:$0xff]
        %v561 = vld [vmem:[%s2 + $0x28] sm:$0xff]
        %v562 = vld [vmem:[%s2 + $0x30] sm:$0xff]
        %v563 = vld [vmem:[%s2 + $0x38] sm:$0xff]
        %v564 = vld [vmem:[%s2 + $0x40] sm:$0xff]
        %v565 = vld [vmem:[%s2 + $0x48] sm:$0xff]
        %v566 = vld [vmem:[%s2 + $0x50] sm:$0xff]
        %v567 = vld [vmem:[%s2 + $0x58] sm:$0xff]
        %v568 = vld [vmem:[%s2 + $0x60] sm:$0xff]
        %v569 = vld [vmem:[%s2 + $0x68] sm:$0xff]
        %v570 = vld [vmem:[%s2 + $0x70] sm:$0xff]
        %v571 = vld [vmem:[%s2 + $0x78] sm:$0xff]
        %v572 = vld [vmem:[#allocation2] sm:$0xff]
        %v573 = vld [vmem:[#allocation3] sm:$0xff]
        %vm574 = vcmask 523264
        %v576 = vsel %vm574, %v572, 0
        %578 = vmatpush.msra.mxu0 0.0
        %579 = vmatpush.msra.mxu0 0.0
        %580 = vmatpush.msra.mxu0 0.0
        %581 = vmatpush.msra.mxu0 0.0
        %582 = vmatpush.msra.mxu0 0.0
        %583 = vmatpush.msra.mxu0 0.0
        %584 = vmatpush.msra.mxu0 0.0
        %585 = vmatpush.msra.mxu0 0.0
        %586 = vmatpush.msra.mxu0 %v570
        %587 = vmatpush.msra.mxu0 %v568
        %588 = vmatpush.msra.mxu0 %v566
        %589 = vmatpush.msra.mxu0 %v564
        %590 = vmatpush.msra.mxu0 %v562
        %591 = vmatpush.msra.mxu0 %v560
        %592 = vmatpush.msra.mxu0 %v558
        %593 = vmatpush.msra.mxu0 %v556
        %594 = vmatmul.f32.gmra.mxu0 %v576
        %v595 = vpop.f32.mrf.mxu0
        %v596 = vadd.f32 0.0, %v595
        %597 = vdwg.mxu0
        %598 = vmatpush.msra.mxu0 0.0
        %599 = vmatpush.msra.mxu0 0.0
        %600 = vmatpush.msra.mxu0 0.0
        %601 = vmatpush.msra.mxu0 0.0
        %602 = vmatpush.msra.mxu0 0.0
        %603 = vmatpush.msra.mxu0 0.0
        %604 = vmatpush.msra.mxu0 0.0
        %605 = vmatpush.msra.mxu0 0.0
        %606 = vmatpush.msra.mxu0 %v571
        %607 = vmatpush.msra.mxu0 %v569
        %608 = vmatpush.msra.mxu0 %v567
        %609 = vmatpush.msra.mxu0 %v565
        %610 = vmatpush.msra.mxu0 %v563
        %611 = vmatpush.msra.mxu0 %v561
        %612 = vmatpush.msra.mxu0 %v559
        %613 = vmatpush.msra.mxu0 %v557
        %614 = vmatmul.f32.gmra.mxu0 %v576
        %v615 = vpop.f32.mrf.mxu0
        %v616 = vadd.f32 0.0, %v615
        %617 = vdwg.mxu0
        %v620 = vrot.slane %v596, 1
        %v621 = vrot.slane %v616, 1
        %v622 = vrot.slane %v596, 2
        %v623 = vrot.slane %v616, 2
        %v624 = vrot.slane %v596, 3
        %v625 = vrot.slane %v616, 3
        %v626 = vrot.slane %v596, 4
        %v627 = vrot.slane %v616, 4
        %v628 = vrot.slane %v596, 5
        %v629 = vrot.slane %v616, 5
        %v630 = vrot.slane %v596, 6
        %v631 = vrot.slane %v616, 6
        %v632 = vrot.slane %v596, 7
        %v633 = vrot.slane %v616, 7
        %v650 = vadd.f32 %v492, %v596
        %v651 = vadd.f32 %v533, %v616
        %v652 = vadd.f32 %v495, %v620
        %v653 = vadd.f32 %v536, %v621
        %v654 = vadd.f32 %v498, %v622
        %v655 = vadd.f32 %v539, %v623
        %v656 = vadd.f32 %v501, %v624
        %v657 = vadd.f32 %v542, %v625
        %v658 = vadd.f32 %v504, %v626
        %v659 = vadd.f32 %v545, %v627
        %v660 = vadd.f32 %v507, %v628
        %v661 = vadd.f32 %v548, %v629
        %v662 = vadd.f32 %v510, %v630
        %v663 = vadd.f32 %v551, %v631
        %v664 = vadd.f32 %v513, %v632
        %v665 = vadd.f32 %v554, %v633
        %v666 = vxor.u32 %v650, 2147483648
        %v667 = vxor.u32 %v651, 2147483648
        %v668 = vxor.u32 %v652, 2147483648
        %v669 = vxor.u32 %v653, 2147483648
        %v670 = vxor.u32 %v654, 2147483648
        %v671 = vxor.u32 %v655, 2147483648
        %v672 = vxor.u32 %v656, 2147483648
        %v673 = vxor.u32 %v657, 2147483648
        %v674 = vxor.u32 %v658, 2147483648
        %v675 = vxor.u32 %v659, 2147483648
        %v676 = vxor.u32 %v660, 2147483648
        %v677 = vxor.u32 %v661, 2147483648
        %v678 = vxor.u32 %v662, 2147483648
        %v679 = vxor.u32 %v663, 2147483648
        %v680 = vxor.u32 %v664, 2147483648
        %v681 = vxor.u32 %v665, 2147483648
        %v682 = vmul.f32 %v666, 1.442695
        %v683 = vpow.pop %v682
        %v684 = vmul.f32 %v667, 1.442695
        %v685 = vpow.pop %v684
        %v686 = vmul.f32 %v668, 1.442695
        %v687 = vpow.pop %v686
        %v688 = vmul.f32 %v669, 1.442695
        %v689 = vpow.pop %v688
        %v690 = vmul.f32 %v670, 1.442695
        %v691 = vpow.pop %v690
        %v692 = vmul.f32 %v671, 1.442695
        %v693 = vpow.pop %v692
        %v694 = vmul.f32 %v672, 1.442695
        %v695 = vpow.pop %v694
        %v696 = vmul.f32 %v673, 1.442695
        %v697 = vpow.pop %v696
        %v698 = vmul.f32 %v674, 1.442695
        %v699 = vpow.pop %v698
        %v700 = vmul.f32 %v675, 1.442695
        %v701 = vpow.pop %v700
        %v702 = vmul.f32 %v676, 1.442695
        %v703 = vpow.pop %v702
        %v704 = vmul.f32 %v677, 1.442695
        %v705 = vpow.pop %v704
        %v706 = vmul.f32 %v678, 1.442695
        %v707 = vpow.pop %v706
        %v708 = vmul.f32 %v679, 1.442695
        %v709 = vpow.pop %v708
        %v710 = vmul.f32 %v680, 1.442695
        %v711 = vpow.pop %v710
        %v712 = vmul.f32 %v681, 1.442695
        %v713 = vpow.pop %v712
        %v714 = vadd.f32 %v683, 1.0
        %v715 = vadd.f32 %v685, 1.0
        %v716 = vadd.f32 %v687, 1.0
        %v717 = vadd.f32 %v689, 1.0
        %v718 = vadd.f32 %v691, 1.0
        %v719 = vadd.f32 %v693, 1.0
        %v720 = vadd.f32 %v695, 1.0
        %v721 = vadd.f32 %v697, 1.0
        %v722 = vadd.f32 %v699, 1.0
        %v723 = vadd.f32 %v701, 1.0
        %v724 = vadd.f32 %v703, 1.0
        %v725 = vadd.f32 %v705, 1.0
        %v726 = vadd.f32 %v707, 1.0
        %v727 = vadd.f32 %v709, 1.0
        %v728 = vadd.f32 %v711, 1.0
        %v729 = vadd.f32 %v713, 1.0
        %v730 = vrcp.pop %v714
        %v731 = vmul.f32 %v714, %v730
        %v732 = vsub.f32 1.0, %v731
        %v733 = vmul.f32 %v730, %v732
        %v734 = vadd.f32 %v730, %v733
        %vm735 = vweird.f32 %v714
        %vm736 = vweird.f32 %v730
        %vm737 = vmor %vm735, %vm736
        %v738 = vsel %vm737, %v730, %v734
        %v739 = vand.u32 2147483647, %v714
        %vm740 = vcmp.eq.f32.partialorder %v739, 8.507059e+37
        %v741 = vand.u32 %v714, 2147483648
        %v742 = vor.u32 1.1754944e-38, %v741
        %v743 = vsel %vm740, %v742, %v738
        %v744 = vmul.f32 1.0, %v743
        %v745 = vrcp.pop %v715
        %v746 = vmul.f32 %v715, %v745
        %v747 = vsub.f32 1.0, %v746
        %v748 = vmul.f32 %v745, %v747
        %v749 = vadd.f32 %v745, %v748
        %vm750 = vweird.f32 %v715
        %vm751 = vweird.f32 %v745
        %vm752 = vmor %vm750, %vm751
        %v753 = vsel %vm752, %v745, %v749
        %v754 = vand.u32 2147483647, %v715
        %vm755 = vcmp.eq.f32.partialorder %v754, 8.507059e+37
        %v756 = vand.u32 %v715, 2147483648
        %v757 = vor.u32 1.1754944e-38, %v756
        %v758 = vsel %vm755, %v757, %v753
        %v759 = vmul.f32 1.0, %v758
        %v760 = vrcp.pop %v716
        %v761 = vmul.f32 %v716, %v760
        %v762 = vsub.f32 1.0, %v761
        %v763 = vmul.f32 %v760, %v762
        %v764 = vadd.f32 %v760, %v763
        %vm765 = vweird.f32 %v716
        %vm766 = vweird.f32 %v760
        %vm767 = vmor %vm765, %vm766
        %v768 = vsel %vm767, %v760, %v764
        %v769 = vand.u32 2147483647, %v716
        %vm770 = vcmp.eq.f32.partialorder %v769, 8.507059e+37
        %v771 = vand.u32 %v716, 2147483648
        %v772 = vor.u32 1.1754944e-38, %v771
        %v773 = vsel %vm770, %v772, %v768
        %v774 = vmul.f32 1.0, %v773
        %v775 = vrcp.pop %v717
        %v776 = vmul.f32 %v717, %v775
        %v777 = vsub.f32 1.0, %v776
        %v778 = vmul.f32 %v775, %v777
        %v779 = vadd.f32 %v775, %v778
        %vm780 = vweird.f32 %v717
        %vm781 = vweird.f32 %v775
        %vm782 = vmor %vm780, %vm781
        %v783 = vsel %vm782, %v775, %v779
        %v784 = vand.u32 2147483647, %v717
        %vm785 = vcmp.eq.f32.partialorder %v784, 8.507059e+37
        %v786 = vand.u32 %v717, 2147483648
        %v787 = vor.u32 1.1754944e-38, %v786
        %v788 = vsel %vm785, %v787, %v783
        %v789 = vmul.f32 1.0, %v788
        %v790 = vrcp.pop %v718
        %v791 = vmul.f32 %v718, %v790
        %v792 = vsub.f32 1.0, %v791
        %v793 = vmul.f32 %v790, %v792
        %v794 = vadd.f32 %v790, %v793
        %vm795 = vweird.f32 %v718
        %vm796 = vweird.f32 %v790
        %vm797 = vmor %vm795, %vm796
        %v798 = vsel %vm797, %v790, %v794
        %v799 = vand.u32 2147483647, %v718
        %vm800 = vcmp.eq.f32.partialorder %v799, 8.507059e+37
        %v801 = vand.u32 %v718, 2147483648
        %v802 = vor.u32 1.1754944e-38, %v801
        %v803 = vsel %vm800, %v802, %v798
        %v804 = vmul.f32 1.0, %v803
        %v805 = vrcp.pop %v719
        %v806 = vmul.f32 %v719, %v805
        %v807 = vsub.f32 1.0, %v806
        %v808 = vmul.f32 %v805, %v807
        %v809 = vadd.f32 %v805, %v808
        %vm810 = vweird.f32 %v719
        %vm811 = vweird.f32 %v805
        %vm812 = vmor %vm810, %vm811
        %v813 = vsel %vm812, %v805, %v809
        %v814 = vand.u32 2147483647, %v719
        %vm815 = vcmp.eq.f32.partialorder %v814, 8.507059e+37
        %v816 = vand.u32 %v719, 2147483648
        %v817 = vor.u32 1.1754944e-38, %v816
        %v818 = vsel %vm815, %v817, %v813
        %v819 = vmul.f32 1.0, %v818
        %v820 = vrcp.pop %v720
        %v821 = vmul.f32 %v720, %v820
        %v822 = vsub.f32 1.0, %v821
        %v823 = vmul.f32 %v820, %v822
        %v824 = vadd.f32 %v820, %v823
        %vm825 = vweird.f32 %v720
        %vm826 = vweird.f32 %v820
        %vm827 = vmor %vm825, %vm826
        %v828 = vsel %vm827, %v820, %v824
        %v829 = vand.u32 2147483647, %v720
        %vm830 = vcmp.eq.f32.partialorder %v829, 8.507059e+37
        %v831 = vand.u32 %v720, 2147483648
        %v832 = vor.u32 1.1754944e-38, %v831
        %v833 = vsel %vm830, %v832, %v828
        %v834 = vmul.f32 1.0, %v833
        %v835 = vrcp.pop %v721
        %v836 = vmul.f32 %v721, %v835
        %v837 = vsub.f32 1.0, %v836
        %v838 = vmul.f32 %v835, %v837
        %v839 = vadd.f32 %v835, %v838
        %vm840 = vweird.f32 %v721
        %vm841 = vweird.f32 %v835
        %vm842 = vmor %vm840, %vm841
        %v843 = vsel %vm842, %v835, %v839
        %v844 = vand.u32 2147483647, %v721
        %vm845 = vcmp.eq.f32.partialorder %v844, 8.507059e+37
        %v846 = vand.u32 %v721, 2147483648
        %v847 = vor.u32 1.1754944e-38, %v846
        %v848 = vsel %vm845, %v847, %v843
        %v849 = vmul.f32 1.0, %v848
        %v850 = vrcp.pop %v722
        %v851 = vmul.f32 %v722, %v850
        %v852 = vsub.f32 1.0, %v851
        %v853 = vmul.f32 %v850, %v852
        %v854 = vadd.f32 %v850, %v853
        %vm855 = vweird.f32 %v722
        %vm856 = vweird.f32 %v850
        %vm857 = vmor %vm855, %vm856
        %v858 = vsel %vm857, %v850, %v854
        %v859 = vand.u32 2147483647, %v722
        %vm860 = vcmp.eq.f32.partialorder %v859, 8.507059e+37
        %v861 = vand.u32 %v722, 2147483648
        %v862 = vor.u32 1.1754944e-38, %v861
        %v863 = vsel %vm860, %v862, %v858
        %v864 = vmul.f32 1.0, %v863
        %v865 = vrcp.pop %v723
        %v866 = vmul.f32 %v723, %v865
        %v867 = vsub.f32 1.0, %v866
        %v868 = vmul.f32 %v865, %v867
        %v869 = vadd.f32 %v865, %v868
        %vm870 = vweird.f32 %v723
        %vm871 = vweird.f32 %v865
        %vm872 = vmor %vm870, %vm871
        %v873 = vsel %vm872, %v865, %v869
        %v874 = vand.u32 2147483647, %v723
        %vm875 = vcmp.eq.f32.partialorder %v874, 8.507059e+37
        %v876 = vand.u32 %v723, 2147483648
        %v877 = vor.u32 1.1754944e-38, %v876
        %v878 = vsel %vm875, %v877, %v873
        %v879 = vmul.f32 1.0, %v878
        %v880 = vrcp.pop %v724
        %v881 = vmul.f32 %v724, %v880
        %v882 = vsub.f32 1.0, %v881
        %v883 = vmul.f32 %v880, %v882
        %v884 = vadd.f32 %v880, %v883
        %vm885 = vweird.f32 %v724
        %vm886 = vweird.f32 %v880
        %vm887 = vmor %vm885, %vm886
        %v888 = vsel %vm887, %v880, %v884
        %v889 = vand.u32 2147483647, %v724
        %vm890 = vcmp.eq.f32.partialorder %v889, 8.507059e+37
        %v891 = vand.u32 %v724, 2147483648
        %v892 = vor.u32 1.1754944e-38, %v891
        %v893 = vsel %vm890, %v892, %v888
        %v894 = vmul.f32 1.0, %v893
        %v895 = vrcp.pop %v725
        %v896 = vmul.f32 %v725, %v895
        %v897 = vsub.f32 1.0, %v896
        %v898 = vmul.f32 %v895, %v897
        %v899 = vadd.f32 %v895, %v898
        %vm900 = vweird.f32 %v725
        %vm901 = vweird.f32 %v895
        %vm902 = vmor %vm900, %vm901
        %v903 = vsel %vm902, %v895, %v899
        %v904 = vand.u32 2147483647, %v725
        %vm905 = vcmp.eq.f32.partialorder %v904, 8.507059e+37
        %v906 = vand.u32 %v725, 2147483648
        %v907 = vor.u32 1.1754944e-38, %v906
        %v908 = vsel %vm905, %v907, %v903
        %v909 = vmul.f32 1.0, %v908
        %v910 = vrcp.pop %v726
        %v911 = vmul.f32 %v726, %v910
        %v912 = vsub.f32 1.0, %v911
        %v913 = vmul.f32 %v910, %v912
        %v914 = vadd.f32 %v910, %v913
        %vm915 = vweird.f32 %v726
        %vm916 = vweird.f32 %v910
        %vm917 = vmor %vm915, %vm916
        %v918 = vsel %vm917, %v910, %v914
        %v919 = vand.u32 2147483647, %v726
        %vm920 = vcmp.eq.f32.partialorder %v919, 8.507059e+37
        %v921 = vand.u32 %v726, 2147483648
        %v922 = vor.u32 1.1754944e-38, %v921
        %v923 = vsel %vm920, %v922, %v918
        %v924 = vmul.f32 1.0, %v923
        %v925 = vrcp.pop %v727
        %v926 = vmul.f32 %v727, %v925
        %v927 = vsub.f32 1.0, %v926
        %v928 = vmul.f32 %v925, %v927
        %v929 = vadd.f32 %v925, %v928
        %vm930 = vweird.f32 %v727
        %vm931 = vweird.f32 %v925
        %vm932 = vmor %vm930, %vm931
        %v933 = vsel %vm932, %v925, %v929
        %v934 = vand.u32 2147483647, %v727
        %vm935 = vcmp.eq.f32.partialorder %v934, 8.507059e+37
        %v936 = vand.u32 %v727, 2147483648
        %v937 = vor.u32 1.1754944e-38, %v936
        %v938 = vsel %vm935, %v937, %v933
        %v939 = vmul.f32 1.0, %v938
        %v940 = vrcp.pop %v728
        %v941 = vmul.f32 %v728, %v940
        %v942 = vsub.f32 1.0, %v941
        %v943 = vmul.f32 %v940, %v942
        %v944 = vadd.f32 %v940, %v943
        %vm945 = vweird.f32 %v728
        %vm946 = vweird.f32 %v940
        %vm947 = vmor %vm945, %vm946
        %v948 = vsel %vm947, %v940, %v944
        %v949 = vand.u32 2147483647, %v728
        %vm950 = vcmp.eq.f32.partialorder %v949, 8.507059e+37
        %v951 = vand.u32 %v728, 2147483648
        %v952 = vor.u32 1.1754944e-38, %v951
        %v953 = vsel %vm950, %v952, %v948
        %v954 = vmul.f32 1.0, %v953
        %v955 = vrcp.pop %v729
        %v956 = vmul.f32 %v729, %v955
        %v957 = vsub.f32 1.0, %v956
        %v958 = vmul.f32 %v955, %v957
        %v959 = vadd.f32 %v955, %v958
        %vm960 = vweird.f32 %v729
        %vm961 = vweird.f32 %v955
        %vm962 = vmor %vm960, %vm961
        %v963 = vsel %vm962, %v955, %v959
        %v964 = vand.u32 2147483647, %v729
        %vm965 = vcmp.eq.f32.partialorder %v964, 8.507059e+37
        %v966 = vand.u32 %v729, 2147483648
        %v967 = vor.u32 1.1754944e-38, %v966
        %v968 = vsel %vm965, %v967, %v963
        %v969 = vmul.f32 1.0, %v968
        %v970 = vtanh.pop %v651
        %v971 = vtanh.pop %v653
        %v972 = vtanh.pop %v655
        %v973 = vtanh.pop %v657
        %v974 = vtanh.pop %v659
        %v975 = vtanh.pop %v661
        %v976 = vtanh.pop %v663
        %v977 = vtanh.pop %v665
        %v979 = vrot.slane %v573, 1
        %v980 = vrot.slane %v573, 2
        %v981 = vrot.slane %v573, 3
        %v982 = vrot.slane %v573, 4
        %v983 = vrot.slane %v573, 5
        %v984 = vrot.slane %v573, 6
        %v985 = vrot.slane %v573, 7
        %986 = vrot.lane.b32.xlu0 %v573, 64
        %v987 = vpop.permute.xlu0 %986
        %988 = vrot.lane.b32.xlu0 %v979, 64
        %v989 = vpop.permute.xlu0 %988
        %990 = vrot.lane.b32.xlu0 %v980, 64
        %v991 = vpop.permute.xlu0 %990
        %992 = vrot.lane.b32.xlu0 %v981, 64
        %v993 = vpop.permute.xlu0 %992
        %994 = vrot.lane.b32.xlu0 %v982, 64
        %v995 = vpop.permute.xlu0 %994
        %996 = vrot.lane.b32.xlu0 %v983, 64
        %v997 = vpop.permute.xlu0 %996
        %998 = vrot.lane.b32.xlu0 %v984, 64
        %v999 = vpop.permute.xlu0 %998
        %1000 = vrot.lane.b32.xlu0 %v985, 64
        %v1001 = vpop.permute.xlu0 %1000
        %v1010 = vmul.f32 %v744, %v987
        %v1011 = vmul.f32 %v774, %v989
        %v1012 = vmul.f32 %v804, %v991
        %v1013 = vmul.f32 %v834, %v993
        %v1014 = vmul.f32 %v864, %v995
        %v1015 = vmul.f32 %v894, %v997
        %v1016 = vmul.f32 %v924, %v999
        %v1017 = vmul.f32 %v954, %v1001
        %v1018 = vmul.f32 %v744, %v970
        %v1019 = vmul.f32 %v774, %v971
        %v1020 = vmul.f32 %v804, %v972
        %v1021 = vmul.f32 %v834, %v973
        %v1022 = vmul.f32 %v864, %v974
        %v1023 = vmul.f32 %v894, %v975
        %v1024 = vmul.f32 %v924, %v976
        %v1025 = vmul.f32 %v954, %v977
        %1034 = vrot.lane.b32.xlu0 %v1018, 64
        %v1035 = vpop.permute.xlu0 %1034
        %1036 = vrot.lane.b32.xlu0 %v1019, 64
        %v1037 = vpop.permute.xlu0 %1036
        %1038 = vrot.lane.b32.xlu0 %v1020, 64
        %v1039 = vpop.permute.xlu0 %1038
        %1040 = vrot.lane.b32.xlu0 %v1021, 64
        %v1041 = vpop.permute.xlu0 %1040
        %1042 = vrot.lane.b32.xlu0 %v1022, 64
        %v1043 = vpop.permute.xlu0 %1042
        %1044 = vrot.lane.b32.xlu0 %v1023, 64
        %v1045 = vpop.permute.xlu0 %1044
        %1046 = vrot.lane.b32.xlu0 %v1024, 64
        %v1047 = vpop.permute.xlu0 %1046
        %1048 = vrot.lane.b32.xlu0 %v1025, 64
        %v1049 = vpop.permute.xlu0 %1048
        %v1058 = vadd.f32 %v1010, %v1035
        %v1059 = vadd.f32 %v1011, %v1037
        %v1060 = vadd.f32 %v1012, %v1039
        %v1061 = vadd.f32 %v1013, %v1041
        %v1062 = vadd.f32 %v1014, %v1043
        %v1063 = vadd.f32 %v1015, %v1045
        %v1064 = vadd.f32 %v1016, %v1047
        %v1065 = vadd.f32 %v1017, %v1049
        %v1066 = vtanh.pop %v1058
        %v1067 = vtanh.pop %v1059
        %v1068 = vtanh.pop %v1060
        %v1069 = vtanh.pop %v1061
        %v1070 = vtanh.pop %v1062
        %v1071 = vtanh.pop %v1063
        %v1072 = vtanh.pop %v1064
        %v1073 = vtanh.pop %v1065
        %v1074 = vmul.f32 %v759, %v1066
        %v1075 = vmul.f32 %v789, %v1067
        %v1076 = vmul.f32 %v819, %v1068
        %v1077 = vmul.f32 %v849, %v1069
        %v1078 = vmul.f32 %v879, %v1070
        %v1079 = vmul.f32 %v909, %v1071
        %v1080 = vmul.f32 %v939, %v1072
        %v1081 = vmul.f32 %v969, %v1073
        %v1090 = vrot.slane %v1075, 7
        %vm1091 = vcmask 1041409
        %v1092 = vsel %vm1091, %v1090, %v1074
        %v1093 = vrot.slane %v1076, 6
        %vm1094 = vcmask 1042434
        %v1095 = vsel %vm1094, %v1093, %v1092
        %v1096 = vrot.slane %v1077, 5
        %vm1097 = vcmask 1043459
        %v1098 = vsel %vm1097, %v1096, %v1095
        %v1099 = vrot.slane %v1078, 4
        %vm1100 = vcmask 1044484
        %v1101 = vsel %vm1100, %v1099, %v1098
        %v1102 = vrot.slane %v1079, 3
        %vm1103 = vcmask 1045509
        %v1104 = vsel %vm1103, %v1102, %v1101
        %v1105 = vrot.slane %v1080, 2
        %vm1106 = vcmask 1046534
        %v1107 = vsel %vm1106, %v1105, %v1104
        %v1108 = vrot.slane %v1081, 1
        %vm1109 = vcmask 1047559
        %v1110 = vsel %vm1109, %v1108, %v1107
        %1111 = vrot.lane.b32.xlu0 %v1110, 64
        %v1112 = vpop.permute.xlu0 %1111
        %1114 = vst.msk [vmem:[#allocation6] sm:$0xff] %vm574, %v1112
        %v1115 = vsel %vm574, %v1112, 0
        %1117 = vmatpush.msra.mxu0 0.0
        %1118 = vmatpush.msra.mxu0 0.0
        %1119 = vmatpush.msra.mxu0 0.0
        %1120 = vmatpush.msra.mxu0 0.0
        %1121 = vmatpush.msra.mxu0 0.0
        %1122 = vmatpush.msra.mxu0 0.0
        %1123 = vmatpush.msra.mxu0 0.0
        %1124 = vmatpush.msra.mxu0 0.0
        %1125 = vmatpush.msra.mxu0 %v570
        %1126 = vmatpush.msra.mxu0 %v568
        %1127 = vmatpush.msra.mxu0 %v566
        %1128 = vmatpush.msra.mxu0 %v564
        %1129 = vmatpush.msra.mxu0 %v562
        %1130 = vmatpush.msra.mxu0 %v560
        %1131 = vmatpush.msra.mxu0 %v558
        %1132 = vmatpush.msra.mxu0 %v556
        %1133 = vmatmul.f32.gmra.mxu0 %v1115
        %v1134 = vpop.f32.mrf.mxu0
        %v1135 = vadd.f32 0.0, %v1134
        %1136 = vdwg.mxu0
        %1137 = vmatpush.msra.mxu0 0.0
        %1138 = vmatpush.msra.mxu0 0.0
        %1139 = vmatpush.msra.mxu0 0.0
        %1140 = vmatpush.msra.mxu0 0.0
        %1141 = vmatpush.msra.mxu0 0.0
        %1142 = vmatpush.msra.mxu0 0.0
        %1143 = vmatpush.msra.mxu0 0.0
        %1144 = vmatpush.msra.mxu0 0.0
        %1145 = vmatpush.msra.mxu0 %v571
        %1146 = vmatpush.msra.mxu0 %v569
        %1147 = vmatpush.msra.mxu0 %v567
        %1148 = vmatpush.msra.mxu0 %v565
        %1149 = vmatpush.msra.mxu0 %v563
        %1150 = vmatpush.msra.mxu0 %v561
        %1151 = vmatpush.msra.mxu0 %v559
        %1152 = vmatpush.msra.mxu0 %v557
        %1153 = vmatmul.f32.gmra.mxu0 %v1115
        %v1154 = vpop.f32.mrf.mxu0
        %v1155 = vadd.f32 0.0, %v1154
        %1156 = vdwg.mxu0
        %v1159 = vrot.slane %v1135, 7
        %v1160 = vrot.slane %v1155, 7
        %v1161 = vrot.slane %v1135, 1
        %v1162 = vrot.slane %v1155, 1
        %v1163 = vrot.slane %v1135, 2
        %v1164 = vrot.slane %v1155, 2
        %v1165 = vrot.slane %v1135, 3
        %v1166 = vrot.slane %v1155, 3
        %v1167 = vrot.slane %v1135, 4
        %v1168 = vrot.slane %v1155, 4
        %v1169 = vrot.slane %v1135, 5
        %v1170 = vrot.slane %v1155, 5
        %v1171 = vrot.slane %v1135, 6
        %v1172 = vrot.slane %v1155, 6
        %v1189 = vadd.f32 %v492, %v1159
        %v1190 = vadd.f32 %v533, %v1160
        %v1191 = vadd.f32 %v495, %v1135
        %v1192 = vadd.f32 %v536, %v1155
        %v1193 = vadd.f32 %v498, %v1161
        %v1194 = vadd.f32 %v539, %v1162
        %v1195 = vadd.f32 %v501, %v1163
        %v1196 = vadd.f32 %v542, %v1164
        %v1197 = vadd.f32 %v504, %v1165
        %v1198 = vadd.f32 %v545, %v1166
        %v1199 = vadd.f32 %v507, %v1167
        %v1200 = vadd.f32 %v548, %v1168
        %v1201 = vadd.f32 %v510, %v1169
        %v1202 = vadd.f32 %v551, %v1170
        %v1203 = vadd.f32 %v513, %v1171
        %v1204 = vadd.f32 %v554, %v1172
        %v1205 = vxor.u32 %v1189, 2147483648
        %v1206 = vxor.u32 %v1190, 2147483648
        %v1207 = vxor.u32 %v1191, 2147483648
        %v1208 = vxor.u32 %v1192, 2147483648
        %v1209 = vxor.u32 %v1193, 2147483648
        %v1210 = vxor.u32 %v1194, 2147483648
        %v1211 = vxor.u32 %v1195, 2147483648
        %v1212 = vxor.u32 %v1196, 2147483648
        %v1213 = vxor.u32 %v1197, 2147483648
        %v1214 = vxor.u32 %v1198, 2147483648
        %v1215 = vxor.u32 %v1199, 2147483648
        %v1216 = vxor.u32 %v1200, 2147483648
        %v1217 = vxor.u32 %v1201, 2147483648
        %v1218 = vxor.u32 %v1202, 2147483648
        %v1219 = vxor.u32 %v1203, 2147483648
        %v1220 = vxor.u32 %v1204, 2147483648
        %v1221 = vmul.f32 %v1205, 1.442695
        %v1222 = vpow.pop %v1221
        %v1223 = vmul.f32 %v1206, 1.442695
        %v1224 = vpow.pop %v1223
        %v1225 = vmul.f32 %v1207, 1.442695
        %v1226 = vpow.pop %v1225
        %v1227 = vmul.f32 %v1208, 1.442695
        %v1228 = vpow.pop %v1227
        %v1229 = vmul.f32 %v1209, 1.442695
        %v1230 = vpow.pop %v1229
        %v1231 = vmul.f32 %v1210, 1.442695
        %v1232 = vpow.pop %v1231
        %v1233 = vmul.f32 %v1211, 1.442695
        %v1234 = vpow.pop %v1233
        %v1235 = vmul.f32 %v1212, 1.442695
        %v1236 = vpow.pop %v1235
        %v1237 = vmul.f32 %v1213, 1.442695
        %v1238 = vpow.pop %v1237
        %v1239 = vmul.f32 %v1214, 1.442695
        %v1240 = vpow.pop %v1239
        %v1241 = vmul.f32 %v1215, 1.442695
        %v1242 = vpow.pop %v1241
        %v1243 = vmul.f32 %v1216, 1.442695
        %v1244 = vpow.pop %v1243
        %v1245 = vmul.f32 %v1217, 1.442695
        %v1246 = vpow.pop %v1245
        %v1247 = vmul.f32 %v1218, 1.442695
        %v1248 = vpow.pop %v1247
        %v1249 = vmul.f32 %v1219, 1.442695
        %v1250 = vpow.pop %v1249
        %v1251 = vmul.f32 %v1220, 1.442695
        %v1252 = vpow.pop %v1251
        %v1253 = vadd.f32 %v1222, 1.0
        %v1254 = vadd.f32 %v1224, 1.0
        %v1255 = vadd.f32 %v1226, 1.0
        %v1256 = vadd.f32 %v1228, 1.0
        %v1257 = vadd.f32 %v1230, 1.0
        %v1258 = vadd.f32 %v1232, 1.0
        %v1259 = vadd.f32 %v1234, 1.0
        %v1260 = vadd.f32 %v1236, 1.0
        %v1261 = vadd.f32 %v1238, 1.0
        %v1262 = vadd.f32 %v1240, 1.0
        %v1263 = vadd.f32 %v1242, 1.0
        %v1264 = vadd.f32 %v1244, 1.0
        %v1265 = vadd.f32 %v1246, 1.0
        %v1266 = vadd.f32 %v1248, 1.0
        %v1267 = vadd.f32 %v1250, 1.0
        %v1268 = vadd.f32 %v1252, 1.0
        %v1269 = vrcp.pop %v1253
        %v1270 = vmul.f32 %v1253, %v1269
        %v1271 = vsub.f32 1.0, %v1270
        %v1272 = vmul.f32 %v1269, %v1271
        %v1273 = vadd.f32 %v1269, %v1272
        %vm1274 = vweird.f32 %v1253
        %vm1275 = vweird.f32 %v1269
        %vm1276 = vmor %vm1274, %vm1275
        %v1277 = vsel %vm1276, %v1269, %v1273
        %v1278 = vand.u32 2147483647, %v1253
        %vm1279 = vcmp.eq.f32.partialorder %v1278, 8.507059e+37
        %v1280 = vand.u32 %v1253, 2147483648
        %v1281 = vor.u32 1.1754944e-38, %v1280
        %v1282 = vsel %vm1279, %v1281, %v1277
        %v1283 = vmul.f32 1.0, %v1282
        %v1284 = vrcp.pop %v1254
        %v1285 = vmul.f32 %v1254, %v1284
        %v1286 = vsub.f32 1.0, %v1285
        %v1287 = vmul.f32 %v1284, %v1286
        %v1288 = vadd.f32 %v1284, %v1287
        %vm1289 = vweird.f32 %v1254
        %vm1290 = vweird.f32 %v1284
        %vm1291 = vmor %vm1289, %vm1290
        %v1292 = vsel %vm1291, %v1284, %v1288
        %v1293 = vand.u32 2147483647, %v1254
        %vm1294 = vcmp.eq.f32.partialorder %v1293, 8.507059e+37
        %v1295 = vand.u32 %v1254, 2147483648
        %v1296 = vor.u32 1.1754944e-38, %v1295
        %v1297 = vsel %vm1294, %v1296, %v1292
        %v1298 = vmul.f32 1.0, %v1297
        %v1299 = vrcp.pop %v1255
        %v1300 = vmul.f32 %v1255, %v1299
        %v1301 = vsub.f32 1.0, %v1300
        %v1302 = vmul.f32 %v1299, %v1301
        %v1303 = vadd.f32 %v1299, %v1302
        %vm1304 = vweird.f32 %v1255
        %vm1305 = vweird.f32 %v1299
        %vm1306 = vmor %vm1304, %vm1305
        %v1307 = vsel %vm1306, %v1299, %v1303
        %v1308 = vand.u32 2147483647, %v1255
        %vm1309 = vcmp.eq.f32.partialorder %v1308, 8.507059e+37
        %v1310 = vand.u32 %v1255, 2147483648
        %v1311 = vor.u32 1.1754944e-38, %v1310
        %v1312 = vsel %vm1309, %v1311, %v1307
        %v1313 = vmul.f32 1.0, %v1312
        %v1314 = vrcp.pop %v1256
        %v1315 = vmul.f32 %v1256, %v1314
        %v1316 = vsub.f32 1.0, %v1315
        %v1317 = vmul.f32 %v1314, %v1316
        %v1318 = vadd.f32 %v1314, %v1317
        %vm1319 = vweird.f32 %v1256
        %vm1320 = vweird.f32 %v1314
        %vm1321 = vmor %vm1319, %vm1320
        %v1322 = vsel %vm1321, %v1314, %v1318
        %v1323 = vand.u32 2147483647, %v1256
        %vm1324 = vcmp.eq.f32.partialorder %v1323, 8.507059e+37
        %v1325 = vand.u32 %v1256, 2147483648
        %v1326 = vor.u32 1.1754944e-38, %v1325
        %v1327 = vsel %vm1324, %v1326, %v1322
        %v1328 = vmul.f32 1.0, %v1327
        %v1329 = vrcp.pop %v1257
        %v1330 = vmul.f32 %v1257, %v1329
        %v1331 = vsub.f32 1.0, %v1330
        %v1332 = vmul.f32 %v1329, %v1331
        %v1333 = vadd.f32 %v1329, %v1332
        %vm1334 = vweird.f32 %v1257
        %vm1335 = vweird.f32 %v1329
        %vm1336 = vmor %vm1334, %vm1335
        %v1337 = vsel %vm1336, %v1329, %v1333
        %v1338 = vand.u32 2147483647, %v1257
        %vm1339 = vcmp.eq.f32.partialorder %v1338, 8.507059e+37
        %v1340 = vand.u32 %v1257, 2147483648
        %v1341 = vor.u32 1.1754944e-38, %v1340
        %v1342 = vsel %vm1339, %v1341, %v1337
        %v1343 = vmul.f32 1.0, %v1342
        %v1344 = vrcp.pop %v1258
        %v1345 = vmul.f32 %v1258, %v1344
        %v1346 = vsub.f32 1.0, %v1345
        %v1347 = vmul.f32 %v1344, %v1346
        %v1348 = vadd.f32 %v1344, %v1347
        %vm1349 = vweird.f32 %v1258
        %vm1350 = vweird.f32 %v1344
        %vm1351 = vmor %vm1349, %vm1350
        %v1352 = vsel %vm1351, %v1344, %v1348
        %v1353 = vand.u32 2147483647, %v1258
        %vm1354 = vcmp.eq.f32.partialorder %v1353, 8.507059e+37
        %v1355 = vand.u32 %v1258, 2147483648
        %v1356 = vor.u32 1.1754944e-38, %v1355
        %v1357 = vsel %vm1354, %v1356, %v1352
        %v1358 = vmul.f32 1.0, %v1357
        %v1359 = vrcp.pop %v1259
        %v1360 = vmul.f32 %v1259, %v1359
        %v1361 = vsub.f32 1.0, %v1360
        %v1362 = vmul.f32 %v1359, %v1361
        %v1363 = vadd.f32 %v1359, %v1362
        %vm1364 = vweird.f32 %v1259
        %vm1365 = vweird.f32 %v1359
        %vm1366 = vmor %vm1364, %vm1365
        %v1367 = vsel %vm1366, %v1359, %v1363
        %v1368 = vand.u32 2147483647, %v1259
        %vm1369 = vcmp.eq.f32.partialorder %v1368, 8.507059e+37
        %v1370 = vand.u32 %v1259, 2147483648
        %v1371 = vor.u32 1.1754944e-38, %v1370
        %v1372 = vsel %vm1369, %v1371, %v1367
        %v1373 = vmul.f32 1.0, %v1372
        %v1374 = vrcp.pop %v1260
        %v1375 = vmul.f32 %v1260, %v1374
        %v1376 = vsub.f32 1.0, %v1375
        %v1377 = vmul.f32 %v1374, %v1376
        %v1378 = vadd.f32 %v1374, %v1377
        %vm1379 = vweird.f32 %v1260
        %vm1380 = vweird.f32 %v1374
        %vm1381 = vmor %vm1379, %vm1380
        %v1382 = vsel %vm1381, %v1374, %v1378
        %v1383 = vand.u32 2147483647, %v1260
        %vm1384 = vcmp.eq.f32.partialorder %v1383, 8.507059e+37
        %v1385 = vand.u32 %v1260, 2147483648
        %v1386 = vor.u32 1.1754944e-38, %v1385
        %v1387 = vsel %vm1384, %v1386, %v1382
        %v1388 = vmul.f32 1.0, %v1387
        %v1389 = vrcp.pop %v1261
        %v1390 = vmul.f32 %v1261, %v1389
        %v1391 = vsub.f32 1.0, %v1390
        %v1392 = vmul.f32 %v1389, %v1391
        %v1393 = vadd.f32 %v1389, %v1392
        %vm1394 = vweird.f32 %v1261
        %vm1395 = vweird.f32 %v1389
        %vm1396 = vmor %vm1394, %vm1395
        %v1397 = vsel %vm1396, %v1389, %v1393
        %v1398 = vand.u32 2147483647, %v1261
        %vm1399 = vcmp.eq.f32.partialorder %v1398, 8.507059e+37
        %v1400 = vand.u32 %v1261, 2147483648
        %v1401 = vor.u32 1.1754944e-38, %v1400
        %v1402 = vsel %vm1399, %v1401, %v1397
        %v1403 = vmul.f32 1.0, %v1402
        %v1404 = vrcp.pop %v1262
        %v1405 = vmul.f32 %v1262, %v1404
        %v1406 = vsub.f32 1.0, %v1405
        %v1407 = vmul.f32 %v1404, %v1406
        %v1408 = vadd.f32 %v1404, %v1407
        %vm1409 = vweird.f32 %v1262
        %vm1410 = vweird.f32 %v1404
        %vm1411 = vmor %vm1409, %vm1410
        %v1412 = vsel %vm1411, %v1404, %v1408
        %v1413 = vand.u32 2147483647, %v1262
        %vm1414 = vcmp.eq.f32.partialorder %v1413, 8.507059e+37
        %v1415 = vand.u32 %v1262, 2147483648
        %v1416 = vor.u32 1.1754944e-38, %v1415
        %v1417 = vsel %vm1414, %v1416, %v1412
        %v1418 = vmul.f32 1.0, %v1417
        %v1419 = vrcp.pop %v1263
        %v1420 = vmul.f32 %v1263, %v1419
        %v1421 = vsub.f32 1.0, %v1420
        %v1422 = vmul.f32 %v1419, %v1421
        %v1423 = vadd.f32 %v1419, %v1422
        %vm1424 = vweird.f32 %v1263
        %vm1425 = vweird.f32 %v1419
        %vm1426 = vmor %vm1424, %vm1425
        %v1427 = vsel %vm1426, %v1419, %v1423
        %v1428 = vand.u32 2147483647, %v1263
        %vm1429 = vcmp.eq.f32.partialorder %v1428, 8.507059e+37
        %v1430 = vand.u32 %v1263, 2147483648
        %v1431 = vor.u32 1.1754944e-38, %v1430
        %v1432 = vsel %vm1429, %v1431, %v1427
        %v1433 = vmul.f32 1.0, %v1432
        %v1434 = vrcp.pop %v1264
        %v1435 = vmul.f32 %v1264, %v1434
        %v1436 = vsub.f32 1.0, %v1435
        %v1437 = vmul.f32 %v1434, %v1436
        %v1438 = vadd.f32 %v1434, %v1437
        %vm1439 = vweird.f32 %v1264
        %vm1440 = vweird.f32 %v1434
        %vm1441 = vmor %vm1439, %vm1440
        %v1442 = vsel %vm1441, %v1434, %v1438
        %v1443 = vand.u32 2147483647, %v1264
        %vm1444 = vcmp.eq.f32.partialorder %v1443, 8.507059e+37
        %v1445 = vand.u32 %v1264, 2147483648
        %v1446 = vor.u32 1.1754944e-38, %v1445
        %v1447 = vsel %vm1444, %v1446, %v1442
        %v1448 = vmul.f32 1.0, %v1447
        %v1449 = vrcp.pop %v1265
        %v1450 = vmul.f32 %v1265, %v1449
        %v1451 = vsub.f32 1.0, %v1450
        %v1452 = vmul.f32 %v1449, %v1451
        %v1453 = vadd.f32 %v1449, %v1452
        %vm1454 = vweird.f32 %v1265
        %vm1455 = vweird.f32 %v1449
        %vm1456 = vmor %vm1454, %vm1455
        %v1457 = vsel %vm1456, %v1449, %v1453
        %v1458 = vand.u32 2147483647, %v1265
        %vm1459 = vcmp.eq.f32.partialorder %v1458, 8.507059e+37
        %v1460 = vand.u32 %v1265, 2147483648
        %v1461 = vor.u32 1.1754944e-38, %v1460
        %v1462 = vsel %vm1459, %v1461, %v1457
        %v1463 = vmul.f32 1.0, %v1462
        %v1464 = vrcp.pop %v1266
        %v1465 = vmul.f32 %v1266, %v1464
        %v1466 = vsub.f32 1.0, %v1465
        %v1467 = vmul.f32 %v1464, %v1466
        %v1468 = vadd.f32 %v1464, %v1467
        %vm1469 = vweird.f32 %v1266
        %vm1470 = vweird.f32 %v1464
        %vm1471 = vmor %vm1469, %vm1470
        %v1472 = vsel %vm1471, %v1464, %v1468
        %v1473 = vand.u32 2147483647, %v1266
        %vm1474 = vcmp.eq.f32.partialorder %v1473, 8.507059e+37
        %v1475 = vand.u32 %v1266, 2147483648
        %v1476 = vor.u32 1.1754944e-38, %v1475
        %v1477 = vsel %vm1474, %v1476, %v1472
        %v1478 = vmul.f32 1.0, %v1477
        %v1479 = vrcp.pop %v1267
        %v1480 = vmul.f32 %v1267, %v1479
        %v1481 = vsub.f32 1.0, %v1480
        %v1482 = vmul.f32 %v1479, %v1481
        %v1483 = vadd.f32 %v1479, %v1482
        %vm1484 = vweird.f32 %v1267
        %vm1485 = vweird.f32 %v1479
        %vm1486 = vmor %vm1484, %vm1485
        %v1487 = vsel %vm1486, %v1479, %v1483
        %v1488 = vand.u32 2147483647, %v1267
        %vm1489 = vcmp.eq.f32.partialorder %v1488, 8.507059e+37
        %v1490 = vand.u32 %v1267, 2147483648
        %v1491 = vor.u32 1.1754944e-38, %v1490
        %v1492 = vsel %vm1489, %v1491, %v1487
        %v1493 = vmul.f32 1.0, %v1492
        %v1494 = vrcp.pop %v1268
        %v1495 = vmul.f32 %v1268, %v1494
        %v1496 = vsub.f32 1.0, %v1495
        %v1497 = vmul.f32 %v1494, %v1496
        %v1498 = vadd.f32 %v1494, %v1497
        %vm1499 = vweird.f32 %v1268
        %vm1500 = vweird.f32 %v1494
        %vm1501 = vmor %vm1499, %vm1500
        %v1502 = vsel %vm1501, %v1494, %v1498
        %v1503 = vand.u32 2147483647, %v1268
        %vm1504 = vcmp.eq.f32.partialorder %v1503, 8.507059e+37
        %v1505 = vand.u32 %v1268, 2147483648
        %v1506 = vor.u32 1.1754944e-38, %v1505
        %v1507 = vsel %vm1504, %v1506, %v1502
        %v1508 = vmul.f32 1.0, %v1507
        %v1509 = vtanh.pop %v1190
        %v1510 = vtanh.pop %v1192
        %v1511 = vtanh.pop %v1194
        %v1512 = vtanh.pop %v1196
        %v1513 = vtanh.pop %v1198
        %v1514 = vtanh.pop %v1200
        %v1515 = vtanh.pop %v1202
        %v1516 = vtanh.pop %v1204
        %v1525 = vrot.slane %v1058, 7
        %v1526 = vrot.slane %v1059, 7
        %v1527 = vrot.slane %v1060, 7
        %v1528 = vrot.slane %v1061, 7
        %v1529 = vrot.slane %v1062, 7
        %v1530 = vrot.slane %v1063, 7
        %v1531 = vrot.slane %v1064, 7
        %v1532 = vrot.slane %v1065, 7
        %v1541 = vmul.f32 %v1283, %v1525
        %v1542 = vmul.f32 %v1313, %v1526
        %v1543 = vmul.f32 %v1343, %v1527
        %v1544 = vmul.f32 %v1373, %v1528
        %v1545 = vmul.f32 %v1403, %v1529
        %v1546 = vmul.f32 %v1433, %v1530
        %v1547 = vmul.f32 %v1463, %v1531
        %v1548 = vmul.f32 %v1493, %v1532
        %v1549 = vmul.f32 %v1283, %v1509
        %v1550 = vmul.f32 %v1313, %v1510
        %v1551 = vmul.f32 %v1343, %v1511
        %v1552 = vmul.f32 %v1373, %v1512
        %v1553 = vmul.f32 %v1403, %v1513
        %v1554 = vmul.f32 %v1433, %v1514
        %v1555 = vmul.f32 %v1463, %v1515
        %v1556 = vmul.f32 %v1493, %v1516
        %1565 = vrot.lane.b32.xlu0 %v1549, 64
        %v1566 = vpop.permute.xlu0 %1565
        %1567 = vrot.lane.b32.xlu0 %v1550, 64
        %v1568 = vpop.permute.xlu0 %1567
        %1569 = vrot.lane.b32.xlu0 %v1551, 64
        %v1570 = vpop.permute.xlu0 %1569
        %1571 = vrot.lane.b32.xlu0 %v1552, 64
        %v1572 = vpop.permute.xlu0 %1571
        %1573 = vrot.lane.b32.xlu0 %v1553, 64
        %v1574 = vpop.permute.xlu0 %1573
        %1575 = vrot.lane.b32.xlu0 %v1554, 64
        %v1576 = vpop.permute.xlu0 %1575
        %1577 = vrot.lane.b32.xlu0 %v1555, 64
        %v1578 = vpop.permute.xlu0 %1577
        %1579 = vrot.lane.b32.xlu0 %v1556, 64
        %v1580 = vpop.permute.xlu0 %1579
        %v1589 = vadd.f32 %v1541, %v1566
        %v1590 = vadd.f32 %v1542, %v1568
        %v1591 = vadd.f32 %v1543, %v1570
        %v1592 = vadd.f32 %v1544, %v1572
        %v1593 = vadd.f32 %v1545, %v1574
        %v1594 = vadd.f32 %v1546, %v1576
        %v1595 = vadd.f32 %v1547, %v1578
        %v1596 = vadd.f32 %v1548, %v1580
        %v1597 = vtanh.pop %v1589
        %v1598 = vtanh.pop %v1590
        %v1599 = vtanh.pop %v1591
        %v1600 = vtanh.pop %v1592
        %v1601 = vtanh.pop %v1593
        %v1602 = vtanh.pop %v1594
        %v1603 = vtanh.pop %v1595
        %v1604 = vtanh.pop %v1596
        %v1605 = vmul.f32 %v1298, %v1597
        %v1606 = vmul.f32 %v1328, %v1598
        %v1607 = vmul.f32 %v1358, %v1599
        %v1608 = vmul.f32 %v1388, %v1600
        %v1609 = vmul.f32 %v1418, %v1601
        %v1610 = vmul.f32 %v1448, %v1602
        %v1611 = vmul.f32 %v1478, %v1603
        %v1612 = vmul.f32 %v1508, %v1604
        %v1621 = vrot.slane %v1606, 7
        %v1622 = vsel %vm1094, %v1621, %v1605
        %v1623 = vrot.slane %v1607, 6
        %v1624 = vsel %vm1097, %v1623, %v1622
        %v1625 = vrot.slane %v1608, 5
        %v1626 = vsel %vm1100, %v1625, %v1624
        %v1627 = vrot.slane %v1609, 4
        %v1628 = vsel %vm1103, %v1627, %v1626
        %v1629 = vrot.slane %v1610, 3
        %v1630 = vsel %vm1106, %v1629, %v1628
        %v1631 = vrot.slane %v1611, 2
        %v1632 = vsel %vm1109, %v1631, %v1630
        %v1633 = vrot.slane %v1612, 1
        %1634 = vrot.lane.b32.xlu0 %v1632, 64
        %v1635 = vpop.permute.xlu0 %1634
        %1636 = vrot.lane.b32.xlu0 %v1633, 64
        %v1637 = vpop.permute.xlu0 %1636
        %vm1640 = vcmask 523265
        %1641 = vst.msk [vmem:[#allocation6 + $0x7] sm:$0xfe] %vm1640, %v1635
        %vm1642 = vcmask 516096
        %1643 = vst.msk [vmem:[#allocation6 + $0xf] sm:$0x1] %vm1642, %v1637
        %v1644 = vrot.slane %v1605, 1
        %v1645 = vsel %vm1091, %v1606, %v1644
        %v1646 = vrot.slane %v1607, 7
        %v1647 = vsel %vm1094, %v1646, %v1645
        %v1648 = vrot.slane %v1608, 6
        %v1649 = vsel %vm1097, %v1648, %v1647
        %v1650 = vrot.slane %v1609, 5
        %v1651 = vsel %vm1100, %v1650, %v1649
        %v1652 = vrot.slane %v1610, 4
        %v1653 = vsel %vm1103, %v1652, %v1651
        %v1654 = vrot.slane %v1611, 3
        %v1655 = vsel %vm1106, %v1654, %v1653
        %v1656 = vrot.slane %v1612, 2
        %v1657 = vsel %vm1109, %v1656, %v1655
        %1658 = vrot.lane.b32.xlu0 %v1657, 64
        %v1659 = vpop.permute.xlu0 %1658
        %v1660 = vsel %vm574, %v1659, 0
        %1662 = vmatpush.msra.mxu0 0.0
        %1663 = vmatpush.msra.mxu0 0.0
        %1664 = vmatpush.msra.mxu0 0.0
        %1665 = vmatpush.msra.mxu0 0.0
        %1666 = vmatpush.msra.mxu0 0.0
        %1667 = vmatpush.msra.mxu0 0.0
        %1668 = vmatpush.msra.mxu0 0.0
        %1669 = vmatpush.msra.mxu0 0.0
        %1670 = vmatpush.msra.mxu0 %v570
        %1671 = vmatpush.msra.mxu0 %v568
        %1672 = vmatpush.msra.mxu0 %v566
        %1673 = vmatpush.msra.mxu0 %v564
        %1674 = vmatpush.msra.mxu0 %v562
        %1675 = vmatpush.msra.mxu0 %v560
        %1676 = vmatpush.msra.mxu0 %v558
        %1677 = vmatpush.msra.mxu0 %v556
        %1678 = vmatmul.f32.gmra.mxu0 %v1660
        %v1679 = vpop.f32.mrf.mxu0
        %v1680 = vadd.f32 0.0, %v1679
        %1681 = vdwg.mxu0
        %1682 = vmatpush.msra.mxu0 0.0
        %1683 = vmatpush.msra.mxu0 0.0
        %1684 = vmatpush.msra.mxu0 0.0
        %1685 = vmatpush.msra.mxu0 0.0
        %1686 = vmatpush.msra.mxu0 0.0
        %1687 = vmatpush.msra.mxu0 0.0
        %1688 = vmatpush.msra.mxu0 0.0
        %1689 = vmatpush.msra.mxu0 0.0
        %1690 = vmatpush.msra.mxu0 %v571
        %1691 = vmatpush.msra.mxu0 %v569
        %1692 = vmatpush.msra.mxu0 %v567
        %1693 = vmatpush.msra.mxu0 %v565
        %1694 = vmatpush.msra.mxu0 %v563
        %1695 = vmatpush.msra.mxu0 %v561
        %1696 = vmatpush.msra.mxu0 %v559
        %1697 = vmatpush.msra.mxu0 %v557
        %1698 = vmatmul.f32.gmra.mxu0 %v1660
        %v1699 = vpop.f32.mrf.mxu0
        %v1700 = vadd.f32 0.0, %v1699
        %1701 = vdwg.mxu0
        %v1704 = vrot.slane %v1680, 6
        %v1705 = vrot.slane %v1700, 6
        %v1706 = vrot.slane %v1680, 7
        %v1707 = vrot.slane %v1700, 7
        %v1708 = vrot.slane %v1680, 1
        %v1709 = vrot.slane %v1700, 1
        %v1710 = vrot.slane %v1680, 2
        %v1711 = vrot.slane %v1700, 2
        %v1712 = vrot.slane %v1680, 3
        %v1713 = vrot.slane %v1700, 3
        %v1714 = vrot.slane %v1680, 4
        %v1715 = vrot.slane %v1700, 4
        %v1716 = vrot.slane %v1680, 5
        %v1717 = vrot.slane %v1700, 5
        %v1734 = vadd.f32 %v492, %v1704
        %v1735 = vadd.f32 %v533, %v1705
        %v1736 = vadd.f32 %v495, %v1706
        %v1737 = vadd.f32 %v536, %v1707
        %v1738 = vadd.f32 %v498, %v1680
        %v1739 = vadd.f32 %v539, %v1700
        %v1740 = vadd.f32 %v501, %v1708
        %v1741 = vadd.f32 %v542, %v1709
        %v1742 = vadd.f32 %v504, %v1710
        %v1743 = vadd.f32 %v545, %v1711
        %v1744 = vadd.f32 %v507, %v1712
        %v1745 = vadd.f32 %v548, %v1713
        %v1746 = vadd.f32 %v510, %v1714
        %v1747 = vadd.f32 %v551, %v1715
        %v1748 = vadd.f32 %v513, %v1716
        %v1749 = vadd.f32 %v554, %v1717
        %v1750 = vxor.u32 %v1734, 2147483648
        %v1751 = vxor.u32 %v1735, 2147483648
        %v1752 = vxor.u32 %v1736, 2147483648
        %v1753 = vxor.u32 %v1737, 2147483648
        %v1754 = vxor.u32 %v1738, 2147483648
        %v1755 = vxor.u32 %v1739, 2147483648
        %v1756 = vxor.u32 %v1740, 2147483648
        %v1757 = vxor.u32 %v1741, 2147483648
        %v1758 = vxor.u32 %v1742, 2147483648
        %v1759 = vxor.u32 %v1743, 2147483648
        %v1760 = vxor.u32 %v1744, 2147483648
        %v1761 = vxor.u32 %v1745, 2147483648
        %v1762 = vxor.u32 %v1746, 2147483648
        %v1763 = vxor.u32 %v1747, 2147483648
        %v1764 = vxor.u32 %v1748, 2147483648
        %v1765 = vxor.u32 %v1749, 2147483648
        %v1766 = vmul.f32 %v1750, 1.442695
        %v1767 = vpow.pop %v1766
        %v1768 = vmul.f32 %v1751, 1.442695
        %v1769 = vpow.pop %v1768
        %v1770 = vmul.f32 %v1752, 1.442695
        %v1771 = vpow.pop %v1770
        %v1772 = vmul.f32 %v1753, 1.442695
        %v1773 = vpow.pop %v1772
        %v1774 = vmul.f32 %v1754, 1.442695
        %v1775 = vpow.pop %v1774
        %v1776 = vmul.f32 %v1755, 1.442695
        %v1777 = vpow.pop %v1776
        %v1778 = vmul.f32 %v1756, 1.442695
        %v1779 = vpow.pop %v1778
        %v1780 = vmul.f32 %v1757, 1.442695
        %v1781 = vpow.pop %v1780
        %v1782 = vmul.f32 %v1758, 1.442695
        %v1783 = vpow.pop %v1782
        %v1784 = vmul.f32 %v1759, 1.442695
        %v1785 = vpow.pop %v1784
        %v1786 = vmul.f32 %v1760, 1.442695
        %v1787 = vpow.pop %v1786
        %v1788 = vmul.f32 %v1761, 1.442695
        %v1789 = vpow.pop %v1788
        %v1790 = vmul.f32 %v1762, 1.442695
        %v1791 = vpow.pop %v1790
        %v1792 = vmul.f32 %v1763, 1.442695
        %v1793 = vpow.pop %v1792
        %v1794 = vmul.f32 %v1764, 1.442695
        %v1795 = vpow.pop %v1794
        %v1796 = vmul.f32 %v1765, 1.442695
        %v1797 = vpow.pop %v1796
        %v1798 = vadd.f32 %v1767, 1.0
        %v1799 = vadd.f32 %v1769, 1.0
        %v1800 = vadd.f32 %v1771, 1.0
        %v1801 = vadd.f32 %v1773, 1.0
        %v1802 = vadd.f32 %v1775, 1.0
        %v1803 = vadd.f32 %v1777, 1.0
        %v1804 = vadd.f32 %v1779, 1.0
        %v1805 = vadd.f32 %v1781, 1.0
        %v1806 = vadd.f32 %v1783, 1.0
        %v1807 = vadd.f32 %v1785, 1.0
        %v1808 = vadd.f32 %v1787, 1.0
        %v1809 = vadd.f32 %v1789, 1.0
        %v1810 = vadd.f32 %v1791, 1.0
        %v1811 = vadd.f32 %v1793, 1.0
        %v1812 = vadd.f32 %v1795, 1.0
        %v1813 = vadd.f32 %v1797, 1.0
        %v1814 = vrcp.pop %v1798
        %v1815 = vmul.f32 %v1798, %v1814
        %v1816 = vsub.f32 1.0, %v1815
        %v1817 = vmul.f32 %v1814, %v1816
        %v1818 = vadd.f32 %v1814, %v1817
        %vm1819 = vweird.f32 %v1798
        %vm1820 = vweird.f32 %v1814
        %vm1821 = vmor %vm1819, %vm1820
        %v1822 = vsel %vm1821, %v1814, %v1818
        %v1823 = vand.u32 2147483647, %v1798
        %vm1824 = vcmp.eq.f32.partialorder %v1823, 8.507059e+37
        %v1825 = vand.u32 %v1798, 2147483648
        %v1826 = vor.u32 1.1754944e-38, %v1825
        %v1827 = vsel %vm1824, %v1826, %v1822
        %v1828 = vmul.f32 1.0, %v1827
        %v1829 = vrcp.pop %v1799
        %v1830 = vmul.f32 %v1799, %v1829
        %v1831 = vsub.f32 1.0, %v1830
        %v1832 = vmul.f32 %v1829, %v1831
        %v1833 = vadd.f32 %v1829, %v1832
        %vm1834 = vweird.f32 %v1799
        %vm1835 = vweird.f32 %v1829
        %vm1836 = vmor %vm1834, %vm1835
        %v1837 = vsel %vm1836, %v1829, %v1833
        %v1838 = vand.u32 2147483647, %v1799
        %vm1839 = vcmp.eq.f32.partialorder %v1838, 8.507059e+37
        %v1840 = vand.u32 %v1799, 2147483648
        %v1841 = vor.u32 1.1754944e-38, %v1840
        %v1842 = vsel %vm1839, %v1841, %v1837
        %v1843 = vmul.f32 1.0, %v1842
        %v1844 = vrcp.pop %v1800
        %v1845 = vmul.f32 %v1800, %v1844
        %v1846 = vsub.f32 1.0, %v1845
        %v1847 = vmul.f32 %v1844, %v1846
        %v1848 = vadd.f32 %v1844, %v1847
        %vm1849 = vweird.f32 %v1800
        %vm1850 = vweird.f32 %v1844
        %vm1851 = vmor %vm1849, %vm1850
        %v1852 = vsel %vm1851, %v1844, %v1848
        %v1853 = vand.u32 2147483647, %v1800
        %vm1854 = vcmp.eq.f32.partialorder %v1853, 8.507059e+37
        %v1855 = vand.u32 %v1800, 2147483648
        %v1856 = vor.u32 1.1754944e-38, %v1855
        %v1857 = vsel %vm1854, %v1856, %v1852
        %v1858 = vmul.f32 1.0, %v1857
        %v1859 = vrcp.pop %v1801
        %v1860 = vmul.f32 %v1801, %v1859
        %v1861 = vsub.f32 1.0, %v1860
        %v1862 = vmul.f32 %v1859, %v1861
        %v1863 = vadd.f32 %v1859, %v1862
        %vm1864 = vweird.f32 %v1801
        %vm1865 = vweird.f32 %v1859
        %vm1866 = vmor %vm1864, %vm1865
        %v1867 = vsel %vm1866, %v1859, %v1863
        %v1868 = vand.u32 2147483647, %v1801
        %vm1869 = vcmp.eq.f32.partialorder %v1868, 8.507059e+37
        %v1870 = vand.u32 %v1801, 2147483648
        %v1871 = vor.u32 1.1754944e-38, %v1870
        %v1872 = vsel %vm1869, %v1871, %v1867
        %v1873 = vmul.f32 1.0, %v1872
        %v1874 = vrcp.pop %v1802
        %v1875 = vmul.f32 %v1802, %v1874
        %v1876 = vsub.f32 1.0, %v1875
        %v1877 = vmul.f32 %v1874, %v1876
        %v1878 = vadd.f32 %v1874, %v1877
        %vm1879 = vweird.f32 %v1802
        %vm1880 = vweird.f32 %v1874
        %vm1881 = vmor %vm1879, %vm1880
        %v1882 = vsel %vm1881, %v1874, %v1878
        %v1883 = vand.u32 2147483647, %v1802
        %vm1884 = vcmp.eq.f32.partialorder %v1883, 8.507059e+37
        %v1885 = vand.u32 %v1802, 2147483648
        %v1886 = vor.u32 1.1754944e-38, %v1885
        %v1887 = vsel %vm1884, %v1886, %v1882
        %v1888 = vmul.f32 1.0, %v1887
        %v1889 = vrcp.pop %v1803
        %v1890 = vmul.f32 %v1803, %v1889
        %v1891 = vsub.f32 1.0, %v1890
        %v1892 = vmul.f32 %v1889, %v1891
        %v1893 = vadd.f32 %v1889, %v1892
        %vm1894 = vweird.f32 %v1803
        %vm1895 = vweird.f32 %v1889
        %vm1896 = vmor %vm1894, %vm1895
        %v1897 = vsel %vm1896, %v1889, %v1893
        %v1898 = vand.u32 2147483647, %v1803
        %vm1899 = vcmp.eq.f32.partialorder %v1898, 8.507059e+37
        %v1900 = vand.u32 %v1803, 2147483648
        %v1901 = vor.u32 1.1754944e-38, %v1900
        %v1902 = vsel %vm1899, %v1901, %v1897
        %v1903 = vmul.f32 1.0, %v1902
        %v1904 = vrcp.pop %v1804
        %v1905 = vmul.f32 %v1804, %v1904
        %v1906 = vsub.f32 1.0, %v1905
        %v1907 = vmul.f32 %v1904, %v1906
        %v1908 = vadd.f32 %v1904, %v1907
        %vm1909 = vweird.f32 %v1804
        %vm1910 = vweird.f32 %v1904
        %vm1911 = vmor %vm1909, %vm1910
        %v1912 = vsel %vm1911, %v1904, %v1908
        %v1913 = vand.u32 2147483647, %v1804
        %vm1914 = vcmp.eq.f32.partialorder %v1913, 8.507059e+37
        %v1915 = vand.u32 %v1804, 2147483648
        %v1916 = vor.u32 1.1754944e-38, %v1915
        %v1917 = vsel %vm1914, %v1916, %v1912
        %v1918 = vmul.f32 1.0, %v1917
        %v1919 = vrcp.pop %v1805
        %v1920 = vmul.f32 %v1805, %v1919
        %v1921 = vsub.f32 1.0, %v1920
        %v1922 = vmul.f32 %v1919, %v1921
        %v1923 = vadd.f32 %v1919, %v1922
        %vm1924 = vweird.f32 %v1805
        %vm1925 = vweird.f32 %v1919
        %vm1926 = vmor %vm1924, %vm1925
        %v1927 = vsel %vm1926, %v1919, %v1923
        %v1928 = vand.u32 2147483647, %v1805
        %vm1929 = vcmp.eq.f32.partialorder %v1928, 8.507059e+37
        %v1930 = vand.u32 %v1805, 2147483648
        %v1931 = vor.u32 1.1754944e-38, %v1930
        %v1932 = vsel %vm1929, %v1931, %v1927
        %v1933 = vmul.f32 1.0, %v1932
        %v1934 = vrcp.pop %v1806
        %v1935 = vmul.f32 %v1806, %v1934
        %v1936 = vsub.f32 1.0, %v1935
        %v1937 = vmul.f32 %v1934, %v1936
        %v1938 = vadd.f32 %v1934, %v1937
        %vm1939 = vweird.f32 %v1806
        %vm1940 = vweird.f32 %v1934
        %vm1941 = vmor %vm1939, %vm1940
        %v1942 = vsel %vm1941, %v1934, %v1938
        %v1943 = vand.u32 2147483647, %v1806
        %vm1944 = vcmp.eq.f32.partialorder %v1943, 8.507059e+37
        %v1945 = vand.u32 %v1806, 2147483648
        %v1946 = vor.u32 1.1754944e-38, %v1945
        %v1947 = vsel %vm1944, %v1946, %v1942
        %v1948 = vmul.f32 1.0, %v1947
        %v1949 = vrcp.pop %v1807
        %v1950 = vmul.f32 %v1807, %v1949
        %v1951 = vsub.f32 1.0, %v1950
        %v1952 = vmul.f32 %v1949, %v1951
        %v1953 = vadd.f32 %v1949, %v1952
        %vm1954 = vweird.f32 %v1807
        %vm1955 = vweird.f32 %v1949
        %vm1956 = vmor %vm1954, %vm1955
        %v1957 = vsel %vm1956, %v1949, %v1953
        %v1958 = vand.u32 2147483647, %v1807
        %vm1959 = vcmp.eq.f32.partialorder %v1958, 8.507059e+37
        %v1960 = vand.u32 %v1807, 2147483648
        %v1961 = vor.u32 1.1754944e-38, %v1960
        %v1962 = vsel %vm1959, %v1961, %v1957
        %v1963 = vmul.f32 1.0, %v1962
        %v1964 = vrcp.pop %v1808
        %v1965 = vmul.f32 %v1808, %v1964
        %v1966 = vsub.f32 1.0, %v1965
        %v1967 = vmul.f32 %v1964, %v1966
        %v1968 = vadd.f32 %v1964, %v1967
        %vm1969 = vweird.f32 %v1808
        %vm1970 = vweird.f32 %v1964
        %vm1971 = vmor %vm1969, %vm1970
        %v1972 = vsel %vm1971, %v1964, %v1968
        %v1973 = vand.u32 2147483647, %v1808
        %vm1974 = vcmp.eq.f32.partialorder %v1973, 8.507059e+37
        %v1975 = vand.u32 %v1808, 2147483648
        %v1976 = vor.u32 1.1754944e-38, %v1975
        %v1977 = vsel %vm1974, %v1976, %v1972
        %v1978 = vmul.f32 1.0, %v1977
        %v1979 = vrcp.pop %v1809
        %v1980 = vmul.f32 %v1809, %v1979
        %v1981 = vsub.f32 1.0, %v1980
        %v1982 = vmul.f32 %v1979, %v1981
        %v1983 = vadd.f32 %v1979, %v1982
        %vm1984 = vweird.f32 %v1809
        %vm1985 = vweird.f32 %v1979
        %vm1986 = vmor %vm1984, %vm1985
        %v1987 = vsel %vm1986, %v1979, %v1983
        %v1988 = vand.u32 2147483647, %v1809
        %vm1989 = vcmp.eq.f32.partialorder %v1988, 8.507059e+37
        %v1990 = vand.u32 %v1809, 2147483648
        %v1991 = vor.u32 1.1754944e-38, %v1990
        %v1992 = vsel %vm1989, %v1991, %v1987
        %v1993 = vmul.f32 1.0, %v1992
        %v1994 = vrcp.pop %v1810
        %v1995 = vmul.f32 %v1810, %v1994
        %v1996 = vsub.f32 1.0, %v1995
        %v1997 = vmul.f32 %v1994, %v1996
        %v1998 = vadd.f32 %v1994, %v1997
        %vm1999 = vweird.f32 %v1810
        %vm2000 = vweird.f32 %v1994
        %vm2001 = vmor %vm1999, %vm2000
        %v2002 = vsel %vm2001, %v1994, %v1998
        %v2003 = vand.u32 2147483647, %v1810
        %vm2004 = vcmp.eq.f32.partialorder %v2003, 8.507059e+37
        %v2005 = vand.u32 %v1810, 2147483648
        %v2006 = vor.u32 1.1754944e-38, %v2005
        %v2007 = vsel %vm2004, %v2006, %v2002
        %v2008 = vmul.f32 1.0, %v2007
        %v2009 = vrcp.pop %v1811
        %v2010 = vmul.f32 %v1811, %v2009
        %v2011 = vsub.f32 1.0, %v2010
        %v2012 = vmul.f32 %v2009, %v2011
        %v2013 = vadd.f32 %v2009, %v2012
        %vm2014 = vweird.f32 %v1811
        %vm2015 = vweird.f32 %v2009
        %vm2016 = vmor %vm2014, %vm2015
        %v2017 = vsel %vm2016, %v2009, %v2013
        %v2018 = vand.u32 2147483647, %v1811
        %vm2019 = vcmp.eq.f32.partialorder %v2018, 8.507059e+37
        %v2020 = vand.u32 %v1811, 2147483648
        %v2021 = vor.u32 1.1754944e-38, %v2020
        %v2022 = vsel %vm2019, %v2021, %v2017
        %v2023 = vmul.f32 1.0, %v2022
        %v2024 = vrcp.pop %v1812
        %v2025 = vmul.f32 %v1812, %v2024
        %v2026 = vsub.f32 1.0, %v2025
        %v2027 = vmul.f32 %v2024, %v2026
        %v2028 = vadd.f32 %v2024, %v2027
        %vm2029 = vweird.f32 %v1812
        %vm2030 = vweird.f32 %v2024
        %vm2031 = vmor %vm2029, %vm2030
        %v2032 = vsel %vm2031, %v2024, %v2028
        %v2033 = vand.u32 2147483647, %v1812
        %vm2034 = vcmp.eq.f32.partialorder %v2033, 8.507059e+37
        %v2035 = vand.u32 %v1812, 2147483648
        %v2036 = vor.u32 1.1754944e-38, %v2035
        %v2037 = vsel %vm2034, %v2036, %v2032
        %v2038 = vmul.f32 1.0, %v2037
        %v2039 = vrcp.pop %v1813
        %v2040 = vmul.f32 %v1813, %v2039
        %v2041 = vsub.f32 1.0, %v2040
        %v2042 = vmul.f32 %v2039, %v2041
        %v2043 = vadd.f32 %v2039, %v2042
        %vm2044 = vweird.f32 %v1813
        %vm2045 = vweird.f32 %v2039
        %vm2046 = vmor %vm2044, %vm2045
        %v2047 = vsel %vm2046, %v2039, %v2043
        %v2048 = vand.u32 2147483647, %v1813
        %vm2049 = vcmp.eq.f32.partialorder %v2048, 8.507059e+37
        %v2050 = vand.u32 %v1813, 2147483648
        %v2051 = vor.u32 1.1754944e-38, %v2050
        %v2052 = vsel %vm2049, %v2051, %v2047
        %v2053 = vmul.f32 1.0, %v2052
        %v2054 = vtanh.pop %v1735
        %v2055 = vtanh.pop %v1737
        %v2056 = vtanh.pop %v1739
        %v2057 = vtanh.pop %v1741
        %v2058 = vtanh.pop %v1743
        %v2059 = vtanh.pop %v1745
        %v2060 = vtanh.pop %v1747
        %v2061 = vtanh.pop %v1749
        %v2070 = vrot.slane %v1589, 7
        %v2071 = vrot.slane %v1590, 7
        %v2072 = vrot.slane %v1591, 7
        %v2073 = vrot.slane %v1592, 7
        %v2074 = vrot.slane %v1593, 7
        %v2075 = vrot.slane %v1594, 7
        %v2076 = vrot.slane %v1595, 7
        %v2077 = vrot.slane %v1596, 7
        %v2086 = vmul.f32 %v1828, %v2070
        %v2087 = vmul.f32 %v1858, %v2071
        %v2088 = vmul.f32 %v1888, %v2072
        %v2089 = vmul.f32 %v1918, %v2073
        %v2090 = vmul.f32 %v1948, %v2074
        %v2091 = vmul.f32 %v1978, %v2075
        %v2092 = vmul.f32 %v2008, %v2076
        %v2093 = vmul.f32 %v2038, %v2077
        %v2094 = vmul.f32 %v1828, %v2054
        %v2095 = vmul.f32 %v1858, %v2055
        %v2096 = vmul.f32 %v1888, %v2056
        %v2097 = vmul.f32 %v1918, %v2057
        %v2098 = vmul.f32 %v1948, %v2058
        %v2099 = vmul.f32 %v1978, %v2059
        %v2100 = vmul.f32 %v2008, %v2060
        %v2101 = vmul.f32 %v2038, %v2061
        %2110 = vrot.lane.b32.xlu0 %v2094, 64
        %v2111 = vpop.permute.xlu0 %2110
        %2112 = vrot.lane.b32.xlu0 %v2095, 64
        %v2113 = vpop.permute.xlu0 %2112
        %2114 = vrot.lane.b32.xlu0 %v2096, 64
        %v2115 = vpop.permute.xlu0 %2114
        %2116 = vrot.lane.b32.xlu0 %v2097, 64
        %v2117 = vpop.permute.xlu0 %2116
        %2118 = vrot.lane.b32.xlu0 %v2098, 64
        %v2119 = vpop.permute.xlu0 %2118
        %2120 = vrot.lane.b32.xlu0 %v2099, 64
        %v2121 = vpop.permute.xlu0 %2120
        %2122 = vrot.lane.b32.xlu0 %v2100, 64
        %v2123 = vpop.permute.xlu0 %2122
        %2124 = vrot.lane.b32.xlu0 %v2101, 64
        %v2125 = vpop.permute.xlu0 %2124
        %v2134 = vadd.f32 %v2086, %v2111
        %v2135 = vadd.f32 %v2087, %v2113
        %v2136 = vadd.f32 %v2088, %v2115
        %v2137 = vadd.f32 %v2089, %v2117
        %v2138 = vadd.f32 %v2090, %v2119
        %v2139 = vadd.f32 %v2091, %v2121
        %v2140 = vadd.f32 %v2092, %v2123
        %v2141 = vadd.f32 %v2093, %v2125
        %v2142 = vtanh.pop %v2134
        %v2143 = vtanh.pop %v2135
        %v2144 = vtanh.pop %v2136
        %v2145 = vtanh.pop %v2137
        %v2146 = vtanh.pop %v2138
        %v2147 = vtanh.pop %v2139
        %v2148 = vtanh.pop %v2140
        %v2149 = vtanh.pop %v2141
        %v2150 = vmul.f32 %v1843, %v2142
        %v2151 = vmul.f32 %v1873, %v2143
        %v2152 = vmul.f32 %v1903, %v2144
        %v2153 = vmul.f32 %v1933, %v2145
        %v2154 = vmul.f32 %v1963, %v2146
        %v2155 = vmul.f32 %v1993, %v2147
        %v2156 = vmul.f32 %v2023, %v2148
        %v2157 = vmul.f32 %v2053, %v2149
        %v2166 = vrot.slane %v2151, 7
        %v2167 = vsel %vm1097, %v2166, %v2150
        %v2168 = vrot.slane %v2152, 6
        %v2169 = vsel %vm1100, %v2168, %v2167
        %v2170 = vrot.slane %v2153, 5
        %v2171 = vsel %vm1103, %v2170, %v2169
        %v2172 = vrot.slane %v2154, 4
        %v2173 = vsel %vm1106, %v2172, %v2171
        %v2174 = vrot.slane %v2155, 3
        %v2175 = vsel %vm1109, %v2174, %v2173
        %v2176 = vrot.slane %v2156, 2
        %v2177 = vrot.slane %v2157, 1
        %v2178 = vsel %vm1091, %v2177, %v2176
        %2179 = vrot.lane.b32.xlu0 %v2175, 64
        %v2180 = vpop.permute.xlu0 %2179
        %2181 = vrot.lane.b32.xlu0 %v2178, 64
        %v2182 = vpop.permute.xlu0 %2181
        %vm2185 = vcmask 523266
        %2186 = vst.msk [vmem:[#allocation6 + $0xe] sm:$0xfc] %vm2185, %v2180
        %vm2187 = vcmask 517120
        %2188 = vst.msk [vmem:[#allocation6 + $0x16] sm:$0x3] %vm2187, %v2182
        %v2189 = vrot.slane %v2150, 2
        %v2190 = vrot.slane %v2151, 1
        %v2191 = vsel %vm1091, %v2190, %v2189
        %v2192 = vsel %vm1094, %v2152, %v2191
        %v2193 = vrot.slane %v2153, 7
        %v2194 = vsel %vm1097, %v2193, %v2192
        %v2195 = vrot.slane %v2154, 6
        %v2196 = vsel %vm1100, %v2195, %v2194
        %v2197 = vrot.slane %v2155, 5
        %v2198 = vsel %vm1103, %v2197, %v2196
        %v2199 = vrot.slane %v2156, 4
        %v2200 = vsel %vm1106, %v2199, %v2198
        %v2201 = vrot.slane %v2157, 3
        %v2202 = vsel %vm1109, %v2201, %v2200
        %2203 = vrot.lane.b32.xlu0 %v2202, 64
        %v2204 = vpop.permute.xlu0 %2203
        %v2205 = vsel %vm574, %v2204, 0
        %2207 = vmatpush.msra.mxu0 0.0
        %2208 = vmatpush.msra.mxu0 0.0
        %2209 = vmatpush.msra.mxu0 0.0
        %2210 = vmatpush.msra.mxu0 0.0
        %2211 = vmatpush.msra.mxu0 0.0
        %2212 = vmatpush.msra.mxu0 0.0
        %2213 = vmatpush.msra.mxu0 0.0
        %2214 = vmatpush.msra.mxu0 0.0
        %2215 = vmatpush.msra.mxu0 %v570
        %2216 = vmatpush.msra.mxu0 %v568
        %2217 = vmatpush.msra.mxu0 %v566
        %2218 = vmatpush.msra.mxu0 %v564
        %2219 = vmatpush.msra.mxu0 %v562
        %2220 = vmatpush.msra.mxu0 %v560
        %2221 = vmatpush.msra.mxu0 %v558
        %2222 = vmatpush.msra.mxu0 %v556
        %2223 = vmatmul.f32.gmra.mxu0 %v2205
        %v2224 = vpop.f32.mrf.mxu0
        %v2225 = vadd.f32 0.0, %v2224
        %2226 = vdwg.mxu0
        %2227 = vmatpush.msra.mxu0 0.0
        %2228 = vmatpush.msra.mxu0 0.0
        %2229 = vmatpush.msra.mxu0 0.0
        %2230 = vmatpush.msra.mxu0 0.0
        %2231 = vmatpush.msra.mxu0 0.0
        %2232 = vmatpush.msra.mxu0 0.0
        %2233 = vmatpush.msra.mxu0 0.0
        %2234 = vmatpush.msra.mxu0 0.0
        %2235 = vmatpush.msra.mxu0 %v571
        %2236 = vmatpush.msra.mxu0 %v569
        %2237 = vmatpush.msra.mxu0 %v567
        %2238 = vmatpush.msra.mxu0 %v565
        %2239 = vmatpush.msra.mxu0 %v563
        %2240 = vmatpush.msra.mxu0 %v561
        %2241 = vmatpush.msra.mxu0 %v559
        %2242 = vmatpush.msra.mxu0 %v557
        %2243 = vmatmul.f32.gmra.mxu0 %v2205
        %v2244 = vpop.f32.mrf.mxu0
        %v2245 = vadd.f32 0.0, %v2244
        %2246 = vdwg.mxu0
        %v2249 = vrot.slane %v2225, 5
        %v2250 = vrot.slane %v2245, 5
        %v2251 = vrot.slane %v2225, 6
        %v2252 = vrot.slane %v2245, 6
        %v2253 = vrot.slane %v2225, 7
        %v2254 = vrot.slane %v2245, 7
        %v2255 = vrot.slane %v2225, 1
        %v2256 = vrot.slane %v2245, 1
        %v2257 = vrot.slane %v2225, 2
        %v2258 = vrot.slane %v2245, 2
        %v2259 = vrot.slane %v2225, 3
        %v2260 = vrot.slane %v2245, 3
        %v2261 = vrot.slane %v2225, 4
        %v2262 = vrot.slane %v2245, 4
        %v2279 = vadd.f32 %v492, %v2249
        %v2280 = vadd.f32 %v533, %v2250
        %v2281 = vadd.f32 %v495, %v2251
        %v2282 = vadd.f32 %v536, %v2252
        %v2283 = vadd.f32 %v498, %v2253
        %v2284 = vadd.f32 %v539, %v2254
        %v2285 = vadd.f32 %v501, %v2225
        %v2286 = vadd.f32 %v542, %v2245
        %v2287 = vadd.f32 %v504, %v2255
        %v2288 = vadd.f32 %v545, %v2256
        %v2289 = vadd.f32 %v507, %v2257
        %v2290 = vadd.f32 %v548, %v2258
        %v2291 = vadd.f32 %v510, %v2259
        %v2292 = vadd.f32 %v551, %v2260
        %v2293 = vadd.f32 %v513, %v2261
        %v2294 = vadd.f32 %v554, %v2262
        %v2295 = vxor.u32 %v2279, 2147483648
        %v2296 = vxor.u32 %v2280, 2147483648
        %v2297 = vxor.u32 %v2281, 2147483648
        %v2298 = vxor.u32 %v2282, 2147483648
        %v2299 = vxor.u32 %v2283, 2147483648
        %v2300 = vxor.u32 %v2284, 2147483648
        %v2301 = vxor.u32 %v2285, 2147483648
        %v2302 = vxor.u32 %v2286, 2147483648
        %v2303 = vxor.u32 %v2287, 2147483648
        %v2304 = vxor.u32 %v2288, 2147483648
        %v2305 = vxor.u32 %v2289, 2147483648
        %v2306 = vxor.u32 %v2290, 2147483648
        %v2307 = vxor.u32 %v2291, 2147483648
        %v2308 = vxor.u32 %v2292, 2147483648
        %v2309 = vxor.u32 %v2293, 2147483648
        %v2310 = vxor.u32 %v2294, 2147483648
        %v2311 = vmul.f32 %v2295, 1.442695
        %v2312 = vpow.pop %v2311
        %v2313 = vmul.f32 %v2296, 1.442695
        %v2314 = vpow.pop %v2313
        %v2315 = vmul.f32 %v2297, 1.442695
        %v2316 = vpow.pop %v2315
        %v2317 = vmul.f32 %v2298, 1.442695
        %v2318 = vpow.pop %v2317
        %v2319 = vmul.f32 %v2299, 1.442695
        %v2320 = vpow.pop %v2319
        %v2321 = vmul.f32 %v2300, 1.442695
        %v2322 = vpow.pop %v2321
        %v2323 = vmul.f32 %v2301, 1.442695
        %v2324 = vpow.pop %v2323
        %v2325 = vmul.f32 %v2302, 1.442695
        %v2326 = vpow.pop %v2325
        %v2327 = vmul.f32 %v2303, 1.442695
        %v2328 = vpow.pop %v2327
        %v2329 = vmul.f32 %v2304, 1.442695
        %v2330 = vpow.pop %v2329
        %v2331 = vmul.f32 %v2305, 1.442695
        %v2332 = vpow.pop %v2331
        %v2333 = vmul.f32 %v2306, 1.442695
        %v2334 = vpow.pop %v2333
        %v2335 = vmul.f32 %v2307, 1.442695
        %v2336 = vpow.pop %v2335
        %v2337 = vmul.f32 %v2308, 1.442695
        %v2338 = vpow.pop %v2337
        %v2339 = vmul.f32 %v2309, 1.442695
        %v2340 = vpow.pop %v2339
        %v2341 = vmul.f32 %v2310, 1.442695
        %v2342 = vpow.pop %v2341
        %v2343 = vadd.f32 %v2312, 1.0
        %v2344 = vadd.f32 %v2314, 1.0
        %v2345 = vadd.f32 %v2316, 1.0
        %v2346 = vadd.f32 %v2318, 1.0
        %v2347 = vadd.f32 %v2320, 1.0
        %v2348 = vadd.f32 %v2322, 1.0
        %v2349 = vadd.f32 %v2324, 1.0
        %v2350 = vadd.f32 %v2326, 1.0
        %v2351 = vadd.f32 %v2328, 1.0
        %v2352 = vadd.f32 %v2330, 1.0
        %v2353 = vadd.f32 %v2332, 1.0
        %v2354 = vadd.f32 %v2334, 1.0
        %v2355 = vadd.f32 %v2336, 1.0
        %v2356 = vadd.f32 %v2338, 1.0
        %v2357 = vadd.f32 %v2340, 1.0
        %v2358 = vadd.f32 %v2342, 1.0
        %v2359 = vrcp.pop %v2343
        %v2360 = vmul.f32 %v2343, %v2359
        %v2361 = vsub.f32 1.0, %v2360
        %v2362 = vmul.f32 %v2359, %v2361
        %v2363 = vadd.f32 %v2359, %v2362
        %vm2364 = vweird.f32 %v2343
        %vm2365 = vweird.f32 %v2359
        %vm2366 = vmor %vm2364, %vm2365
        %v2367 = vsel %vm2366, %v2359, %v2363
        %v2368 = vand.u32 2147483647, %v2343
        %vm2369 = vcmp.eq.f32.partialorder %v2368, 8.507059e+37
        %v2370 = vand.u32 %v2343, 2147483648
        %v2371 = vor.u32 1.1754944e-38, %v2370
        %v2372 = vsel %vm2369, %v2371, %v2367
        %v2373 = vmul.f32 1.0, %v2372
        %v2374 = vrcp.pop %v2344
        %v2375 = vmul.f32 %v2344, %v2374
        %v2376 = vsub.f32 1.0, %v2375
        %v2377 = vmul.f32 %v2374, %v2376
        %v2378 = vadd.f32 %v2374, %v2377
        %vm2379 = vweird.f32 %v2344
        %vm2380 = vweird.f32 %v2374
        %vm2381 = vmor %vm2379, %vm2380
        %v2382 = vsel %vm2381, %v2374, %v2378
        %v2383 = vand.u32 2147483647, %v2344
        %vm2384 = vcmp.eq.f32.partialorder %v2383, 8.507059e+37
        %v2385 = vand.u32 %v2344, 2147483648
        %v2386 = vor.u32 1.1754944e-38, %v2385
        %v2387 = vsel %vm2384, %v2386, %v2382
        %v2388 = vmul.f32 1.0, %v2387
        %v2389 = vrcp.pop %v2345
        %v2390 = vmul.f32 %v2345, %v2389
        %v2391 = vsub.f32 1.0, %v2390
        %v2392 = vmul.f32 %v2389, %v2391
        %v2393 = vadd.f32 %v2389, %v2392
        %vm2394 = vweird.f32 %v2345
        %vm2395 = vweird.f32 %v2389
        %vm2396 = vmor %vm2394, %vm2395
        %v2397 = vsel %vm2396, %v2389, %v2393
        %v2398 = vand.u32 2147483647, %v2345
        %vm2399 = vcmp.eq.f32.partialorder %v2398, 8.507059e+37
        %v2400 = vand.u32 %v2345, 2147483648
        %v2401 = vor.u32 1.1754944e-38, %v2400
        %v2402 = vsel %vm2399, %v2401, %v2397
        %v2403 = vmul.f32 1.0, %v2402
        %v2404 = vrcp.pop %v2346
        %v2405 = vmul.f32 %v2346, %v2404
        %v2406 = vsub.f32 1.0, %v2405
        %v2407 = vmul.f32 %v2404, %v2406
        %v2408 = vadd.f32 %v2404, %v2407
        %vm2409 = vweird.f32 %v2346
        %vm2410 = vweird.f32 %v2404
        %vm2411 = vmor %vm2409, %vm2410
        %v2412 = vsel %vm2411, %v2404, %v2408
        %v2413 = vand.u32 2147483647, %v2346
        %vm2414 = vcmp.eq.f32.partialorder %v2413, 8.507059e+37
        %v2415 = vand.u32 %v2346, 2147483648
        %v2416 = vor.u32 1.1754944e-38, %v2415
        %v2417 = vsel %vm2414, %v2416, %v2412
        %v2418 = vmul.f32 1.0, %v2417
        %v2419 = vrcp.pop %v2347
        %v2420 = vmul.f32 %v2347, %v2419
        %v2421 = vsub.f32 1.0, %v2420
        %v2422 = vmul.f32 %v2419, %v2421
        %v2423 = vadd.f32 %v2419, %v2422
        %vm2424 = vweird.f32 %v2347
        %vm2425 = vweird.f32 %v2419
        %vm2426 = vmor %vm2424, %vm2425
        %v2427 = vsel %vm2426, %v2419, %v2423
        %v2428 = vand.u32 2147483647, %v2347
        %vm2429 = vcmp.eq.f32.partialorder %v2428, 8.507059e+37
        %v2430 = vand.u32 %v2347, 2147483648
        %v2431 = vor.u32 1.1754944e-38, %v2430
        %v2432 = vsel %vm2429, %v2431, %v2427
        %v2433 = vmul.f32 1.0, %v2432
        %v2434 = vrcp.pop %v2348
        %v2435 = vmul.f32 %v2348, %v2434
        %v2436 = vsub.f32 1.0, %v2435
        %v2437 = vmul.f32 %v2434, %v2436
        %v2438 = vadd.f32 %v2434, %v2437
        %vm2439 = vweird.f32 %v2348
        %vm2440 = vweird.f32 %v2434
        %vm2441 = vmor %vm2439, %vm2440
        %v2442 = vsel %vm2441, %v2434, %v2438
        %v2443 = vand.u32 2147483647, %v2348
        %vm2444 = vcmp.eq.f32.partialorder %v2443, 8.507059e+37
        %v2445 = vand.u32 %v2348, 2147483648
        %v2446 = vor.u32 1.1754944e-38, %v2445
        %v2447 = vsel %vm2444, %v2446, %v2442
        %v2448 = vmul.f32 1.0, %v2447
        %v2449 = vrcp.pop %v2349
        %v2450 = vmul.f32 %v2349, %v2449
        %v2451 = vsub.f32 1.0, %v2450
        %v2452 = vmul.f32 %v2449, %v2451
        %v2453 = vadd.f32 %v2449, %v2452
        %vm2454 = vweird.f32 %v2349
        %vm2455 = vweird.f32 %v2449
        %vm2456 = vmor %vm2454, %vm2455
        %v2457 = vsel %vm2456, %v2449, %v2453
        %v2458 = vand.u32 2147483647, %v2349
        %vm2459 = vcmp.eq.f32.partialorder %v2458, 8.507059e+37
        %v2460 = vand.u32 %v2349, 2147483648
        %v2461 = vor.u32 1.1754944e-38, %v2460
        %v2462 = vsel %vm2459, %v2461, %v2457
        %v2463 = vmul.f32 1.0, %v2462
        %v2464 = vrcp.pop %v2350
        %v2465 = vmul.f32 %v2350, %v2464
        %v2466 = vsub.f32 1.0, %v2465
        %v2467 = vmul.f32 %v2464, %v2466
        %v2468 = vadd.f32 %v2464, %v2467
        %vm2469 = vweird.f32 %v2350
        %vm2470 = vweird.f32 %v2464
        %vm2471 = vmor %vm2469, %vm2470
        %v2472 = vsel %vm2471, %v2464, %v2468
        %v2473 = vand.u32 2147483647, %v2350
        %vm2474 = vcmp.eq.f32.partialorder %v2473, 8.507059e+37
        %v2475 = vand.u32 %v2350, 2147483648
        %v2476 = vor.u32 1.1754944e-38, %v2475
        %v2477 = vsel %vm2474, %v2476, %v2472
        %v2478 = vmul.f32 1.0, %v2477
        %v2479 = vrcp.pop %v2351
        %v2480 = vmul.f32 %v2351, %v2479
        %v2481 = vsub.f32 1.0, %v2480
        %v2482 = vmul.f32 %v2479, %v2481
        %v2483 = vadd.f32 %v2479, %v2482
        %vm2484 = vweird.f32 %v2351
        %vm2485 = vweird.f32 %v2479
        %vm2486 = vmor %vm2484, %vm2485
        %v2487 = vsel %vm2486, %v2479, %v2483
        %v2488 = vand.u32 2147483647, %v2351
        %vm2489 = vcmp.eq.f32.partialorder %v2488, 8.507059e+37
        %v2490 = vand.u32 %v2351, 2147483648
        %v2491 = vor.u32 1.1754944e-38, %v2490
        %v2492 = vsel %vm2489, %v2491, %v2487
        %v2493 = vmul.f32 1.0, %v2492
        %v2494 = vrcp.pop %v2352
        %v2495 = vmul.f32 %v2352, %v2494
        %v2496 = vsub.f32 1.0, %v2495
        %v2497 = vmul.f32 %v2494, %v2496
        %v2498 = vadd.f32 %v2494, %v2497
        %vm2499 = vweird.f32 %v2352
        %vm2500 = vweird.f32 %v2494
        %vm2501 = vmor %vm2499, %vm2500
        %v2502 = vsel %vm2501, %v2494, %v2498
        %v2503 = vand.u32 2147483647, %v2352
        %vm2504 = vcmp.eq.f32.partialorder %v2503, 8.507059e+37
        %v2505 = vand.u32 %v2352, 2147483648
        %v2506 = vor.u32 1.1754944e-38, %v2505
        %v2507 = vsel %vm2504, %v2506, %v2502
        %v2508 = vmul.f32 1.0, %v2507
        %v2509 = vrcp.pop %v2353
        %v2510 = vmul.f32 %v2353, %v2509
        %v2511 = vsub.f32 1.0, %v2510
        %v2512 = vmul.f32 %v2509, %v2511
        %v2513 = vadd.f32 %v2509, %v2512
        %vm2514 = vweird.f32 %v2353
        %vm2515 = vweird.f32 %v2509
        %vm2516 = vmor %vm2514, %vm2515
        %v2517 = vsel %vm2516, %v2509, %v2513
        %v2518 = vand.u32 2147483647, %v2353
        %vm2519 = vcmp.eq.f32.partialorder %v2518, 8.507059e+37
        %v2520 = vand.u32 %v2353, 2147483648
        %v2521 = vor.u32 1.1754944e-38, %v2520
        %v2522 = vsel %vm2519, %v2521, %v2517
        %v2523 = vmul.f32 1.0, %v2522
        %v2524 = vrcp.pop %v2354
        %v2525 = vmul.f32 %v2354, %v2524
        %v2526 = vsub.f32 1.0, %v2525
        %v2527 = vmul.f32 %v2524, %v2526
        %v2528 = vadd.f32 %v2524, %v2527
        %vm2529 = vweird.f32 %v2354
        %vm2530 = vweird.f32 %v2524
        %vm2531 = vmor %vm2529, %vm2530
        %v2532 = vsel %vm2531, %v2524, %v2528
        %v2533 = vand.u32 2147483647, %v2354
        %vm2534 = vcmp.eq.f32.partialorder %v2533, 8.507059e+37
        %v2535 = vand.u32 %v2354, 2147483648
        %v2536 = vor.u32 1.1754944e-38, %v2535
        %v2537 = vsel %vm2534, %v2536, %v2532
        %v2538 = vmul.f32 1.0, %v2537
        %v2539 = vrcp.pop %v2355
        %v2540 = vmul.f32 %v2355, %v2539
        %v2541 = vsub.f32 1.0, %v2540
        %v2542 = vmul.f32 %v2539, %v2541
        %v2543 = vadd.f32 %v2539, %v2542
        %vm2544 = vweird.f32 %v2355
        %vm2545 = vweird.f32 %v2539
        %vm2546 = vmor %vm2544, %vm2545
        %v2547 = vsel %vm2546, %v2539, %v2543
        %v2548 = vand.u32 2147483647, %v2355
        %vm2549 = vcmp.eq.f32.partialorder %v2548, 8.507059e+37
        %v2550 = vand.u32 %v2355, 2147483648
        %v2551 = vor.u32 1.1754944e-38, %v2550
        %v2552 = vsel %vm2549, %v2551, %v2547
        %v2553 = vmul.f32 1.0, %v2552
        %v2554 = vrcp.pop %v2356
        %v2555 = vmul.f32 %v2356, %v2554
        %v2556 = vsub.f32 1.0, %v2555
        %v2557 = vmul.f32 %v2554, %v2556
        %v2558 = vadd.f32 %v2554, %v2557
        %vm2559 = vweird.f32 %v2356
        %vm2560 = vweird.f32 %v2554
        %vm2561 = vmor %vm2559, %vm2560
        %v2562 = vsel %vm2561, %v2554, %v2558
        %v2563 = vand.u32 2147483647, %v2356
        %vm2564 = vcmp.eq.f32.partialorder %v2563, 8.507059e+37
        %v2565 = vand.u32 %v2356, 2147483648
        %v2566 = vor.u32 1.1754944e-38, %v2565
        %v2567 = vsel %vm2564, %v2566, %v2562
        %v2568 = vmul.f32 1.0, %v2567
        %v2569 = vrcp.pop %v2357
        %v2570 = vmul.f32 %v2357, %v2569
        %v2571 = vsub.f32 1.0, %v2570
        %v2572 = vmul.f32 %v2569, %v2571
        %v2573 = vadd.f32 %v2569, %v2572
        %vm2574 = vweird.f32 %v2357
        %vm2575 = vweird.f32 %v2569
        %vm2576 = vmor %vm2574, %vm2575
        %v2577 = vsel %vm2576, %v2569, %v2573
        %v2578 = vand.u32 2147483647, %v2357
        %vm2579 = vcmp.eq.f32.partialorder %v2578, 8.507059e+37
        %v2580 = vand.u32 %v2357, 2147483648
        %v2581 = vor.u32 1.1754944e-38, %v2580
        %v2582 = vsel %vm2579, %v2581, %v2577
        %v2583 = vmul.f32 1.0, %v2582
        %v2584 = vrcp.pop %v2358
        %v2585 = vmul.f32 %v2358, %v2584
        %v2586 = vsub.f32 1.0, %v2585
        %v2587 = vmul.f32 %v2584, %v2586
        %v2588 = vadd.f32 %v2584, %v2587
        %vm2589 = vweird.f32 %v2358
        %vm2590 = vweird.f32 %v2584
        %vm2591 = vmor %vm2589, %vm2590
        %v2592 = vsel %vm2591, %v2584, %v2588
        %v2593 = vand.u32 2147483647, %v2358
        %vm2594 = vcmp.eq.f32.partialorder %v2593, 8.507059e+37
        %v2595 = vand.u32 %v2358, 2147483648
        %v2596 = vor.u32 1.1754944e-38, %v2595
        %v2597 = vsel %vm2594, %v2596, %v2592
        %v2598 = vmul.f32 1.0, %v2597
        %v2599 = vtanh.pop %v2280
        %v2600 = vtanh.pop %v2282
        %v2601 = vtanh.pop %v2284
        %v2602 = vtanh.pop %v2286
        %v2603 = vtanh.pop %v2288
        %v2604 = vtanh.pop %v2290
        %v2605 = vtanh.pop %v2292
        %v2606 = vtanh.pop %v2294
        %v2615 = vrot.slane %v2134, 7
        %v2616 = vrot.slane %v2135, 7
        %v2617 = vrot.slane %v2136, 7
        %v2618 = vrot.slane %v2137, 7
        %v2619 = vrot.slane %v2138, 7
        %v2620 = vrot.slane %v2139, 7
        %v2621 = vrot.slane %v2140, 7
        %v2622 = vrot.slane %v2141, 7
        %v2631 = vmul.f32 %v2373, %v2615
        %v2632 = vmul.f32 %v2403, %v2616
        %v2633 = vmul.f32 %v2433, %v2617
        %v2634 = vmul.f32 %v2463, %v2618
        %v2635 = vmul.f32 %v2493, %v2619
        %v2636 = vmul.f32 %v2523, %v2620
        %v2637 = vmul.f32 %v2553, %v2621
        %v2638 = vmul.f32 %v2583, %v2622
        %v2639 = vmul.f32 %v2373, %v2599
        %v2640 = vmul.f32 %v2403, %v2600
        %v2641 = vmul.f32 %v2433, %v2601
        %v2642 = vmul.f32 %v2463, %v2602
        %v2643 = vmul.f32 %v2493, %v2603
        %v2644 = vmul.f32 %v2523, %v2604
        %v2645 = vmul.f32 %v2553, %v2605
        %v2646 = vmul.f32 %v2583, %v2606
        %2655 = vrot.lane.b32.xlu0 %v2639, 64
        %v2656 = vpop.permute.xlu0 %2655
        %2657 = vrot.lane.b32.xlu0 %v2640, 64
        %v2658 = vpop.permute.xlu0 %2657
        %2659 = vrot.lane.b32.xlu0 %v2641, 64
        %v2660 = vpop.permute.xlu0 %2659
        %2661 = vrot.lane.b32.xlu0 %v2642, 64
        %v2662 = vpop.permute.xlu0 %2661
        %2663 = vrot.lane.b32.xlu0 %v2643, 64
        %v2664 = vpop.permute.xlu0 %2663
        %2665 = vrot.lane.b32.xlu0 %v2644, 64
        %v2666 = vpop.permute.xlu0 %2665
        %2667 = vrot.lane.b32.xlu0 %v2645, 64
        %v2668 = vpop.permute.xlu0 %2667
        %2669 = vrot.lane.b32.xlu0 %v2646, 64
        %v2670 = vpop.permute.xlu0 %2669
        %v2679 = vadd.f32 %v2631, %v2656
        %v2680 = vadd.f32 %v2632, %v2658
        %v2681 = vadd.f32 %v2633, %v2660
        %v2682 = vadd.f32 %v2634, %v2662
        %v2683 = vadd.f32 %v2635, %v2664
        %v2684 = vadd.f32 %v2636, %v2666
        %v2685 = vadd.f32 %v2637, %v2668
        %v2686 = vadd.f32 %v2638, %v2670
        %v2687 = vtanh.pop %v2679
        %v2688 = vtanh.pop %v2680
        %v2689 = vtanh.pop %v2681
        %v2690 = vtanh.pop %v2682
        %v2691 = vtanh.pop %v2683
        %v2692 = vtanh.pop %v2684
        %v2693 = vtanh.pop %v2685
        %v2694 = vtanh.pop %v2686
        %v2695 = vmul.f32 %v2388, %v2687
        %v2696 = vmul.f32 %v2418, %v2688
        %v2697 = vmul.f32 %v2448, %v2689
        %v2698 = vmul.f32 %v2478, %v2690
        %v2699 = vmul.f32 %v2508, %v2691
        %v2700 = vmul.f32 %v2538, %v2692
        %v2701 = vmul.f32 %v2568, %v2693
        %v2702 = vmul.f32 %v2598, %v2694
        %v2711 = vrot.slane %v2696, 7
        %v2712 = vsel %vm1100, %v2711, %v2695
        %v2713 = vrot.slane %v2697, 6
        %v2714 = vsel %vm1103, %v2713, %v2712
        %v2715 = vrot.slane %v2698, 5
        %v2716 = vsel %vm1106, %v2715, %v2714
        %v2717 = vrot.slane %v2699, 4
        %v2718 = vsel %vm1109, %v2717, %v2716
        %v2719 = vrot.slane %v2700, 3
        %v2720 = vrot.slane %v2701, 2
        %v2721 = vsel %vm1091, %v2720, %v2719
        %v2722 = vrot.slane %v2702, 1
        %v2723 = vsel %vm1094, %v2722, %v2721
        %2724 = vrot.lane.b32.xlu0 %v2718, 64
        %v2725 = vpop.permute.xlu0 %2724
        %2726 = vrot.lane.b32.xlu0 %v2723, 64
        %v2727 = vpop.permute.xlu0 %2726
        %vm2730 = vcmask 523267
        %2731 = vst.msk [vmem:[#allocation6 + $0x15] sm:$0xf8] %vm2730, %v2725
        %vm2732 = vcmask 518144
        %2733 = vst.msk [vmem:[#allocation6 + $0x1d] sm:$0x7] %vm2732, %v2727
        %v2734 = vrot.slane %v2695, 3
        %v2735 = vrot.slane %v2696, 2
        %v2736 = vsel %vm1091, %v2735, %v2734
        %v2737 = vrot.slane %v2697, 1
        %v2738 = vsel %vm1094, %v2737, %v2736
        %v2739 = vsel %vm1097, %v2698, %v2738
        %v2740 = vrot.slane %v2699, 7
        %v2741 = vsel %vm1100, %v2740, %v2739
        %v2742 = vrot.slane %v2700, 6
        %v2743 = vsel %vm1103, %v2742, %v2741
        %v2744 = vrot.slane %v2701, 5
        %v2745 = vsel %vm1106, %v2744, %v2743
        %v2746 = vrot.slane %v2702, 4
        %v2747 = vsel %vm1109, %v2746, %v2745
        %2748 = vrot.lane.b32.xlu0 %v2747, 64
        %v2749 = vpop.permute.xlu0 %2748
        %v2750 = vsel %vm574, %v2749, 0
        %2752 = vmatpush.msra.mxu0 0.0
        %2753 = vmatpush.msra.mxu0 0.0
        %2754 = vmatpush.msra.mxu0 0.0
        %2755 = vmatpush.msra.mxu0 0.0
        %2756 = vmatpush.msra.mxu0 0.0
        %2757 = vmatpush.msra.mxu0 0.0
        %2758 = vmatpush.msra.mxu0 0.0
        %2759 = vmatpush.msra.mxu0 0.0
        %2760 = vmatpush.msra.mxu0 %v570
        %2761 = vmatpush.msra.mxu0 %v568
        %2762 = vmatpush.msra.mxu0 %v566
        %2763 = vmatpush.msra.mxu0 %v564
        %2764 = vmatpush.msra.mxu0 %v562
        %2765 = vmatpush.msra.mxu0 %v560
        %2766 = vmatpush.msra.mxu0 %v558
        %2767 = vmatpush.msra.mxu0 %v556
        %2768 = vmatmul.f32.gmra.mxu0 %v2750
        %v2769 = vpop.f32.mrf.mxu0
        %v2770 = vadd.f32 0.0, %v2769
        %2771 = vdwg.mxu0
        %2772 = vmatpush.msra.mxu0 0.0
        %2773 = vmatpush.msra.mxu0 0.0
        %2774 = vmatpush.msra.mxu0 0.0
        %2775 = vmatpush.msra.mxu0 0.0
        %2776 = vmatpush.msra.mxu0 0.0
        %2777 = vmatpush.msra.mxu0 0.0
        %2778 = vmatpush.msra.mxu0 0.0
        %2779 = vmatpush.msra.mxu0 0.0
        %2780 = vmatpush.msra.mxu0 %v571
        %2781 = vmatpush.msra.mxu0 %v569
        %2782 = vmatpush.msra.mxu0 %v567
        %2783 = vmatpush.msra.mxu0 %v565
        %2784 = vmatpush.msra.mxu0 %v563
        %2785 = vmatpush.msra.mxu0 %v561
        %2786 = vmatpush.msra.mxu0 %v559
        %2787 = vmatpush.msra.mxu0 %v557
        %2788 = vmatmul.f32.gmra.mxu0 %v2750
        %v2789 = vpop.f32.mrf.mxu0
        %v2790 = vadd.f32 0.0, %v2789
        %2791 = vdwg.mxu0
        %v2794 = vrot.slane %v2770, 4
        %v2795 = vrot.slane %v2790, 4
        %v2796 = vrot.slane %v2770, 5
        %v2797 = vrot.slane %v2790, 5
        %v2798 = vrot.slane %v2770, 6
        %v2799 = vrot.slane %v2790, 6
        %v2800 = vrot.slane %v2770, 7
        %v2801 = vrot.slane %v2790, 7
        %v2802 = vrot.slane %v2770, 1
        %v2803 = vrot.slane %v2790, 1
        %v2804 = vrot.slane %v2770, 2
        %v2805 = vrot.slane %v2790, 2
        %v2806 = vrot.slane %v2770, 3
        %v2807 = vrot.slane %v2790, 3
        %v2824 = vadd.f32 %v492, %v2794
        %v2825 = vadd.f32 %v533, %v2795
        %v2826 = vadd.f32 %v495, %v2796
        %v2827 = vadd.f32 %v536, %v2797
        %v2828 = vadd.f32 %v498, %v2798
        %v2829 = vadd.f32 %v539, %v2799
        %v2830 = vadd.f32 %v501, %v2800
        %v2831 = vadd.f32 %v542, %v2801
        %v2832 = vadd.f32 %v504, %v2770
        %v2833 = vadd.f32 %v545, %v2790
        %v2834 = vadd.f32 %v507, %v2802
        %v2835 = vadd.f32 %v548, %v2803
        %v2836 = vadd.f32 %v510, %v2804
        %v2837 = vadd.f32 %v551, %v2805
        %v2838 = vadd.f32 %v513, %v2806
        %v2839 = vadd.f32 %v554, %v2807
        %v2840 = vxor.u32 %v2824, 2147483648
        %v2841 = vxor.u32 %v2825, 2147483648
        %v2842 = vxor.u32 %v2826, 2147483648
        %v2843 = vxor.u32 %v2827, 2147483648
        %v2844 = vxor.u32 %v2828, 2147483648
        %v2845 = vxor.u32 %v2829, 2147483648
        %v2846 = vxor.u32 %v2830, 2147483648
        %v2847 = vxor.u32 %v2831, 2147483648
        %v2848 = vxor.u32 %v2832, 2147483648
        %v2849 = vxor.u32 %v2833, 2147483648
        %v2850 = vxor.u32 %v2834, 2147483648
        %v2851 = vxor.u32 %v2835, 2147483648
        %v2852 = vxor.u32 %v2836, 2147483648
        %v2853 = vxor.u32 %v2837, 2147483648
        %v2854 = vxor.u32 %v2838, 2147483648
        %v2855 = vxor.u32 %v2839, 2147483648
        %v2856 = vmul.f32 %v2840, 1.442695
        %v2857 = vpow.pop %v2856
        %v2858 = vmul.f32 %v2841, 1.442695
        %v2859 = vpow.pop %v2858
        %v2860 = vmul.f32 %v2842, 1.442695
        %v2861 = vpow.pop %v2860
        %v2862 = vmul.f32 %v2843, 1.442695
        %v2863 = vpow.pop %v2862
        %v2864 = vmul.f32 %v2844, 1.442695
        %v2865 = vpow.pop %v2864
        %v2866 = vmul.f32 %v2845, 1.442695
        %v2867 = vpow.pop %v2866
        %v2868 = vmul.f32 %v2846, 1.442695
        %v2869 = vpow.pop %v2868
        %v2870 = vmul.f32 %v2847, 1.442695
        %v2871 = vpow.pop %v2870
        %v2872 = vmul.f32 %v2848, 1.442695
        %v2873 = vpow.pop %v2872
        %v2874 = vmul.f32 %v2849, 1.442695
        %v2875 = vpow.pop %v2874
        %v2876 = vmul.f32 %v2850, 1.442695
        %v2877 = vpow.pop %v2876
        %v2878 = vmul.f32 %v2851, 1.442695
        %v2879 = vpow.pop %v2878
        %v2880 = vmul.f32 %v2852, 1.442695
        %v2881 = vpow.pop %v2880
        %v2882 = vmul.f32 %v2853, 1.442695
        %v2883 = vpow.pop %v2882
        %v2884 = vmul.f32 %v2854, 1.442695
        %v2885 = vpow.pop %v2884
        %v2886 = vmul.f32 %v2855, 1.442695
        %v2887 = vpow.pop %v2886
        %v2888 = vadd.f32 %v2857, 1.0
        %v2889 = vadd.f32 %v2859, 1.0
        %v2890 = vadd.f32 %v2861, 1.0
        %v2891 = vadd.f32 %v2863, 1.0
        %v2892 = vadd.f32 %v2865, 1.0
        %v2893 = vadd.f32 %v2867, 1.0
        %v2894 = vadd.f32 %v2869, 1.0
        %v2895 = vadd.f32 %v2871, 1.0
        %v2896 = vadd.f32 %v2873, 1.0
        %v2897 = vadd.f32 %v2875, 1.0
        %v2898 = vadd.f32 %v2877, 1.0
        %v2899 = vadd.f32 %v2879, 1.0
        %v2900 = vadd.f32 %v2881, 1.0
        %v2901 = vadd.f32 %v2883, 1.0
        %v2902 = vadd.f32 %v2885, 1.0
        %v2903 = vadd.f32 %v2887, 1.0
        %v2904 = vrcp.pop %v2888
        %v2905 = vmul.f32 %v2888, %v2904
        %v2906 = vsub.f32 1.0, %v2905
        %v2907 = vmul.f32 %v2904, %v2906
        %v2908 = vadd.f32 %v2904, %v2907
        %vm2909 = vweird.f32 %v2888
        %vm2910 = vweird.f32 %v2904
        %vm2911 = vmor %vm2909, %vm2910
        %v2912 = vsel %vm2911, %v2904, %v2908
        %v2913 = vand.u32 2147483647, %v2888
        %vm2914 = vcmp.eq.f32.partialorder %v2913, 8.507059e+37
        %v2915 = vand.u32 %v2888, 2147483648
        %v2916 = vor.u32 1.1754944e-38, %v2915
        %v2917 = vsel %vm2914, %v2916, %v2912
        %v2918 = vmul.f32 1.0, %v2917
        %v2919 = vrcp.pop %v2889
        %v2920 = vmul.f32 %v2889, %v2919
        %v2921 = vsub.f32 1.0, %v2920
        %v2922 = vmul.f32 %v2919, %v2921
        %v2923 = vadd.f32 %v2919, %v2922
        %vm2924 = vweird.f32 %v2889
        %vm2925 = vweird.f32 %v2919
        %vm2926 = vmor %vm2924, %vm2925
        %v2927 = vsel %vm2926, %v2919, %v2923
        %v2928 = vand.u32 2147483647, %v2889
        %vm2929 = vcmp.eq.f32.partialorder %v2928, 8.507059e+37
        %v2930 = vand.u32 %v2889, 2147483648
        %v2931 = vor.u32 1.1754944e-38, %v2930
        %v2932 = vsel %vm2929, %v2931, %v2927
        %v2933 = vmul.f32 1.0, %v2932
        %v2934 = vrcp.pop %v2890
        %v2935 = vmul.f32 %v2890, %v2934
        %v2936 = vsub.f32 1.0, %v2935
        %v2937 = vmul.f32 %v2934, %v2936
        %v2938 = vadd.f32 %v2934, %v2937
        %vm2939 = vweird.f32 %v2890
        %vm2940 = vweird.f32 %v2934
        %vm2941 = vmor %vm2939, %vm2940
        %v2942 = vsel %vm2941, %v2934, %v2938
        %v2943 = vand.u32 2147483647, %v2890
        %vm2944 = vcmp.eq.f32.partialorder %v2943, 8.507059e+37
        %v2945 = vand.u32 %v2890, 2147483648
        %v2946 = vor.u32 1.1754944e-38, %v2945
        %v2947 = vsel %vm2944, %v2946, %v2942
        %v2948 = vmul.f32 1.0, %v2947
        %v2949 = vrcp.pop %v2891
        %v2950 = vmul.f32 %v2891, %v2949
        %v2951 = vsub.f32 1.0, %v2950
        %v2952 = vmul.f32 %v2949, %v2951
        %v2953 = vadd.f32 %v2949, %v2952
        %vm2954 = vweird.f32 %v2891
        %vm2955 = vweird.f32 %v2949
        %vm2956 = vmor %vm2954, %vm2955
        %v2957 = vsel %vm2956, %v2949, %v2953
        %v2958 = vand.u32 2147483647, %v2891
        %vm2959 = vcmp.eq.f32.partialorder %v2958, 8.507059e+37
        %v2960 = vand.u32 %v2891, 2147483648
        %v2961 = vor.u32 1.1754944e-38, %v2960
        %v2962 = vsel %vm2959, %v2961, %v2957
        %v2963 = vmul.f32 1.0, %v2962
        %v2964 = vrcp.pop %v2892
        %v2965 = vmul.f32 %v2892, %v2964
        %v2966 = vsub.f32 1.0, %v2965
        %v2967 = vmul.f32 %v2964, %v2966
        %v2968 = vadd.f32 %v2964, %v2967
        %vm2969 = vweird.f32 %v2892
        %vm2970 = vweird.f32 %v2964
        %vm2971 = vmor %vm2969, %vm2970
        %v2972 = vsel %vm2971, %v2964, %v2968
        %v2973 = vand.u32 2147483647, %v2892
        %vm2974 = vcmp.eq.f32.partialorder %v2973, 8.507059e+37
        %v2975 = vand.u32 %v2892, 2147483648
        %v2976 = vor.u32 1.1754944e-38, %v2975
        %v2977 = vsel %vm2974, %v2976, %v2972
        %v2978 = vmul.f32 1.0, %v2977
        %v2979 = vrcp.pop %v2893
        %v2980 = vmul.f32 %v2893, %v2979
        %v2981 = vsub.f32 1.0, %v2980
        %v2982 = vmul.f32 %v2979, %v2981
        %v2983 = vadd.f32 %v2979, %v2982
        %vm2984 = vweird.f32 %v2893
        %vm2985 = vweird.f32 %v2979
        %vm2986 = vmor %vm2984, %vm2985
        %v2987 = vsel %vm2986, %v2979, %v2983
        %v2988 = vand.u32 2147483647, %v2893
        %vm2989 = vcmp.eq.f32.partialorder %v2988, 8.507059e+37
        %v2990 = vand.u32 %v2893, 2147483648
        %v2991 = vor.u32 1.1754944e-38, %v2990
        %v2992 = vsel %vm2989, %v2991, %v2987
        %v2993 = vmul.f32 1.0, %v2992
        %v2994 = vrcp.pop %v2894
        %v2995 = vmul.f32 %v2894, %v2994
        %v2996 = vsub.f32 1.0, %v2995
        %v2997 = vmul.f32 %v2994, %v2996
        %v2998 = vadd.f32 %v2994, %v2997
        %vm2999 = vweird.f32 %v2894
        %vm3000 = vweird.f32 %v2994
        %vm3001 = vmor %vm2999, %vm3000
        %v3002 = vsel %vm3001, %v2994, %v2998
        %v3003 = vand.u32 2147483647, %v2894
        %vm3004 = vcmp.eq.f32.partialorder %v3003, 8.507059e+37
        %v3005 = vand.u32 %v2894, 2147483648
        %v3006 = vor.u32 1.1754944e-38, %v3005
        %v3007 = vsel %vm3004, %v3006, %v3002
        %v3008 = vmul.f32 1.0, %v3007
        %v3009 = vrcp.pop %v2895
        %v3010 = vmul.f32 %v2895, %v3009
        %v3011 = vsub.f32 1.0, %v3010
        %v3012 = vmul.f32 %v3009, %v3011
        %v3013 = vadd.f32 %v3009, %v3012
        %vm3014 = vweird.f32 %v2895
        %vm3015 = vweird.f32 %v3009
        %vm3016 = vmor %vm3014, %vm3015
        %v3017 = vsel %vm3016, %v3009, %v3013
        %v3018 = vand.u32 2147483647, %v2895
        %vm3019 = vcmp.eq.f32.partialorder %v3018, 8.507059e+37
        %v3020 = vand.u32 %v2895, 2147483648
        %v3021 = vor.u32 1.1754944e-38, %v3020
        %v3022 = vsel %vm3019, %v3021, %v3017
        %v3023 = vmul.f32 1.0, %v3022
        %v3024 = vrcp.pop %v2896
        %v3025 = vmul.f32 %v2896, %v3024
        %v3026 = vsub.f32 1.0, %v3025
        %v3027 = vmul.f32 %v3024, %v3026
        %v3028 = vadd.f32 %v3024, %v3027
        %vm3029 = vweird.f32 %v2896
        %vm3030 = vweird.f32 %v3024
        %vm3031 = vmor %vm3029, %vm3030
        %v3032 = vsel %vm3031, %v3024, %v3028
        %v3033 = vand.u32 2147483647, %v2896
        %vm3034 = vcmp.eq.f32.partialorder %v3033, 8.507059e+37
        %v3035 = vand.u32 %v2896, 2147483648
        %v3036 = vor.u32 1.1754944e-38, %v3035
        %v3037 = vsel %vm3034, %v3036, %v3032
        %v3038 = vmul.f32 1.0, %v3037
        %v3039 = vrcp.pop %v2897
        %v3040 = vmul.f32 %v2897, %v3039
        %v3041 = vsub.f32 1.0, %v3040
        %v3042 = vmul.f32 %v3039, %v3041
        %v3043 = vadd.f32 %v3039, %v3042
        %vm3044 = vweird.f32 %v2897
        %vm3045 = vweird.f32 %v3039
        %vm3046 = vmor %vm3044, %vm3045
        %v3047 = vsel %vm3046, %v3039, %v3043
        %v3048 = vand.u32 2147483647, %v2897
        %vm3049 = vcmp.eq.f32.partialorder %v3048, 8.507059e+37
        %v3050 = vand.u32 %v2897, 2147483648
        %v3051 = vor.u32 1.1754944e-38, %v3050
        %v3052 = vsel %vm3049, %v3051, %v3047
        %v3053 = vmul.f32 1.0, %v3052
        %v3054 = vrcp.pop %v2898
        %v3055 = vmul.f32 %v2898, %v3054
        %v3056 = vsub.f32 1.0, %v3055
        %v3057 = vmul.f32 %v3054, %v3056
        %v3058 = vadd.f32 %v3054, %v3057
        %vm3059 = vweird.f32 %v2898
        %vm3060 = vweird.f32 %v3054
        %vm3061 = vmor %vm3059, %vm3060
        %v3062 = vsel %vm3061, %v3054, %v3058
        %v3063 = vand.u32 2147483647, %v2898
        %vm3064 = vcmp.eq.f32.partialorder %v3063, 8.507059e+37
        %v3065 = vand.u32 %v2898, 2147483648
        %v3066 = vor.u32 1.1754944e-38, %v3065
        %v3067 = vsel %vm3064, %v3066, %v3062
        %v3068 = vmul.f32 1.0, %v3067
        %v3069 = vrcp.pop %v2899
        %v3070 = vmul.f32 %v2899, %v3069
        %v3071 = vsub.f32 1.0, %v3070
        %v3072 = vmul.f32 %v3069, %v3071
        %v3073 = vadd.f32 %v3069, %v3072
        %vm3074 = vweird.f32 %v2899
        %vm3075 = vweird.f32 %v3069
        %vm3076 = vmor %vm3074, %vm3075
        %v3077 = vsel %vm3076, %v3069, %v3073
        %v3078 = vand.u32 2147483647, %v2899
        %vm3079 = vcmp.eq.f32.partialorder %v3078, 8.507059e+37
        %v3080 = vand.u32 %v2899, 2147483648
        %v3081 = vor.u32 1.1754944e-38, %v3080
        %v3082 = vsel %vm3079, %v3081, %v3077
        %v3083 = vmul.f32 1.0, %v3082
        %v3084 = vrcp.pop %v2900
        %v3085 = vmul.f32 %v2900, %v3084
        %v3086 = vsub.f32 1.0, %v3085
        %v3087 = vmul.f32 %v3084, %v3086
        %v3088 = vadd.f32 %v3084, %v3087
        %vm3089 = vweird.f32 %v2900
        %vm3090 = vweird.f32 %v3084
        %vm3091 = vmor %vm3089, %vm3090
        %v3092 = vsel %vm3091, %v3084, %v3088
        %v3093 = vand.u32 2147483647, %v2900
        %vm3094 = vcmp.eq.f32.partialorder %v3093, 8.507059e+37
        %v3095 = vand.u32 %v2900, 2147483648
        %v3096 = vor.u32 1.1754944e-38, %v3095
        %v3097 = vsel %vm3094, %v3096, %v3092
        %v3098 = vmul.f32 1.0, %v3097
        %v3099 = vrcp.pop %v2901
        %v3100 = vmul.f32 %v2901, %v3099
        %v3101 = vsub.f32 1.0, %v3100
        %v3102 = vmul.f32 %v3099, %v3101
        %v3103 = vadd.f32 %v3099, %v3102
        %vm3104 = vweird.f32 %v2901
        %vm3105 = vweird.f32 %v3099
        %vm3106 = vmor %vm3104, %vm3105
        %v3107 = vsel %vm3106, %v3099, %v3103
        %v3108 = vand.u32 2147483647, %v2901
        %vm3109 = vcmp.eq.f32.partialorder %v3108, 8.507059e+37
        %v3110 = vand.u32 %v2901, 2147483648
        %v3111 = vor.u32 1.1754944e-38, %v3110
        %v3112 = vsel %vm3109, %v3111, %v3107
        %v3113 = vmul.f32 1.0, %v3112
        %v3114 = vrcp.pop %v2902
        %v3115 = vmul.f32 %v2902, %v3114
        %v3116 = vsub.f32 1.0, %v3115
        %v3117 = vmul.f32 %v3114, %v3116
        %v3118 = vadd.f32 %v3114, %v3117
        %vm3119 = vweird.f32 %v2902
        %vm3120 = vweird.f32 %v3114
        %vm3121 = vmor %vm3119, %vm3120
        %v3122 = vsel %vm3121, %v3114, %v3118
        %v3123 = vand.u32 2147483647, %v2902
        %vm3124 = vcmp.eq.f32.partialorder %v3123, 8.507059e+37
        %v3125 = vand.u32 %v2902, 2147483648
        %v3126 = vor.u32 1.1754944e-38, %v3125
        %v3127 = vsel %vm3124, %v3126, %v3122
        %v3128 = vmul.f32 1.0, %v3127
        %v3129 = vrcp.pop %v2903
        %v3130 = vmul.f32 %v2903, %v3129
        %v3131 = vsub.f32 1.0, %v3130
        %v3132 = vmul.f32 %v3129, %v3131
        %v3133 = vadd.f32 %v3129, %v3132
        %vm3134 = vweird.f32 %v2903
        %vm3135 = vweird.f32 %v3129
        %vm3136 = vmor %vm3134, %vm3135
        %v3137 = vsel %vm3136, %v3129, %v3133
        %v3138 = vand.u32 2147483647, %v2903
        %vm3139 = vcmp.eq.f32.partialorder %v3138, 8.507059e+37
        %v3140 = vand.u32 %v2903, 2147483648
        %v3141 = vor.u32 1.1754944e-38, %v3140
        %v3142 = vsel %vm3139, %v3141, %v3137
        %v3143 = vmul.f32 1.0, %v3142
        %v3144 = vtanh.pop %v2825
        %v3145 = vtanh.pop %v2827
        %v3146 = vtanh.pop %v2829
        %v3147 = vtanh.pop %v2831
        %v3148 = vtanh.pop %v2833
        %v3149 = vtanh.pop %v2835
        %v3150 = vtanh.pop %v2837
        %v3151 = vtanh.pop %v2839
        %v3160 = vrot.slane %v2679, 7
        %v3161 = vrot.slane %v2680, 7
        %v3162 = vrot.slane %v2681, 7
        %v3163 = vrot.slane %v2682, 7
        %v3164 = vrot.slane %v2683, 7
        %v3165 = vrot.slane %v2684, 7
        %v3166 = vrot.slane %v2685, 7
        %v3167 = vrot.slane %v2686, 7
        %v3176 = vmul.f32 %v2918, %v3160
        %v3177 = vmul.f32 %v2948, %v3161
        %v3178 = vmul.f32 %v2978, %v3162
        %v3179 = vmul.f32 %v3008, %v3163
        %v3180 = vmul.f32 %v3038, %v3164
        %v3181 = vmul.f32 %v3068, %v3165
        %v3182 = vmul.f32 %v3098, %v3166
        %v3183 = vmul.f32 %v3128, %v3167
        %v3184 = vmul.f32 %v2918, %v3144
        %v3185 = vmul.f32 %v2948, %v3145
        %v3186 = vmul.f32 %v2978, %v3146
        %v3187 = vmul.f32 %v3008, %v3147
        %v3188 = vmul.f32 %v3038, %v3148
        %v3189 = vmul.f32 %v3068, %v3149
        %v3190 = vmul.f32 %v3098, %v3150
        %v3191 = vmul.f32 %v3128, %v3151
        %3200 = vrot.lane.b32.xlu0 %v3184, 64
        %v3201 = vpop.permute.xlu0 %3200
        %3202 = vrot.lane.b32.xlu0 %v3185, 64
        %v3203 = vpop.permute.xlu0 %3202
        %3204 = vrot.lane.b32.xlu0 %v3186, 64
        %v3205 = vpop.permute.xlu0 %3204
        %3206 = vrot.lane.b32.xlu0 %v3187, 64
        %v3207 = vpop.permute.xlu0 %3206
        %3208 = vrot.lane.b32.xlu0 %v3188, 64
        %v3209 = vpop.permute.xlu0 %3208
        %3210 = vrot.lane.b32.xlu0 %v3189, 64
        %v3211 = vpop.permute.xlu0 %3210
        %3212 = vrot.lane.b32.xlu0 %v3190, 64
        %v3213 = vpop.permute.xlu0 %3212
        %3214 = vrot.lane.b32.xlu0 %v3191, 64
        %v3215 = vpop.permute.xlu0 %3214
        %v3224 = vadd.f32 %v3176, %v3201
        %v3225 = vadd.f32 %v3177, %v3203
        %v3226 = vadd.f32 %v3178, %v3205
        %v3227 = vadd.f32 %v3179, %v3207
        %v3228 = vadd.f32 %v3180, %v3209
        %v3229 = vadd.f32 %v3181, %v3211
        %v3230 = vadd.f32 %v3182, %v3213
        %v3231 = vadd.f32 %v3183, %v3215
        %v3232 = vtanh.pop %v3224
        %v3233 = vtanh.pop %v3225
        %v3234 = vtanh.pop %v3226
        %v3235 = vtanh.pop %v3227
        %v3236 = vtanh.pop %v3228
        %v3237 = vtanh.pop %v3229
        %v3238 = vtanh.pop %v3230
        %v3239 = vtanh.pop %v3231
        %v3240 = vmul.f32 %v2933, %v3232
        %v3241 = vmul.f32 %v2963, %v3233
        %v3242 = vmul.f32 %v2993, %v3234
        %v3243 = vmul.f32 %v3023, %v3235
        %v3244 = vmul.f32 %v3053, %v3236
        %v3245 = vmul.f32 %v3083, %v3237
        %v3246 = vmul.f32 %v3113, %v3238
        %v3247 = vmul.f32 %v3143, %v3239
        %v3256 = vrot.slane %v3241, 7
        %v3257 = vsel %vm1103, %v3256, %v3240
        %v3258 = vrot.slane %v3242, 6
        %v3259 = vsel %vm1106, %v3258, %v3257
        %v3260 = vrot.slane %v3243, 5
        %v3261 = vsel %vm1109, %v3260, %v3259
        %v3262 = vrot.slane %v3244, 4
        %v3263 = vrot.slane %v3245, 3
        %v3264 = vsel %vm1091, %v3263, %v3262
        %v3265 = vrot.slane %v3246, 2
        %v3266 = vsel %vm1094, %v3265, %v3264
        %v3267 = vrot.slane %v3247, 1
        %v3268 = vsel %vm1097, %v3267, %v3266
        %3269 = vrot.lane.b32.xlu0 %v3261, 64
        %v3270 = vpop.permute.xlu0 %3269
        %3271 = vrot.lane.b32.xlu0 %v3268, 64
        %v3272 = vpop.permute.xlu0 %3271
        %vm3275 = vcmask 523268
        %3276 = vst.msk [vmem:[#allocation6 + $0x1c] sm:$0xf0] %vm3275, %v3270
        %vm3277 = vcmask 519168
        %3278 = vst.msk [vmem:[#allocation6 + $0x24] sm:$0xf] %vm3277, %v3272
        %v3279 = vrot.slane %v3240, 4
        %v3280 = vrot.slane %v3241, 3
        %v3281 = vsel %vm1091, %v3280, %v3279
        %v3282 = vrot.slane %v3242, 2
        %v3283 = vsel %vm1094, %v3282, %v3281
        %v3284 = vrot.slane %v3243, 1
        %v3285 = vsel %vm1097, %v3284, %v3283
        %v3286 = vsel %vm1100, %v3244, %v3285
        %v3287 = vrot.slane %v3245, 7
        %v3288 = vsel %vm1103, %v3287, %v3286
        %v3289 = vrot.slane %v3246, 6
        %v3290 = vsel %vm1106, %v3289, %v3288
        %v3291 = vrot.slane %v3247, 5
        %v3292 = vsel %vm1109, %v3291, %v3290
        %3293 = vrot.lane.b32.xlu0 %v3292, 64
        %v3294 = vpop.permute.xlu0 %3293
        %v3295 = vsel %vm574, %v3294, 0
        %3297 = vmatpush.msra.mxu0 0.0
        %3298 = vmatpush.msra.mxu0 0.0
        %3299 = vmatpush.msra.mxu0 0.0
        %3300 = vmatpush.msra.mxu0 0.0
        %3301 = vmatpush.msra.mxu0 0.0
        %3302 = vmatpush.msra.mxu0 0.0
        %3303 = vmatpush.msra.mxu0 0.0
        %3304 = vmatpush.msra.mxu0 0.0
        %3305 = vmatpush.msra.mxu0 %v570
        %3306 = vmatpush.msra.mxu0 %v568
        %3307 = vmatpush.msra.mxu0 %v566
        %3308 = vmatpush.msra.mxu0 %v564
        %3309 = vmatpush.msra.mxu0 %v562
        %3310 = vmatpush.msra.mxu0 %v560
        %3311 = vmatpush.msra.mxu0 %v558
        %3312 = vmatpush.msra.mxu0 %v556
        %3313 = vmatmul.f32.gmra.mxu0 %v3295
        %v3314 = vpop.f32.mrf.mxu0
        %v3315 = vadd.f32 0.0, %v3314
        %3316 = vdwg.mxu0
        %3317 = vmatpush.msra.mxu0 0.0
        %3318 = vmatpush.msra.mxu0 0.0
        %3319 = vmatpush.msra.mxu0 0.0
        %3320 = vmatpush.msra.mxu0 0.0
        %3321 = vmatpush.msra.mxu0 0.0
        %3322 = vmatpush.msra.mxu0 0.0
        %3323 = vmatpush.msra.mxu0 0.0
        %3324 = vmatpush.msra.mxu0 0.0
        %3325 = vmatpush.msra.mxu0 %v571
        %3326 = vmatpush.msra.mxu0 %v569
        %3327 = vmatpush.msra.mxu0 %v567
        %3328 = vmatpush.msra.mxu0 %v565
        %3329 = vmatpush.msra.mxu0 %v563
        %3330 = vmatpush.msra.mxu0 %v561
        %3331 = vmatpush.msra.mxu0 %v559
        %3332 = vmatpush.msra.mxu0 %v557
        %3333 = vmatmul.f32.gmra.mxu0 %v3295
        %v3334 = vpop.f32.mrf.mxu0
        %v3335 = vadd.f32 0.0, %v3334
        %3336 = vdwg.mxu0
        %v3339 = vrot.slane %v3315, 3
        %v3340 = vrot.slane %v3335, 3
        %v3341 = vrot.slane %v3315, 4
        %v3342 = vrot.slane %v3335, 4
        %v3343 = vrot.slane %v3315, 5
        %v3344 = vrot.slane %v3335, 5
        %v3345 = vrot.slane %v3315, 6
        %v3346 = vrot.slane %v3335, 6
        %v3347 = vrot.slane %v3315, 7
        %v3348 = vrot.slane %v3335, 7
        %v3349 = vrot.slane %v3315, 1
        %v3350 = vrot.slane %v3335, 1
        %v3351 = vrot.slane %v3315, 2
        %v3352 = vrot.slane %v3335, 2
        %v3369 = vadd.f32 %v492, %v3339
        %v3370 = vadd.f32 %v533, %v3340
        %v3371 = vadd.f32 %v495, %v3341
        %v3372 = vadd.f32 %v536, %v3342
        %v3373 = vadd.f32 %v498, %v3343
        %v3374 = vadd.f32 %v539, %v3344
        %v3375 = vadd.f32 %v501, %v3345
        %v3376 = vadd.f32 %v542, %v3346
        %v3377 = vadd.f32 %v504, %v3347
        %v3378 = vadd.f32 %v545, %v3348
        %v3379 = vadd.f32 %v507, %v3315
        %v3380 = vadd.f32 %v548, %v3335
        %v3381 = vadd.f32 %v510, %v3349
        %v3382 = vadd.f32 %v551, %v3350
        %v3383 = vadd.f32 %v513, %v3351
        %v3384 = vadd.f32 %v554, %v3352
        %v3385 = vxor.u32 %v3369, 2147483648
        %v3386 = vxor.u32 %v3370, 2147483648
        %v3387 = vxor.u32 %v3371, 2147483648
        %v3388 = vxor.u32 %v3372, 2147483648
        %v3389 = vxor.u32 %v3373, 2147483648
        %v3390 = vxor.u32 %v3374, 2147483648
        %v3391 = vxor.u32 %v3375, 2147483648
        %v3392 = vxor.u32 %v3376, 2147483648
        %v3393 = vxor.u32 %v3377, 2147483648
        %v3394 = vxor.u32 %v3378, 2147483648
        %v3395 = vxor.u32 %v3379, 2147483648
        %v3396 = vxor.u32 %v3380, 2147483648
        %v3397 = vxor.u32 %v3381, 2147483648
        %v3398 = vxor.u32 %v3382, 2147483648
        %v3399 = vxor.u32 %v3383, 2147483648
        %v3400 = vxor.u32 %v3384, 2147483648
        %v3401 = vmul.f32 %v3385, 1.442695
        %v3402 = vpow.pop %v3401
        %v3403 = vmul.f32 %v3386, 1.442695
        %v3404 = vpow.pop %v3403
        %v3405 = vmul.f32 %v3387, 1.442695
        %v3406 = vpow.pop %v3405
        %v3407 = vmul.f32 %v3388, 1.442695
        %v3408 = vpow.pop %v3407
        %v3409 = vmul.f32 %v3389, 1.442695
        %v3410 = vpow.pop %v3409
        %v3411 = vmul.f32 %v3390, 1.442695
        %v3412 = vpow.pop %v3411
        %v3413 = vmul.f32 %v3391, 1.442695
        %v3414 = vpow.pop %v3413
        %v3415 = vmul.f32 %v3392, 1.442695
        %v3416 = vpow.pop %v3415
        %v3417 = vmul.f32 %v3393, 1.442695
        %v3418 = vpow.pop %v3417
        %v3419 = vmul.f32 %v3394, 1.442695
        %v3420 = vpow.pop %v3419
        %v3421 = vmul.f32 %v3395, 1.442695
        %v3422 = vpow.pop %v3421
        %v3423 = vmul.f32 %v3396, 1.442695
        %v3424 = vpow.pop %v3423
        %v3425 = vmul.f32 %v3397, 1.442695
        %v3426 = vpow.pop %v3425
        %v3427 = vmul.f32 %v3398, 1.442695
        %v3428 = vpow.pop %v3427
        %v3429 = vmul.f32 %v3399, 1.442695
        %v3430 = vpow.pop %v3429
        %v3431 = vmul.f32 %v3400, 1.442695
        %v3432 = vpow.pop %v3431
        %v3433 = vadd.f32 %v3402, 1.0
        %v3434 = vadd.f32 %v3404, 1.0
        %v3435 = vadd.f32 %v3406, 1.0
        %v3436 = vadd.f32 %v3408, 1.0
        %v3437 = vadd.f32 %v3410, 1.0
        %v3438 = vadd.f32 %v3412, 1.0
        %v3439 = vadd.f32 %v3414, 1.0
        %v3440 = vadd.f32 %v3416, 1.0
        %v3441 = vadd.f32 %v3418, 1.0
        %v3442 = vadd.f32 %v3420, 1.0
        %v3443 = vadd.f32 %v3422, 1.0
        %v3444 = vadd.f32 %v3424, 1.0
        %v3445 = vadd.f32 %v3426, 1.0
        %v3446 = vadd.f32 %v3428, 1.0
        %v3447 = vadd.f32 %v3430, 1.0
        %v3448 = vadd.f32 %v3432, 1.0
        %v3449 = vrcp.pop %v3433
        %v3450 = vmul.f32 %v3433, %v3449
        %v3451 = vsub.f32 1.0, %v3450
        %v3452 = vmul.f32 %v3449, %v3451
        %v3453 = vadd.f32 %v3449, %v3452
        %vm3454 = vweird.f32 %v3433
        %vm3455 = vweird.f32 %v3449
        %vm3456 = vmor %vm3454, %vm3455
        %v3457 = vsel %vm3456, %v3449, %v3453
        %v3458 = vand.u32 2147483647, %v3433
        %vm3459 = vcmp.eq.f32.partialorder %v3458, 8.507059e+37
        %v3460 = vand.u32 %v3433, 2147483648
        %v3461 = vor.u32 1.1754944e-38, %v3460
        %v3462 = vsel %vm3459, %v3461, %v3457
        %v3463 = vmul.f32 1.0, %v3462
        %v3464 = vrcp.pop %v3434
        %v3465 = vmul.f32 %v3434, %v3464
        %v3466 = vsub.f32 1.0, %v3465
        %v3467 = vmul.f32 %v3464, %v3466
        %v3468 = vadd.f32 %v3464, %v3467
        %vm3469 = vweird.f32 %v3434
        %vm3470 = vweird.f32 %v3464
        %vm3471 = vmor %vm3469, %vm3470
        %v3472 = vsel %vm3471, %v3464, %v3468
        %v3473 = vand.u32 2147483647, %v3434
        %vm3474 = vcmp.eq.f32.partialorder %v3473, 8.507059e+37
        %v3475 = vand.u32 %v3434, 2147483648
        %v3476 = vor.u32 1.1754944e-38, %v3475
        %v3477 = vsel %vm3474, %v3476, %v3472
        %v3478 = vmul.f32 1.0, %v3477
        %v3479 = vrcp.pop %v3435
        %v3480 = vmul.f32 %v3435, %v3479
        %v3481 = vsub.f32 1.0, %v3480
        %v3482 = vmul.f32 %v3479, %v3481
        %v3483 = vadd.f32 %v3479, %v3482
        %vm3484 = vweird.f32 %v3435
        %vm3485 = vweird.f32 %v3479
        %vm3486 = vmor %vm3484, %vm3485
        %v3487 = vsel %vm3486, %v3479, %v3483
        %v3488 = vand.u32 2147483647, %v3435
        %vm3489 = vcmp.eq.f32.partialorder %v3488, 8.507059e+37
        %v3490 = vand.u32 %v3435, 2147483648
        %v3491 = vor.u32 1.1754944e-38, %v3490
        %v3492 = vsel %vm3489, %v3491, %v3487
        %v3493 = vmul.f32 1.0, %v3492
        %v3494 = vrcp.pop %v3436
        %v3495 = vmul.f32 %v3436, %v3494
        %v3496 = vsub.f32 1.0, %v3495
        %v3497 = vmul.f32 %v3494, %v3496
        %v3498 = vadd.f32 %v3494, %v3497
        %vm3499 = vweird.f32 %v3436
        %vm3500 = vweird.f32 %v3494
        %vm3501 = vmor %vm3499, %vm3500
        %v3502 = vsel %vm3501, %v3494, %v3498
        %v3503 = vand.u32 2147483647, %v3436
        %vm3504 = vcmp.eq.f32.partialorder %v3503, 8.507059e+37
        %v3505 = vand.u32 %v3436, 2147483648
        %v3506 = vor.u32 1.1754944e-38, %v3505
        %v3507 = vsel %vm3504, %v3506, %v3502
        %v3508 = vmul.f32 1.0, %v3507
        %v3509 = vrcp.pop %v3437
        %v3510 = vmul.f32 %v3437, %v3509
        %v3511 = vsub.f32 1.0, %v3510
        %v3512 = vmul.f32 %v3509, %v3511
        %v3513 = vadd.f32 %v3509, %v3512
        %vm3514 = vweird.f32 %v3437
        %vm3515 = vweird.f32 %v3509
        %vm3516 = vmor %vm3514, %vm3515
        %v3517 = vsel %vm3516, %v3509, %v3513
        %v3518 = vand.u32 2147483647, %v3437
        %vm3519 = vcmp.eq.f32.partialorder %v3518, 8.507059e+37
        %v3520 = vand.u32 %v3437, 2147483648
        %v3521 = vor.u32 1.1754944e-38, %v3520
        %v3522 = vsel %vm3519, %v3521, %v3517
        %v3523 = vmul.f32 1.0, %v3522
        %v3524 = vrcp.pop %v3438
        %v3525 = vmul.f32 %v3438, %v3524
        %v3526 = vsub.f32 1.0, %v3525
        %v3527 = vmul.f32 %v3524, %v3526
        %v3528 = vadd.f32 %v3524, %v3527
        %vm3529 = vweird.f32 %v3438
        %vm3530 = vweird.f32 %v3524
        %vm3531 = vmor %vm3529, %vm3530
        %v3532 = vsel %vm3531, %v3524, %v3528
        %v3533 = vand.u32 2147483647, %v3438
        %vm3534 = vcmp.eq.f32.partialorder %v3533, 8.507059e+37
        %v3535 = vand.u32 %v3438, 2147483648
        %v3536 = vor.u32 1.1754944e-38, %v3535
        %v3537 = vsel %vm3534, %v3536, %v3532
        %v3538 = vmul.f32 1.0, %v3537
        %v3539 = vrcp.pop %v3439
        %v3540 = vmul.f32 %v3439, %v3539
        %v3541 = vsub.f32 1.0, %v3540
        %v3542 = vmul.f32 %v3539, %v3541
        %v3543 = vadd.f32 %v3539, %v3542
        %vm3544 = vweird.f32 %v3439
        %vm3545 = vweird.f32 %v3539
        %vm3546 = vmor %vm3544, %vm3545
        %v3547 = vsel %vm3546, %v3539, %v3543
        %v3548 = vand.u32 2147483647, %v3439
        %vm3549 = vcmp.eq.f32.partialorder %v3548, 8.507059e+37
        %v3550 = vand.u32 %v3439, 2147483648
        %v3551 = vor.u32 1.1754944e-38, %v3550
        %v3552 = vsel %vm3549, %v3551, %v3547
        %v3553 = vmul.f32 1.0, %v3552
        %v3554 = vrcp.pop %v3440
        %v3555 = vmul.f32 %v3440, %v3554
        %v3556 = vsub.f32 1.0, %v3555
        %v3557 = vmul.f32 %v3554, %v3556
        %v3558 = vadd.f32 %v3554, %v3557
        %vm3559 = vweird.f32 %v3440
        %vm3560 = vweird.f32 %v3554
        %vm3561 = vmor %vm3559, %vm3560
        %v3562 = vsel %vm3561, %v3554, %v3558
        %v3563 = vand.u32 2147483647, %v3440
        %vm3564 = vcmp.eq.f32.partialorder %v3563, 8.507059e+37
        %v3565 = vand.u32 %v3440, 2147483648
        %v3566 = vor.u32 1.1754944e-38, %v3565
        %v3567 = vsel %vm3564, %v3566, %v3562
        %v3568 = vmul.f32 1.0, %v3567
        %v3569 = vrcp.pop %v3441
        %v3570 = vmul.f32 %v3441, %v3569
        %v3571 = vsub.f32 1.0, %v3570
        %v3572 = vmul.f32 %v3569, %v3571
        %v3573 = vadd.f32 %v3569, %v3572
        %vm3574 = vweird.f32 %v3441
        %vm3575 = vweird.f32 %v3569
        %vm3576 = vmor %vm3574, %vm3575
        %v3577 = vsel %vm3576, %v3569, %v3573
        %v3578 = vand.u32 2147483647, %v3441
        %vm3579 = vcmp.eq.f32.partialorder %v3578, 8.507059e+37
        %v3580 = vand.u32 %v3441, 2147483648
        %v3581 = vor.u32 1.1754944e-38, %v3580
        %v3582 = vsel %vm3579, %v3581, %v3577
        %v3583 = vmul.f32 1.0, %v3582
        %v3584 = vrcp.pop %v3442
        %v3585 = vmul.f32 %v3442, %v3584
        %v3586 = vsub.f32 1.0, %v3585
        %v3587 = vmul.f32 %v3584, %v3586
        %v3588 = vadd.f32 %v3584, %v3587
        %vm3589 = vweird.f32 %v3442
        %vm3590 = vweird.f32 %v3584
        %vm3591 = vmor %vm3589, %vm3590
        %v3592 = vsel %vm3591, %v3584, %v3588
        %v3593 = vand.u32 2147483647, %v3442
        %vm3594 = vcmp.eq.f32.partialorder %v3593, 8.507059e+37
        %v3595 = vand.u32 %v3442, 2147483648
        %v3596 = vor.u32 1.1754944e-38, %v3595
        %v3597 = vsel %vm3594, %v3596, %v3592
        %v3598 = vmul.f32 1.0, %v3597
        %v3599 = vrcp.pop %v3443
        %v3600 = vmul.f32 %v3443, %v3599
        %v3601 = vsub.f32 1.0, %v3600
        %v3602 = vmul.f32 %v3599, %v3601
        %v3603 = vadd.f32 %v3599, %v3602
        %vm3604 = vweird.f32 %v3443
        %vm3605 = vweird.f32 %v3599
        %vm3606 = vmor %vm3604, %vm3605
        %v3607 = vsel %vm3606, %v3599, %v3603
        %v3608 = vand.u32 2147483647, %v3443
        %vm3609 = vcmp.eq.f32.partialorder %v3608, 8.507059e+37
        %v3610 = vand.u32 %v3443, 2147483648
        %v3611 = vor.u32 1.1754944e-38, %v3610
        %v3612 = vsel %vm3609, %v3611, %v3607
        %v3613 = vmul.f32 1.0, %v3612
        %v3614 = vrcp.pop %v3444
        %v3615 = vmul.f32 %v3444, %v3614
        %v3616 = vsub.f32 1.0, %v3615
        %v3617 = vmul.f32 %v3614, %v3616
        %v3618 = vadd.f32 %v3614, %v3617
        %vm3619 = vweird.f32 %v3444
        %vm3620 = vweird.f32 %v3614
        %vm3621 = vmor %vm3619, %vm3620
        %v3622 = vsel %vm3621, %v3614, %v3618
        %v3623 = vand.u32 2147483647, %v3444
        %vm3624 = vcmp.eq.f32.partialorder %v3623, 8.507059e+37
        %v3625 = vand.u32 %v3444, 2147483648
        %v3626 = vor.u32 1.1754944e-38, %v3625
        %v3627 = vsel %vm3624, %v3626, %v3622
        %v3628 = vmul.f32 1.0, %v3627
        %v3629 = vrcp.pop %v3445
        %v3630 = vmul.f32 %v3445, %v3629
        %v3631 = vsub.f32 1.0, %v3630
        %v3632 = vmul.f32 %v3629, %v3631
        %v3633 = vadd.f32 %v3629, %v3632
        %vm3634 = vweird.f32 %v3445
        %vm3635 = vweird.f32 %v3629
        %vm3636 = vmor %vm3634, %vm3635
        %v3637 = vsel %vm3636, %v3629, %v3633
        %v3638 = vand.u32 2147483647, %v3445
        %vm3639 = vcmp.eq.f32.partialorder %v3638, 8.507059e+37
        %v3640 = vand.u32 %v3445, 2147483648
        %v3641 = vor.u32 1.1754944e-38, %v3640
        %v3642 = vsel %vm3639, %v3641, %v3637
        %v3643 = vmul.f32 1.0, %v3642
        %v3644 = vrcp.pop %v3446
        %v3645 = vmul.f32 %v3446, %v3644
        %v3646 = vsub.f32 1.0, %v3645
        %v3647 = vmul.f32 %v3644, %v3646
        %v3648 = vadd.f32 %v3644, %v3647
        %vm3649 = vweird.f32 %v3446
        %vm3650 = vweird.f32 %v3644
        %vm3651 = vmor %vm3649, %vm3650
        %v3652 = vsel %vm3651, %v3644, %v3648
        %v3653 = vand.u32 2147483647, %v3446
        %vm3654 = vcmp.eq.f32.partialorder %v3653, 8.507059e+37
        %v3655 = vand.u32 %v3446, 2147483648
        %v3656 = vor.u32 1.1754944e-38, %v3655
        %v3657 = vsel %vm3654, %v3656, %v3652
        %v3658 = vmul.f32 1.0, %v3657
        %v3659 = vrcp.pop %v3447
        %v3660 = vmul.f32 %v3447, %v3659
        %v3661 = vsub.f32 1.0, %v3660
        %v3662 = vmul.f32 %v3659, %v3661
        %v3663 = vadd.f32 %v3659, %v3662
        %vm3664 = vweird.f32 %v3447
        %vm3665 = vweird.f32 %v3659
        %vm3666 = vmor %vm3664, %vm3665
        %v3667 = vsel %vm3666, %v3659, %v3663
        %v3668 = vand.u32 2147483647, %v3447
        %vm3669 = vcmp.eq.f32.partialorder %v3668, 8.507059e+37
        %v3670 = vand.u32 %v3447, 2147483648
        %v3671 = vor.u32 1.1754944e-38, %v3670
        %v3672 = vsel %vm3669, %v3671, %v3667
        %v3673 = vmul.f32 1.0, %v3672
        %v3674 = vrcp.pop %v3448
        %v3675 = vmul.f32 %v3448, %v3674
        %v3676 = vsub.f32 1.0, %v3675
        %v3677 = vmul.f32 %v3674, %v3676
        %v3678 = vadd.f32 %v3674, %v3677
        %vm3679 = vweird.f32 %v3448
        %vm3680 = vweird.f32 %v3674
        %vm3681 = vmor %vm3679, %vm3680
        %v3682 = vsel %vm3681, %v3674, %v3678
        %v3683 = vand.u32 2147483647, %v3448
        %vm3684 = vcmp.eq.f32.partialorder %v3683, 8.507059e+37
        %v3685 = vand.u32 %v3448, 2147483648
        %v3686 = vor.u32 1.1754944e-38, %v3685
        %v3687 = vsel %vm3684, %v3686, %v3682
        %v3688 = vmul.f32 1.0, %v3687
        %v3689 = vtanh.pop %v3370
        %v3690 = vtanh.pop %v3372
        %v3691 = vtanh.pop %v3374
        %v3692 = vtanh.pop %v3376
        %v3693 = vtanh.pop %v3378
        %v3694 = vtanh.pop %v3380
        %v3695 = vtanh.pop %v3382
        %v3696 = vtanh.pop %v3384
        %v3705 = vrot.slane %v3224, 7
        %v3706 = vrot.slane %v3225, 7
        %v3707 = vrot.slane %v3226, 7
        %v3708 = vrot.slane %v3227, 7
        %v3709 = vrot.slane %v3228, 7
        %v3710 = vrot.slane %v3229, 7
        %v3711 = vrot.slane %v3230, 7
        %v3712 = vrot.slane %v3231, 7
        %v3721 = vmul.f32 %v3463, %v3705
        %v3722 = vmul.f32 %v3493, %v3706
        %v3723 = vmul.f32 %v3523, %v3707
        %v3724 = vmul.f32 %v3553, %v3708
        %v3725 = vmul.f32 %v3583, %v3709
        %v3726 = vmul.f32 %v3613, %v3710
        %v3727 = vmul.f32 %v3643, %v3711
        %v3728 = vmul.f32 %v3673, %v3712
        %v3729 = vmul.f32 %v3463, %v3689
        %v3730 = vmul.f32 %v3493, %v3690
        %v3731 = vmul.f32 %v3523, %v3691
        %v3732 = vmul.f32 %v3553, %v3692
        %v3733 = vmul.f32 %v3583, %v3693
        %v3734 = vmul.f32 %v3613, %v3694
        %v3735 = vmul.f32 %v3643, %v3695
        %v3736 = vmul.f32 %v3673, %v3696
        %3745 = vrot.lane.b32.xlu0 %v3729, 64
        %v3746 = vpop.permute.xlu0 %3745
        %3747 = vrot.lane.b32.xlu0 %v3730, 64
        %v3748 = vpop.permute.xlu0 %3747
        %3749 = vrot.lane.b32.xlu0 %v3731, 64
        %v3750 = vpop.permute.xlu0 %3749
        %3751 = vrot.lane.b32.xlu0 %v3732, 64
        %v3752 = vpop.permute.xlu0 %3751
        %3753 = vrot.lane.b32.xlu0 %v3733, 64
        %v3754 = vpop.permute.xlu0 %3753
        %3755 = vrot.lane.b32.xlu0 %v3734, 64
        %v3756 = vpop.permute.xlu0 %3755
        %3757 = vrot.lane.b32.xlu0 %v3735, 64
        %v3758 = vpop.permute.xlu0 %3757
        %3759 = vrot.lane.b32.xlu0 %v3736, 64
        %v3760 = vpop.permute.xlu0 %3759
        %v3769 = vadd.f32 %v3721, %v3746
        %v3770 = vadd.f32 %v3722, %v3748
        %v3771 = vadd.f32 %v3723, %v3750
        %v3772 = vadd.f32 %v3724, %v3752
        %v3773 = vadd.f32 %v3725, %v3754
        %v3774 = vadd.f32 %v3726, %v3756
        %v3775 = vadd.f32 %v3727, %v3758
        %v3776 = vadd.f32 %v3728, %v3760
        %v3777 = vtanh.pop %v3769
        %v3778 = vtanh.pop %v3770
        %v3779 = vtanh.pop %v3771
        %v3780 = vtanh.pop %v3772
        %v3781 = vtanh.pop %v3773
        %v3782 = vtanh.pop %v3774
        %v3783 = vtanh.pop %v3775
        %v3784 = vtanh.pop %v3776
        %v3785 = vmul.f32 %v3478, %v3777
        %v3786 = vmul.f32 %v3508, %v3778
        %v3787 = vmul.f32 %v3538, %v3779
        %v3788 = vmul.f32 %v3568, %v3780
        %v3789 = vmul.f32 %v3598, %v3781
        %v3790 = vmul.f32 %v3628, %v3782
        %v3791 = vmul.f32 %v3658, %v3783
        %v3792 = vmul.f32 %v3688, %v3784
        %v3801 = vrot.slane %v3786, 7
        %v3802 = vsel %vm1106, %v3801, %v3785
        %v3803 = vrot.slane %v3787, 6
        %v3804 = vsel %vm1109, %v3803, %v3802
        %v3805 = vrot.slane %v3788, 5
        %v3806 = vrot.slane %v3789, 4
        %v3807 = vsel %vm1091, %v3806, %v3805
        %v3808 = vrot.slane %v3790, 3
        %v3809 = vsel %vm1094, %v3808, %v3807
        %v3810 = vrot.slane %v3791, 2
        %v3811 = vsel %vm1097, %v3810, %v3809
        %v3812 = vrot.slane %v3792, 1
        %v3813 = vsel %vm1100, %v3812, %v3811
        %3814 = vrot.lane.b32.xlu0 %v3804, 64
        %v3815 = vpop.permute.xlu0 %3814
        %3816 = vrot.lane.b32.xlu0 %v3813, 64
        %v3817 = vpop.permute.xlu0 %3816
        %vm3820 = vcmask 523269
        %3821 = vst.msk [vmem:[#allocation6 + $0x23] sm:$0xe0] %vm3820, %v3815
        %vm3822 = vcmask 520192
        %3823 = vst.msk [vmem:[#allocation6 + $0x2b] sm:$0x1f] %vm3822, %v3817
        %v3824 = vrot.slane %v3785, 5
        %v3825 = vrot.slane %v3786, 4
        %v3826 = vsel %vm1091, %v3825, %v3824
        %v3827 = vrot.slane %v3787, 3
        %v3828 = vsel %vm1094, %v3827, %v3826
        %v3829 = vrot.slane %v3788, 2
        %v3830 = vsel %vm1097, %v3829, %v3828
        %v3831 = vrot.slane %v3789, 1
        %v3832 = vsel %vm1100, %v3831, %v3830
        %v3833 = vsel %vm1103, %v3790, %v3832
        %v3834 = vrot.slane %v3791, 7
        %v3835 = vsel %vm1106, %v3834, %v3833
        %v3836 = vrot.slane %v3792, 6
        %v3837 = vsel %vm1109, %v3836, %v3835
        %3838 = vrot.lane.b32.xlu0 %v3837, 64
        %v3839 = vpop.permute.xlu0 %3838
        %v3840 = vsel %vm574, %v3839, 0
        %3842 = vmatpush.msra.mxu0 0.0
        %3843 = vmatpush.msra.mxu0 0.0
        %3844 = vmatpush.msra.mxu0 0.0
        %3845 = vmatpush.msra.mxu0 0.0
        %3846 = vmatpush.msra.mxu0 0.0
        %3847 = vmatpush.msra.mxu0 0.0
        %3848 = vmatpush.msra.mxu0 0.0
        %3849 = vmatpush.msra.mxu0 0.0
        %3850 = vmatpush.msra.mxu0 %v570
        %3851 = vmatpush.msra.mxu0 %v568
        %3852 = vmatpush.msra.mxu0 %v566
        %3853 = vmatpush.msra.mxu0 %v564
        %3854 = vmatpush.msra.mxu0 %v562
        %3855 = vmatpush.msra.mxu0 %v560
        %3856 = vmatpush.msra.mxu0 %v558
        %3857 = vmatpush.msra.mxu0 %v556
        %3858 = vmatmul.f32.gmra.mxu0 %v3840
        %v3859 = vpop.f32.mrf.mxu0
        %v3860 = vadd.f32 0.0, %v3859
        %3861 = vdwg.mxu0
        %3862 = vmatpush.msra.mxu0 0.0
        %3863 = vmatpush.msra.mxu0 0.0
        %3864 = vmatpush.msra.mxu0 0.0
        %3865 = vmatpush.msra.mxu0 0.0
        %3866 = vmatpush.msra.mxu0 0.0
        %3867 = vmatpush.msra.mxu0 0.0
        %3868 = vmatpush.msra.mxu0 0.0
        %3869 = vmatpush.msra.mxu0 0.0
        %3870 = vmatpush.msra.mxu0 %v571
        %3871 = vmatpush.msra.mxu0 %v569
        %3872 = vmatpush.msra.mxu0 %v567
        %3873 = vmatpush.msra.mxu0 %v565
        %3874 = vmatpush.msra.mxu0 %v563
        %3875 = vmatpush.msra.mxu0 %v561
        %3876 = vmatpush.msra.mxu0 %v559
        %3877 = vmatpush.msra.mxu0 %v557
        %3878 = vmatmul.f32.gmra.mxu0 %v3840
        %v3879 = vpop.f32.mrf.mxu0
        %v3880 = vadd.f32 0.0, %v3879
        %3881 = vdwg.mxu0
        %v3884 = vrot.slane %v3860, 2
        %v3885 = vrot.slane %v3880, 2
        %v3886 = vrot.slane %v3860, 3
        %v3887 = vrot.slane %v3880, 3
        %v3888 = vrot.slane %v3860, 4
        %v3889 = vrot.slane %v3880, 4
        %v3890 = vrot.slane %v3860, 5
        %v3891 = vrot.slane %v3880, 5
        %v3892 = vrot.slane %v3860, 6
        %v3893 = vrot.slane %v3880, 6
        %v3894 = vrot.slane %v3860, 7
        %v3895 = vrot.slane %v3880, 7
        %v3896 = vrot.slane %v3860, 1
        %v3897 = vrot.slane %v3880, 1
        %v3914 = vadd.f32 %v492, %v3884
        %v3915 = vadd.f32 %v533, %v3885
        %v3916 = vadd.f32 %v495, %v3886
        %v3917 = vadd.f32 %v536, %v3887
        %v3918 = vadd.f32 %v498, %v3888
        %v3919 = vadd.f32 %v539, %v3889
        %v3920 = vadd.f32 %v501, %v3890
        %v3921 = vadd.f32 %v542, %v3891
        %v3922 = vadd.f32 %v504, %v3892
        %v3923 = vadd.f32 %v545, %v3893
        %v3924 = vadd.f32 %v507, %v3894
        %v3925 = vadd.f32 %v548, %v3895
        %v3926 = vadd.f32 %v510, %v3860
        %v3927 = vadd.f32 %v551, %v3880
        %v3928 = vadd.f32 %v513, %v3896
        %v3929 = vadd.f32 %v554, %v3897
        %v3930 = vxor.u32 %v3914, 2147483648
        %v3931 = vxor.u32 %v3915, 2147483648
        %v3932 = vxor.u32 %v3916, 2147483648
        %v3933 = vxor.u32 %v3917, 2147483648
        %v3934 = vxor.u32 %v3918, 2147483648
        %v3935 = vxor.u32 %v3919, 2147483648
        %v3936 = vxor.u32 %v3920, 2147483648
        %v3937 = vxor.u32 %v3921, 2147483648
        %v3938 = vxor.u32 %v3922, 2147483648
        %v3939 = vxor.u32 %v3923, 2147483648
        %v3940 = vxor.u32 %v3924, 2147483648
        %v3941 = vxor.u32 %v3925, 2147483648
        %v3942 = vxor.u32 %v3926, 2147483648
        %v3943 = vxor.u32 %v3927, 2147483648
        %v3944 = vxor.u32 %v3928, 2147483648
        %v3945 = vxor.u32 %v3929, 2147483648
        %v3946 = vmul.f32 %v3930, 1.442695
        %v3947 = vpow.pop %v3946
        %v3948 = vmul.f32 %v3931, 1.442695
        %v3949 = vpow.pop %v3948
        %v3950 = vmul.f32 %v3932, 1.442695
        %v3951 = vpow.pop %v3950
        %v3952 = vmul.f32 %v3933, 1.442695
        %v3953 = vpow.pop %v3952
        %v3954 = vmul.f32 %v3934, 1.442695
        %v3955 = vpow.pop %v3954
        %v3956 = vmul.f32 %v3935, 1.442695
        %v3957 = vpow.pop %v3956
        %v3958 = vmul.f32 %v3936, 1.442695
        %v3959 = vpow.pop %v3958
        %v3960 = vmul.f32 %v3937, 1.442695
        %v3961 = vpow.pop %v3960
        %v3962 = vmul.f32 %v3938, 1.442695
        %v3963 = vpow.pop %v3962
        %v3964 = vmul.f32 %v3939, 1.442695
        %v3965 = vpow.pop %v3964
        %v3966 = vmul.f32 %v3940, 1.442695
        %v3967 = vpow.pop %v3966
        %v3968 = vmul.f32 %v3941, 1.442695
        %v3969 = vpow.pop %v3968
        %v3970 = vmul.f32 %v3942, 1.442695
        %v3971 = vpow.pop %v3970
        %v3972 = vmul.f32 %v3943, 1.442695
        %v3973 = vpow.pop %v3972
        %v3974 = vmul.f32 %v3944, 1.442695
        %v3975 = vpow.pop %v3974
        %v3976 = vmul.f32 %v3945, 1.442695
        %v3977 = vpow.pop %v3976
        %v3978 = vadd.f32 %v3947, 1.0
        %v3979 = vadd.f32 %v3949, 1.0
        %v3980 = vadd.f32 %v3951, 1.0
        %v3981 = vadd.f32 %v3953, 1.0
        %v3982 = vadd.f32 %v3955, 1.0
        %v3983 = vadd.f32 %v3957, 1.0
        %v3984 = vadd.f32 %v3959, 1.0
        %v3985 = vadd.f32 %v3961, 1.0
        %v3986 = vadd.f32 %v3963, 1.0
        %v3987 = vadd.f32 %v3965, 1.0
        %v3988 = vadd.f32 %v3967, 1.0
        %v3989 = vadd.f32 %v3969, 1.0
        %v3990 = vadd.f32 %v3971, 1.0
        %v3991 = vadd.f32 %v3973, 1.0
        %v3992 = vadd.f32 %v3975, 1.0
        %v3993 = vadd.f32 %v3977, 1.0
        %v3994 = vrcp.pop %v3978
        %v3995 = vmul.f32 %v3978, %v3994
        %v3996 = vsub.f32 1.0, %v3995
        %v3997 = vmul.f32 %v3994, %v3996
        %v3998 = vadd.f32 %v3994, %v3997
        %vm3999 = vweird.f32 %v3978
        %vm4000 = vweird.f32 %v3994
        %vm4001 = vmor %vm3999, %vm4000
        %v4002 = vsel %vm4001, %v3994, %v3998
        %v4003 = vand.u32 2147483647, %v3978
        %vm4004 = vcmp.eq.f32.partialorder %v4003, 8.507059e+37
        %v4005 = vand.u32 %v3978, 2147483648
        %v4006 = vor.u32 1.1754944e-38, %v4005
        %v4007 = vsel %vm4004, %v4006, %v4002
        %v4008 = vmul.f32 1.0, %v4007
        %v4009 = vrcp.pop %v3979
        %v4010 = vmul.f32 %v3979, %v4009
        %v4011 = vsub.f32 1.0, %v4010
        %v4012 = vmul.f32 %v4009, %v4011
        %v4013 = vadd.f32 %v4009, %v4012
        %vm4014 = vweird.f32 %v3979
        %vm4015 = vweird.f32 %v4009
        %vm4016 = vmor %vm4014, %vm4015
        %v4017 = vsel %vm4016, %v4009, %v4013
        %v4018 = vand.u32 2147483647, %v3979
        %vm4019 = vcmp.eq.f32.partialorder %v4018, 8.507059e+37
        %v4020 = vand.u32 %v3979, 2147483648
        %v4021 = vor.u32 1.1754944e-38, %v4020
        %v4022 = vsel %vm4019, %v4021, %v4017
        %v4023 = vmul.f32 1.0, %v4022
        %v4024 = vrcp.pop %v3980
        %v4025 = vmul.f32 %v3980, %v4024
        %v4026 = vsub.f32 1.0, %v4025
        %v4027 = vmul.f32 %v4024, %v4026
        %v4028 = vadd.f32 %v4024, %v4027
        %vm4029 = vweird.f32 %v3980
        %vm4030 = vweird.f32 %v4024
        %vm4031 = vmor %vm4029, %vm4030
        %v4032 = vsel %vm4031, %v4024, %v4028
        %v4033 = vand.u32 2147483647, %v3980
        %vm4034 = vcmp.eq.f32.partialorder %v4033, 8.507059e+37
        %v4035 = vand.u32 %v3980, 2147483648
        %v4036 = vor.u32 1.1754944e-38, %v4035
        %v4037 = vsel %vm4034, %v4036, %v4032
        %v4038 = vmul.f32 1.0, %v4037
        %v4039 = vrcp.pop %v3981
        %v4040 = vmul.f32 %v3981, %v4039
        %v4041 = vsub.f32 1.0, %v4040
        %v4042 = vmul.f32 %v4039, %v4041
        %v4043 = vadd.f32 %v4039, %v4042
        %vm4044 = vweird.f32 %v3981
        %vm4045 = vweird.f32 %v4039
        %vm4046 = vmor %vm4044, %vm4045
        %v4047 = vsel %vm4046, %v4039, %v4043
        %v4048 = vand.u32 2147483647, %v3981
        %vm4049 = vcmp.eq.f32.partialorder %v4048, 8.507059e+37
        %v4050 = vand.u32 %v3981, 2147483648
        %v4051 = vor.u32 1.1754944e-38, %v4050
        %v4052 = vsel %vm4049, %v4051, %v4047
        %v4053 = vmul.f32 1.0, %v4052
        %v4054 = vrcp.pop %v3982
        %v4055 = vmul.f32 %v3982, %v4054
        %v4056 = vsub.f32 1.0, %v4055
        %v4057 = vmul.f32 %v4054, %v4056
        %v4058 = vadd.f32 %v4054, %v4057
        %vm4059 = vweird.f32 %v3982
        %vm4060 = vweird.f32 %v4054
        %vm4061 = vmor %vm4059, %vm4060
        %v4062 = vsel %vm4061, %v4054, %v4058
        %v4063 = vand.u32 2147483647, %v3982
        %vm4064 = vcmp.eq.f32.partialorder %v4063, 8.507059e+37
        %v4065 = vand.u32 %v3982, 2147483648
        %v4066 = vor.u32 1.1754944e-38, %v4065
        %v4067 = vsel %vm4064, %v4066, %v4062
        %v4068 = vmul.f32 1.0, %v4067
        %v4069 = vrcp.pop %v3983
        %v4070 = vmul.f32 %v3983, %v4069
        %v4071 = vsub.f32 1.0, %v4070
        %v4072 = vmul.f32 %v4069, %v4071
        %v4073 = vadd.f32 %v4069, %v4072
        %vm4074 = vweird.f32 %v3983
        %vm4075 = vweird.f32 %v4069
        %vm4076 = vmor %vm4074, %vm4075
        %v4077 = vsel %vm4076, %v4069, %v4073
        %v4078 = vand.u32 2147483647, %v3983
        %vm4079 = vcmp.eq.f32.partialorder %v4078, 8.507059e+37
        %v4080 = vand.u32 %v3983, 2147483648
        %v4081 = vor.u32 1.1754944e-38, %v4080
        %v4082 = vsel %vm4079, %v4081, %v4077
        %v4083 = vmul.f32 1.0, %v4082
        %v4084 = vrcp.pop %v3984
        %v4085 = vmul.f32 %v3984, %v4084
        %v4086 = vsub.f32 1.0, %v4085
        %v4087 = vmul.f32 %v4084, %v4086
        %v4088 = vadd.f32 %v4084, %v4087
        %vm4089 = vweird.f32 %v3984
        %vm4090 = vweird.f32 %v4084
        %vm4091 = vmor %vm4089, %vm4090
        %v4092 = vsel %vm4091, %v4084, %v4088
        %v4093 = vand.u32 2147483647, %v3984
        %vm4094 = vcmp.eq.f32.partialorder %v4093, 8.507059e+37
        %v4095 = vand.u32 %v3984, 2147483648
        %v4096 = vor.u32 1.1754944e-38, %v4095
        %v4097 = vsel %vm4094, %v4096, %v4092
        %v4098 = vmul.f32 1.0, %v4097
        %v4099 = vrcp.pop %v3985
        %v4100 = vmul.f32 %v3985, %v4099
        %v4101 = vsub.f32 1.0, %v4100
        %v4102 = vmul.f32 %v4099, %v4101
        %v4103 = vadd.f32 %v4099, %v4102
        %vm4104 = vweird.f32 %v3985
        %vm4105 = vweird.f32 %v4099
        %vm4106 = vmor %vm4104, %vm4105
        %v4107 = vsel %vm4106, %v4099, %v4103
        %v4108 = vand.u32 2147483647, %v3985
        %vm4109 = vcmp.eq.f32.partialorder %v4108, 8.507059e+37
        %v4110 = vand.u32 %v3985, 2147483648
        %v4111 = vor.u32 1.1754944e-38, %v4110
        %v4112 = vsel %vm4109, %v4111, %v4107
        %v4113 = vmul.f32 1.0, %v4112
        %v4114 = vrcp.pop %v3986
        %v4115 = vmul.f32 %v3986, %v4114
        %v4116 = vsub.f32 1.0, %v4115
        %v4117 = vmul.f32 %v4114, %v4116
        %v4118 = vadd.f32 %v4114, %v4117
        %vm4119 = vweird.f32 %v3986
        %vm4120 = vweird.f32 %v4114
        %vm4121 = vmor %vm4119, %vm4120
        %v4122 = vsel %vm4121, %v4114, %v4118
        %v4123 = vand.u32 2147483647, %v3986
        %vm4124 = vcmp.eq.f32.partialorder %v4123, 8.507059e+37
        %v4125 = vand.u32 %v3986, 2147483648
        %v4126 = vor.u32 1.1754944e-38, %v4125
        %v4127 = vsel %vm4124, %v4126, %v4122
        %v4128 = vmul.f32 1.0, %v4127
        %v4129 = vrcp.pop %v3987
        %v4130 = vmul.f32 %v3987, %v4129
        %v4131 = vsub.f32 1.0, %v4130
        %v4132 = vmul.f32 %v4129, %v4131
        %v4133 = vadd.f32 %v4129, %v4132
        %vm4134 = vweird.f32 %v3987
        %vm4135 = vweird.f32 %v4129
        %vm4136 = vmor %vm4134, %vm4135
        %v4137 = vsel %vm4136, %v4129, %v4133
        %v4138 = vand.u32 2147483647, %v3987
        %vm4139 = vcmp.eq.f32.partialorder %v4138, 8.507059e+37
        %v4140 = vand.u32 %v3987, 2147483648
        %v4141 = vor.u32 1.1754944e-38, %v4140
        %v4142 = vsel %vm4139, %v4141, %v4137
        %v4143 = vmul.f32 1.0, %v4142
        %v4144 = vrcp.pop %v3988
        %v4145 = vmul.f32 %v3988, %v4144
        %v4146 = vsub.f32 1.0, %v4145
        %v4147 = vmul.f32 %v4144, %v4146
        %v4148 = vadd.f32 %v4144, %v4147
        %vm4149 = vweird.f32 %v3988
        %vm4150 = vweird.f32 %v4144
        %vm4151 = vmor %vm4149, %vm4150
        %v4152 = vsel %vm4151, %v4144, %v4148
        %v4153 = vand.u32 2147483647, %v3988
        %vm4154 = vcmp.eq.f32.partialorder %v4153, 8.507059e+37
        %v4155 = vand.u32 %v3988, 2147483648
        %v4156 = vor.u32 1.1754944e-38, %v4155
        %v4157 = vsel %vm4154, %v4156, %v4152
        %v4158 = vmul.f32 1.0, %v4157
        %v4159 = vrcp.pop %v3989
        %v4160 = vmul.f32 %v3989, %v4159
        %v4161 = vsub.f32 1.0, %v4160
        %v4162 = vmul.f32 %v4159, %v4161
        %v4163 = vadd.f32 %v4159, %v4162
        %vm4164 = vweird.f32 %v3989
        %vm4165 = vweird.f32 %v4159
        %vm4166 = vmor %vm4164, %vm4165
        %v4167 = vsel %vm4166, %v4159, %v4163
        %v4168 = vand.u32 2147483647, %v3989
        %vm4169 = vcmp.eq.f32.partialorder %v4168, 8.507059e+37
        %v4170 = vand.u32 %v3989, 2147483648
        %v4171 = vor.u32 1.1754944e-38, %v4170
        %v4172 = vsel %vm4169, %v4171, %v4167
        %v4173 = vmul.f32 1.0, %v4172
        %v4174 = vrcp.pop %v3990
        %v4175 = vmul.f32 %v3990, %v4174
        %v4176 = vsub.f32 1.0, %v4175
        %v4177 = vmul.f32 %v4174, %v4176
        %v4178 = vadd.f32 %v4174, %v4177
        %vm4179 = vweird.f32 %v3990
        %vm4180 = vweird.f32 %v4174
        %vm4181 = vmor %vm4179, %vm4180
        %v4182 = vsel %vm4181, %v4174, %v4178
        %v4183 = vand.u32 2147483647, %v3990
        %vm4184 = vcmp.eq.f32.partialorder %v4183, 8.507059e+37
        %v4185 = vand.u32 %v3990, 2147483648
        %v4186 = vor.u32 1.1754944e-38, %v4185
        %v4187 = vsel %vm4184, %v4186, %v4182
        %v4188 = vmul.f32 1.0, %v4187
        %v4189 = vrcp.pop %v3991
        %v4190 = vmul.f32 %v3991, %v4189
        %v4191 = vsub.f32 1.0, %v4190
        %v4192 = vmul.f32 %v4189, %v4191
        %v4193 = vadd.f32 %v4189, %v4192
        %vm4194 = vweird.f32 %v3991
        %vm4195 = vweird.f32 %v4189
        %vm4196 = vmor %vm4194, %vm4195
        %v4197 = vsel %vm4196, %v4189, %v4193
        %v4198 = vand.u32 2147483647, %v3991
        %vm4199 = vcmp.eq.f32.partialorder %v4198, 8.507059e+37
        %v4200 = vand.u32 %v3991, 2147483648
        %v4201 = vor.u32 1.1754944e-38, %v4200
        %v4202 = vsel %vm4199, %v4201, %v4197
        %v4203 = vmul.f32 1.0, %v4202
        %v4204 = vrcp.pop %v3992
        %v4205 = vmul.f32 %v3992, %v4204
        %v4206 = vsub.f32 1.0, %v4205
        %v4207 = vmul.f32 %v4204, %v4206
        %v4208 = vadd.f32 %v4204, %v4207
        %vm4209 = vweird.f32 %v3992
        %vm4210 = vweird.f32 %v4204
        %vm4211 = vmor %vm4209, %vm4210
        %v4212 = vsel %vm4211, %v4204, %v4208
        %v4213 = vand.u32 2147483647, %v3992
        %vm4214 = vcmp.eq.f32.partialorder %v4213, 8.507059e+37
        %v4215 = vand.u32 %v3992, 2147483648
        %v4216 = vor.u32 1.1754944e-38, %v4215
        %v4217 = vsel %vm4214, %v4216, %v4212
        %v4218 = vmul.f32 1.0, %v4217
        %v4219 = vrcp.pop %v3993
        %v4220 = vmul.f32 %v3993, %v4219
        %v4221 = vsub.f32 1.0, %v4220
        %v4222 = vmul.f32 %v4219, %v4221
        %v4223 = vadd.f32 %v4219, %v4222
        %vm4224 = vweird.f32 %v3993
        %vm4225 = vweird.f32 %v4219
        %vm4226 = vmor %vm4224, %vm4225
        %v4227 = vsel %vm4226, %v4219, %v4223
        %v4228 = vand.u32 2147483647, %v3993
        %vm4229 = vcmp.eq.f32.partialorder %v4228, 8.507059e+37
        %v4230 = vand.u32 %v3993, 2147483648
        %v4231 = vor.u32 1.1754944e-38, %v4230
        %v4232 = vsel %vm4229, %v4231, %v4227
        %v4233 = vmul.f32 1.0, %v4232
        %v4234 = vtanh.pop %v3915
        %v4235 = vtanh.pop %v3917
        %v4236 = vtanh.pop %v3919
        %v4237 = vtanh.pop %v3921
        %v4238 = vtanh.pop %v3923
        %v4239 = vtanh.pop %v3925
        %v4240 = vtanh.pop %v3927
        %v4241 = vtanh.pop %v3929
        %v4250 = vrot.slane %v3769, 7
        %v4251 = vrot.slane %v3770, 7
        %v4252 = vrot.slane %v3771, 7
        %v4253 = vrot.slane %v3772, 7
        %v4254 = vrot.slane %v3773, 7
        %v4255 = vrot.slane %v3774, 7
        %v4256 = vrot.slane %v3775, 7
        %v4257 = vrot.slane %v3776, 7
        %v4266 = vmul.f32 %v4008, %v4250
        %v4267 = vmul.f32 %v4038, %v4251
        %v4268 = vmul.f32 %v4068, %v4252
        %v4269 = vmul.f32 %v4098, %v4253
        %v4270 = vmul.f32 %v4128, %v4254
        %v4271 = vmul.f32 %v4158, %v4255
        %v4272 = vmul.f32 %v4188, %v4256
        %v4273 = vmul.f32 %v4218, %v4257
        %v4274 = vmul.f32 %v4008, %v4234
        %v4275 = vmul.f32 %v4038, %v4235
        %v4276 = vmul.f32 %v4068, %v4236
        %v4277 = vmul.f32 %v4098, %v4237
        %v4278 = vmul.f32 %v4128, %v4238
        %v4279 = vmul.f32 %v4158, %v4239
        %v4280 = vmul.f32 %v4188, %v4240
        %v4281 = vmul.f32 %v4218, %v4241
        %4290 = vrot.lane.b32.xlu0 %v4274, 64
        %v4291 = vpop.permute.xlu0 %4290
        %4292 = vrot.lane.b32.xlu0 %v4275, 64
        %v4293 = vpop.permute.xlu0 %4292
        %4294 = vrot.lane.b32.xlu0 %v4276, 64
        %v4295 = vpop.permute.xlu0 %4294
        %4296 = vrot.lane.b32.xlu0 %v4277, 64
        %v4297 = vpop.permute.xlu0 %4296
        %4298 = vrot.lane.b32.xlu0 %v4278, 64
        %v4299 = vpop.permute.xlu0 %4298
        %4300 = vrot.lane.b32.xlu0 %v4279, 64
        %v4301 = vpop.permute.xlu0 %4300
        %4302 = vrot.lane.b32.xlu0 %v4280, 64
        %v4303 = vpop.permute.xlu0 %4302
        %4304 = vrot.lane.b32.xlu0 %v4281, 64
        %v4305 = vpop.permute.xlu0 %4304
        %v4314 = vadd.f32 %v4266, %v4291
        %v4315 = vadd.f32 %v4267, %v4293
        %v4316 = vadd.f32 %v4268, %v4295
        %v4317 = vadd.f32 %v4269, %v4297
        %v4318 = vadd.f32 %v4270, %v4299
        %v4319 = vadd.f32 %v4271, %v4301
        %v4320 = vadd.f32 %v4272, %v4303
        %v4321 = vadd.f32 %v4273, %v4305
        %v4322 = vtanh.pop %v4314
        %v4323 = vtanh.pop %v4315
        %v4324 = vtanh.pop %v4316
        %v4325 = vtanh.pop %v4317
        %v4326 = vtanh.pop %v4318
        %v4327 = vtanh.pop %v4319
        %v4328 = vtanh.pop %v4320
        %v4329 = vtanh.pop %v4321
        %v4330 = vmul.f32 %v4023, %v4322
        %v4331 = vmul.f32 %v4053, %v4323
        %v4332 = vmul.f32 %v4083, %v4324
        %v4333 = vmul.f32 %v4113, %v4325
        %v4334 = vmul.f32 %v4143, %v4326
        %v4335 = vmul.f32 %v4173, %v4327
        %v4336 = vmul.f32 %v4203, %v4328
        %v4337 = vmul.f32 %v4233, %v4329
        %v4346 = vrot.slane %v4331, 7
        %v4347 = vsel %vm1109, %v4346, %v4330
        %v4348 = vrot.slane %v4332, 6
        %v4349 = vrot.slane %v4333, 5
        %v4350 = vsel %vm1091, %v4349, %v4348
        %v4351 = vrot.slane %v4334, 4
        %v4352 = vsel %vm1094, %v4351, %v4350
        %v4353 = vrot.slane %v4335, 3
        %v4354 = vsel %vm1097, %v4353, %v4352
        %v4355 = vrot.slane %v4336, 2
        %v4356 = vsel %vm1100, %v4355, %v4354
        %v4357 = vrot.slane %v4337, 1
        %v4358 = vsel %vm1103, %v4357, %v4356
        %4359 = vrot.lane.b32.xlu0 %v4347, 64
        %v4360 = vpop.permute.xlu0 %4359
        %4361 = vrot.lane.b32.xlu0 %v4358, 64
        %v4362 = vpop.permute.xlu0 %4361
        %vm4365 = vcmask 523270
        %4366 = vst.msk [vmem:[#allocation6 + $0x2a] sm:$0xc0] %vm4365, %v4360
        %vm4367 = vcmask 521216
        %4368 = vst.msk [vmem:[#allocation6 + $0x32] sm:$0x3f] %vm4367, %v4362
        %v4369 = vrot.slane %v4330, 6
        %v4370 = vrot.slane %v4331, 5
        %v4371 = vsel %vm1091, %v4370, %v4369
        %v4372 = vrot.slane %v4332, 4
        %v4373 = vsel %vm1094, %v4372, %v4371
        %v4374 = vrot.slane %v4333, 3
        %v4375 = vsel %vm1097, %v4374, %v4373
        %v4376 = vrot.slane %v4334, 2
        %v4377 = vsel %vm1100, %v4376, %v4375
        %v4378 = vrot.slane %v4335, 1
        %v4379 = vsel %vm1103, %v4378, %v4377
        %v4380 = vsel %vm1106, %v4336, %v4379
        %v4381 = vrot.slane %v4337, 7
        %v4382 = vsel %vm1109, %v4381, %v4380
        %4383 = vrot.lane.b32.xlu0 %v4382, 64
        %v4384 = vpop.permute.xlu0 %4383
        %v4385 = vsel %vm574, %v4384, 0
        %4387 = vmatpush.msra.mxu0 0.0
        %4388 = vmatpush.msra.mxu0 0.0
        %4389 = vmatpush.msra.mxu0 0.0
        %4390 = vmatpush.msra.mxu0 0.0
        %4391 = vmatpush.msra.mxu0 0.0
        %4392 = vmatpush.msra.mxu0 0.0
        %4393 = vmatpush.msra.mxu0 0.0
        %4394 = vmatpush.msra.mxu0 0.0
        %4395 = vmatpush.msra.mxu0 %v570
        %4396 = vmatpush.msra.mxu0 %v568
        %4397 = vmatpush.msra.mxu0 %v566
        %4398 = vmatpush.msra.mxu0 %v564
        %4399 = vmatpush.msra.mxu0 %v562
        %4400 = vmatpush.msra.mxu0 %v560
        %4401 = vmatpush.msra.mxu0 %v558
        %4402 = vmatpush.msra.mxu0 %v556
        %4403 = vmatmul.f32.gmra.mxu0 %v4385
        %v4404 = vpop.f32.mrf.mxu0
        %v4405 = vadd.f32 0.0, %v4404
        %4406 = vdwg.mxu0
        %4407 = vmatpush.msra.mxu0 0.0
        %4408 = vmatpush.msra.mxu0 0.0
        %4409 = vmatpush.msra.mxu0 0.0
        %4410 = vmatpush.msra.mxu0 0.0
        %4411 = vmatpush.msra.mxu0 0.0
        %4412 = vmatpush.msra.mxu0 0.0
        %4413 = vmatpush.msra.mxu0 0.0
        %4414 = vmatpush.msra.mxu0 0.0
        %4415 = vmatpush.msra.mxu0 %v571
        %4416 = vmatpush.msra.mxu0 %v569
        %4417 = vmatpush.msra.mxu0 %v567
        %4418 = vmatpush.msra.mxu0 %v565
        %4419 = vmatpush.msra.mxu0 %v563
        %4420 = vmatpush.msra.mxu0 %v561
        %4421 = vmatpush.msra.mxu0 %v559
        %4422 = vmatpush.msra.mxu0 %v557
        %4423 = vmatmul.f32.gmra.mxu0 %v4385
        %v4424 = vpop.f32.mrf.mxu0
        %v4425 = vadd.f32 0.0, %v4424
        %4426 = vdwg.mxu0
        %v4429 = vrot.slane %v4405, 1
        %v4430 = vrot.slane %v4425, 1
        %v4431 = vrot.slane %v4405, 2
        %v4432 = vrot.slane %v4425, 2
        %v4433 = vrot.slane %v4405, 3
        %v4434 = vrot.slane %v4425, 3
        %v4435 = vrot.slane %v4405, 4
        %v4436 = vrot.slane %v4425, 4
        %v4437 = vrot.slane %v4405, 5
        %v4438 = vrot.slane %v4425, 5
        %v4439 = vrot.slane %v4405, 6
        %v4440 = vrot.slane %v4425, 6
        %v4441 = vrot.slane %v4405, 7
        %v4442 = vrot.slane %v4425, 7
        %v4459 = vadd.f32 %v492, %v4429
        %v4460 = vadd.f32 %v533, %v4430
        %v4461 = vadd.f32 %v495, %v4431
        %v4462 = vadd.f32 %v536, %v4432
        %v4463 = vadd.f32 %v498, %v4433
        %v4464 = vadd.f32 %v539, %v4434
        %v4465 = vadd.f32 %v501, %v4435
        %v4466 = vadd.f32 %v542, %v4436
        %v4467 = vadd.f32 %v504, %v4437
        %v4468 = vadd.f32 %v545, %v4438
        %v4469 = vadd.f32 %v507, %v4439
        %v4470 = vadd.f32 %v548, %v4440
        %v4471 = vadd.f32 %v510, %v4441
        %v4472 = vadd.f32 %v551, %v4442
        %v4473 = vadd.f32 %v513, %v4405
        %v4474 = vadd.f32 %v554, %v4425
        %v4475 = vxor.u32 %v4459, 2147483648
        %v4476 = vxor.u32 %v4460, 2147483648
        %v4477 = vxor.u32 %v4461, 2147483648
        %v4478 = vxor.u32 %v4462, 2147483648
        %v4479 = vxor.u32 %v4463, 2147483648
        %v4480 = vxor.u32 %v4464, 2147483648
        %v4481 = vxor.u32 %v4465, 2147483648
        %v4482 = vxor.u32 %v4466, 2147483648
        %v4483 = vxor.u32 %v4467, 2147483648
        %v4484 = vxor.u32 %v4468, 2147483648
        %v4485 = vxor.u32 %v4469, 2147483648
        %v4486 = vxor.u32 %v4470, 2147483648
        %v4487 = vxor.u32 %v4471, 2147483648
        %v4488 = vxor.u32 %v4472, 2147483648
        %v4489 = vxor.u32 %v4473, 2147483648
        %v4490 = vxor.u32 %v4474, 2147483648
        %v4491 = vmul.f32 %v4475, 1.442695
        %v4492 = vpow.pop %v4491
        %v4493 = vmul.f32 %v4476, 1.442695
        %v4494 = vpow.pop %v4493
        %v4495 = vmul.f32 %v4477, 1.442695
        %v4496 = vpow.pop %v4495
        %v4497 = vmul.f32 %v4478, 1.442695
        %v4498 = vpow.pop %v4497
        %v4499 = vmul.f32 %v4479, 1.442695
        %v4500 = vpow.pop %v4499
        %v4501 = vmul.f32 %v4480, 1.442695
        %v4502 = vpow.pop %v4501
        %v4503 = vmul.f32 %v4481, 1.442695
        %v4504 = vpow.pop %v4503
        %v4505 = vmul.f32 %v4482, 1.442695
        %v4506 = vpow.pop %v4505
        %v4507 = vmul.f32 %v4483, 1.442695
        %v4508 = vpow.pop %v4507
        %v4509 = vmul.f32 %v4484, 1.442695
        %v4510 = vpow.pop %v4509
        %v4511 = vmul.f32 %v4485, 1.442695
        %v4512 = vpow.pop %v4511
        %v4513 = vmul.f32 %v4486, 1.442695
        %v4514 = vpow.pop %v4513
        %v4515 = vmul.f32 %v4487, 1.442695
        %v4516 = vpow.pop %v4515
        %v4517 = vmul.f32 %v4488, 1.442695
        %v4518 = vpow.pop %v4517
        %v4519 = vmul.f32 %v4489, 1.442695
        %v4520 = vpow.pop %v4519
        %v4521 = vmul.f32 %v4490, 1.442695
        %v4522 = vpow.pop %v4521
        %v4523 = vadd.f32 %v4492, 1.0
        %v4524 = vadd.f32 %v4494, 1.0
        %v4525 = vadd.f32 %v4496, 1.0
        %v4526 = vadd.f32 %v4498, 1.0
        %v4527 = vadd.f32 %v4500, 1.0
        %v4528 = vadd.f32 %v4502, 1.0
        %v4529 = vadd.f32 %v4504, 1.0
        %v4530 = vadd.f32 %v4506, 1.0
        %v4531 = vadd.f32 %v4508, 1.0
        %v4532 = vadd.f32 %v4510, 1.0
        %v4533 = vadd.f32 %v4512, 1.0
        %v4534 = vadd.f32 %v4514, 1.0
        %v4535 = vadd.f32 %v4516, 1.0
        %v4536 = vadd.f32 %v4518, 1.0
        %v4537 = vadd.f32 %v4520, 1.0
        %v4538 = vadd.f32 %v4522, 1.0
        %v4539 = vrcp.pop %v4523
        %v4540 = vmul.f32 %v4523, %v4539
        %v4541 = vsub.f32 1.0, %v4540
        %v4542 = vmul.f32 %v4539, %v4541
        %v4543 = vadd.f32 %v4539, %v4542
        %vm4544 = vweird.f32 %v4523
        %vm4545 = vweird.f32 %v4539
        %vm4546 = vmor %vm4544, %vm4545
        %v4547 = vsel %vm4546, %v4539, %v4543
        %v4548 = vand.u32 2147483647, %v4523
        %vm4549 = vcmp.eq.f32.partialorder %v4548, 8.507059e+37
        %v4550 = vand.u32 %v4523, 2147483648
        %v4551 = vor.u32 1.1754944e-38, %v4550
        %v4552 = vsel %vm4549, %v4551, %v4547
        %v4553 = vmul.f32 1.0, %v4552
        %v4554 = vrcp.pop %v4524
        %v4555 = vmul.f32 %v4524, %v4554
        %v4556 = vsub.f32 1.0, %v4555
        %v4557 = vmul.f32 %v4554, %v4556
        %v4558 = vadd.f32 %v4554, %v4557
        %vm4559 = vweird.f32 %v4524
        %vm4560 = vweird.f32 %v4554
        %vm4561 = vmor %vm4559, %vm4560
        %v4562 = vsel %vm4561, %v4554, %v4558
        %v4563 = vand.u32 2147483647, %v4524
        %vm4564 = vcmp.eq.f32.partialorder %v4563, 8.507059e+37
        %v4565 = vand.u32 %v4524, 2147483648
        %v4566 = vor.u32 1.1754944e-38, %v4565
        %v4567 = vsel %vm4564, %v4566, %v4562
        %v4568 = vmul.f32 1.0, %v4567
        %v4569 = vrcp.pop %v4525
        %v4570 = vmul.f32 %v4525, %v4569
        %v4571 = vsub.f32 1.0, %v4570
        %v4572 = vmul.f32 %v4569, %v4571
        %v4573 = vadd.f32 %v4569, %v4572
        %vm4574 = vweird.f32 %v4525
        %vm4575 = vweird.f32 %v4569
        %vm4576 = vmor %vm4574, %vm4575
        %v4577 = vsel %vm4576, %v4569, %v4573
        %v4578 = vand.u32 2147483647, %v4525
        %vm4579 = vcmp.eq.f32.partialorder %v4578, 8.507059e+37
        %v4580 = vand.u32 %v4525, 2147483648
        %v4581 = vor.u32 1.1754944e-38, %v4580
        %v4582 = vsel %vm4579, %v4581, %v4577
        %v4583 = vmul.f32 1.0, %v4582
        %v4584 = vrcp.pop %v4526
        %v4585 = vmul.f32 %v4526, %v4584
        %v4586 = vsub.f32 1.0, %v4585
        %v4587 = vmul.f32 %v4584, %v4586
        %v4588 = vadd.f32 %v4584, %v4587
        %vm4589 = vweird.f32 %v4526
        %vm4590 = vweird.f32 %v4584
        %vm4591 = vmor %vm4589, %vm4590
        %v4592 = vsel %vm4591, %v4584, %v4588
        %v4593 = vand.u32 2147483647, %v4526
        %vm4594 = vcmp.eq.f32.partialorder %v4593, 8.507059e+37
        %v4595 = vand.u32 %v4526, 2147483648
        %v4596 = vor.u32 1.1754944e-38, %v4595
        %v4597 = vsel %vm4594, %v4596, %v4592
        %v4598 = vmul.f32 1.0, %v4597
        %v4599 = vrcp.pop %v4527
        %v4600 = vmul.f32 %v4527, %v4599
        %v4601 = vsub.f32 1.0, %v4600
        %v4602 = vmul.f32 %v4599, %v4601
        %v4603 = vadd.f32 %v4599, %v4602
        %vm4604 = vweird.f32 %v4527
        %vm4605 = vweird.f32 %v4599
        %vm4606 = vmor %vm4604, %vm4605
        %v4607 = vsel %vm4606, %v4599, %v4603
        %v4608 = vand.u32 2147483647, %v4527
        %vm4609 = vcmp.eq.f32.partialorder %v4608, 8.507059e+37
        %v4610 = vand.u32 %v4527, 2147483648
        %v4611 = vor.u32 1.1754944e-38, %v4610
        %v4612 = vsel %vm4609, %v4611, %v4607
        %v4613 = vmul.f32 1.0, %v4612
        %v4614 = vrcp.pop %v4528
        %v4615 = vmul.f32 %v4528, %v4614
        %v4616 = vsub.f32 1.0, %v4615
        %v4617 = vmul.f32 %v4614, %v4616
        %v4618 = vadd.f32 %v4614, %v4617
        %vm4619 = vweird.f32 %v4528
        %vm4620 = vweird.f32 %v4614
        %vm4621 = vmor %vm4619, %vm4620
        %v4622 = vsel %vm4621, %v4614, %v4618
        %v4623 = vand.u32 2147483647, %v4528
        %vm4624 = vcmp.eq.f32.partialorder %v4623, 8.507059e+37
        %v4625 = vand.u32 %v4528, 2147483648
        %v4626 = vor.u32 1.1754944e-38, %v4625
        %v4627 = vsel %vm4624, %v4626, %v4622
        %v4628 = vmul.f32 1.0, %v4627
        %v4629 = vrcp.pop %v4529
        %v4630 = vmul.f32 %v4529, %v4629
        %v4631 = vsub.f32 1.0, %v4630
        %v4632 = vmul.f32 %v4629, %v4631
        %v4633 = vadd.f32 %v4629, %v4632
        %vm4634 = vweird.f32 %v4529
        %vm4635 = vweird.f32 %v4629
        %vm4636 = vmor %vm4634, %vm4635
        %v4637 = vsel %vm4636, %v4629, %v4633
        %v4638 = vand.u32 2147483647, %v4529
        %vm4639 = vcmp.eq.f32.partialorder %v4638, 8.507059e+37
        %v4640 = vand.u32 %v4529, 2147483648
        %v4641 = vor.u32 1.1754944e-38, %v4640
        %v4642 = vsel %vm4639, %v4641, %v4637
        %v4643 = vmul.f32 1.0, %v4642
        %v4644 = vrcp.pop %v4530
        %v4645 = vmul.f32 %v4530, %v4644
        %v4646 = vsub.f32 1.0, %v4645
        %v4647 = vmul.f32 %v4644, %v4646
        %v4648 = vadd.f32 %v4644, %v4647
        %vm4649 = vweird.f32 %v4530
        %vm4650 = vweird.f32 %v4644
        %vm4651 = vmor %vm4649, %vm4650
        %v4652 = vsel %vm4651, %v4644, %v4648
        %v4653 = vand.u32 2147483647, %v4530
        %vm4654 = vcmp.eq.f32.partialorder %v4653, 8.507059e+37
        %v4655 = vand.u32 %v4530, 2147483648
        %v4656 = vor.u32 1.1754944e-38, %v4655
        %v4657 = vsel %vm4654, %v4656, %v4652
        %v4658 = vmul.f32 1.0, %v4657
        %v4659 = vrcp.pop %v4531
        %v4660 = vmul.f32 %v4531, %v4659
        %v4661 = vsub.f32 1.0, %v4660
        %v4662 = vmul.f32 %v4659, %v4661
        %v4663 = vadd.f32 %v4659, %v4662
        %vm4664 = vweird.f32 %v4531
        %vm4665 = vweird.f32 %v4659
        %vm4666 = vmor %vm4664, %vm4665
        %v4667 = vsel %vm4666, %v4659, %v4663
        %v4668 = vand.u32 2147483647, %v4531
        %vm4669 = vcmp.eq.f32.partialorder %v4668, 8.507059e+37
        %v4670 = vand.u32 %v4531, 2147483648
        %v4671 = vor.u32 1.1754944e-38, %v4670
        %v4672 = vsel %vm4669, %v4671, %v4667
        %v4673 = vmul.f32 1.0, %v4672
        %v4674 = vrcp.pop %v4532
        %v4675 = vmul.f32 %v4532, %v4674
        %v4676 = vsub.f32 1.0, %v4675
        %v4677 = vmul.f32 %v4674, %v4676
        %v4678 = vadd.f32 %v4674, %v4677
        %vm4679 = vweird.f32 %v4532
        %vm4680 = vweird.f32 %v4674
        %vm4681 = vmor %vm4679, %vm4680
        %v4682 = vsel %vm4681, %v4674, %v4678
        %v4683 = vand.u32 2147483647, %v4532
        %vm4684 = vcmp.eq.f32.partialorder %v4683, 8.507059e+37
        %v4685 = vand.u32 %v4532, 2147483648
        %v4686 = vor.u32 1.1754944e-38, %v4685
        %v4687 = vsel %vm4684, %v4686, %v4682
        %v4688 = vmul.f32 1.0, %v4687
        %v4689 = vrcp.pop %v4533
        %v4690 = vmul.f32 %v4533, %v4689
        %v4691 = vsub.f32 1.0, %v4690
        %v4692 = vmul.f32 %v4689, %v4691
        %v4693 = vadd.f32 %v4689, %v4692
        %vm4694 = vweird.f32 %v4533
        %vm4695 = vweird.f32 %v4689
        %vm4696 = vmor %vm4694, %vm4695
        %v4697 = vsel %vm4696, %v4689, %v4693
        %v4698 = vand.u32 2147483647, %v4533
        %vm4699 = vcmp.eq.f32.partialorder %v4698, 8.507059e+37
        %v4700 = vand.u32 %v4533, 2147483648
        %v4701 = vor.u32 1.1754944e-38, %v4700
        %v4702 = vsel %vm4699, %v4701, %v4697
        %v4703 = vmul.f32 1.0, %v4702
        %v4704 = vrcp.pop %v4534
        %v4705 = vmul.f32 %v4534, %v4704
        %v4706 = vsub.f32 1.0, %v4705
        %v4707 = vmul.f32 %v4704, %v4706
        %v4708 = vadd.f32 %v4704, %v4707
        %vm4709 = vweird.f32 %v4534
        %vm4710 = vweird.f32 %v4704
        %vm4711 = vmor %vm4709, %vm4710
        %v4712 = vsel %vm4711, %v4704, %v4708
        %v4713 = vand.u32 2147483647, %v4534
        %vm4714 = vcmp.eq.f32.partialorder %v4713, 8.507059e+37
        %v4715 = vand.u32 %v4534, 2147483648
        %v4716 = vor.u32 1.1754944e-38, %v4715
        %v4717 = vsel %vm4714, %v4716, %v4712
        %v4718 = vmul.f32 1.0, %v4717
        %v4719 = vrcp.pop %v4535
        %v4720 = vmul.f32 %v4535, %v4719
        %v4721 = vsub.f32 1.0, %v4720
        %v4722 = vmul.f32 %v4719, %v4721
        %v4723 = vadd.f32 %v4719, %v4722
        %vm4724 = vweird.f32 %v4535
        %vm4725 = vweird.f32 %v4719
        %vm4726 = vmor %vm4724, %vm4725
        %v4727 = vsel %vm4726, %v4719, %v4723
        %v4728 = vand.u32 2147483647, %v4535
        %vm4729 = vcmp.eq.f32.partialorder %v4728, 8.507059e+37
        %v4730 = vand.u32 %v4535, 2147483648
        %v4731 = vor.u32 1.1754944e-38, %v4730
        %v4732 = vsel %vm4729, %v4731, %v4727
        %v4733 = vmul.f32 1.0, %v4732
        %v4734 = vrcp.pop %v4536
        %v4735 = vmul.f32 %v4536, %v4734
        %v4736 = vsub.f32 1.0, %v4735
        %v4737 = vmul.f32 %v4734, %v4736
        %v4738 = vadd.f32 %v4734, %v4737
        %vm4739 = vweird.f32 %v4536
        %vm4740 = vweird.f32 %v4734
        %vm4741 = vmor %vm4739, %vm4740
        %v4742 = vsel %vm4741, %v4734, %v4738
        %v4743 = vand.u32 2147483647, %v4536
        %vm4744 = vcmp.eq.f32.partialorder %v4743, 8.507059e+37
        %v4745 = vand.u32 %v4536, 2147483648
        %v4746 = vor.u32 1.1754944e-38, %v4745
        %v4747 = vsel %vm4744, %v4746, %v4742
        %v4748 = vmul.f32 1.0, %v4747
        %v4749 = vrcp.pop %v4537
        %v4750 = vmul.f32 %v4537, %v4749
        %v4751 = vsub.f32 1.0, %v4750
        %v4752 = vmul.f32 %v4749, %v4751
        %v4753 = vadd.f32 %v4749, %v4752
        %vm4754 = vweird.f32 %v4537
        %vm4755 = vweird.f32 %v4749
        %vm4756 = vmor %vm4754, %vm4755
        %v4757 = vsel %vm4756, %v4749, %v4753
        %v4758 = vand.u32 2147483647, %v4537
        %vm4759 = vcmp.eq.f32.partialorder %v4758, 8.507059e+37
        %v4760 = vand.u32 %v4537, 2147483648
        %v4761 = vor.u32 1.1754944e-38, %v4760
        %v4762 = vsel %vm4759, %v4761, %v4757
        %v4763 = vmul.f32 1.0, %v4762
        %v4764 = vrcp.pop %v4538
        %v4765 = vmul.f32 %v4538, %v4764
        %v4766 = vsub.f32 1.0, %v4765
        %v4767 = vmul.f32 %v4764, %v4766
        %v4768 = vadd.f32 %v4764, %v4767
        %vm4769 = vweird.f32 %v4538
        %vm4770 = vweird.f32 %v4764
        %vm4771 = vmor %vm4769, %vm4770
        %v4772 = vsel %vm4771, %v4764, %v4768
        %v4773 = vand.u32 2147483647, %v4538
        %vm4774 = vcmp.eq.f32.partialorder %v4773, 8.507059e+37
        %v4775 = vand.u32 %v4538, 2147483648
        %v4776 = vor.u32 1.1754944e-38, %v4775
        %v4777 = vsel %vm4774, %v4776, %v4772
        %v4778 = vmul.f32 1.0, %v4777
        %v4779 = vtanh.pop %v4460
        %v4780 = vtanh.pop %v4462
        %v4781 = vtanh.pop %v4464
        %v4782 = vtanh.pop %v4466
        %v4783 = vtanh.pop %v4468
        %v4784 = vtanh.pop %v4470
        %v4785 = vtanh.pop %v4472
        %v4786 = vtanh.pop %v4474
        %v4795 = vrot.slane %v4314, 7
        %v4796 = vrot.slane %v4315, 7
        %v4797 = vrot.slane %v4316, 7
        %v4798 = vrot.slane %v4317, 7
        %v4799 = vrot.slane %v4318, 7
        %v4800 = vrot.slane %v4319, 7
        %v4801 = vrot.slane %v4320, 7
        %v4802 = vrot.slane %v4321, 7
        %v4811 = vmul.f32 %v4553, %v4795
        %v4812 = vmul.f32 %v4583, %v4796
        %v4813 = vmul.f32 %v4613, %v4797
        %v4814 = vmul.f32 %v4643, %v4798
        %v4815 = vmul.f32 %v4673, %v4799
        %v4816 = vmul.f32 %v4703, %v4800
        %v4817 = vmul.f32 %v4733, %v4801
        %v4818 = vmul.f32 %v4763, %v4802
        %v4819 = vmul.f32 %v4553, %v4779
        %v4820 = vmul.f32 %v4583, %v4780
        %v4821 = vmul.f32 %v4613, %v4781
        %v4822 = vmul.f32 %v4643, %v4782
        %v4823 = vmul.f32 %v4673, %v4783
        %v4824 = vmul.f32 %v4703, %v4784
        %v4825 = vmul.f32 %v4733, %v4785
        %v4826 = vmul.f32 %v4763, %v4786
        %4835 = vrot.lane.b32.xlu0 %v4819, 64
        %v4836 = vpop.permute.xlu0 %4835
        %4837 = vrot.lane.b32.xlu0 %v4820, 64
        %v4838 = vpop.permute.xlu0 %4837
        %4839 = vrot.lane.b32.xlu0 %v4821, 64
        %v4840 = vpop.permute.xlu0 %4839
        %4841 = vrot.lane.b32.xlu0 %v4822, 64
        %v4842 = vpop.permute.xlu0 %4841
        %4843 = vrot.lane.b32.xlu0 %v4823, 64
        %v4844 = vpop.permute.xlu0 %4843
        %4845 = vrot.lane.b32.xlu0 %v4824, 64
        %v4846 = vpop.permute.xlu0 %4845
        %4847 = vrot.lane.b32.xlu0 %v4825, 64
        %v4848 = vpop.permute.xlu0 %4847
        %4849 = vrot.lane.b32.xlu0 %v4826, 64
        %v4850 = vpop.permute.xlu0 %4849
        %v4859 = vadd.f32 %v4811, %v4836
        %v4860 = vadd.f32 %v4812, %v4838
        %v4861 = vadd.f32 %v4813, %v4840
        %v4862 = vadd.f32 %v4814, %v4842
        %v4863 = vadd.f32 %v4815, %v4844
        %v4864 = vadd.f32 %v4816, %v4846
        %v4865 = vadd.f32 %v4817, %v4848
        %v4866 = vadd.f32 %v4818, %v4850
        %v4867 = vtanh.pop %v4859
        %v4868 = vtanh.pop %v4860
        %v4869 = vtanh.pop %v4861
        %v4870 = vtanh.pop %v4862
        %v4871 = vtanh.pop %v4863
        %v4872 = vtanh.pop %v4864
        %v4873 = vtanh.pop %v4865
        %v4874 = vtanh.pop %v4866
        %v4875 = vmul.f32 %v4568, %v4867
        %v4876 = vmul.f32 %v4598, %v4868
        %v4877 = vmul.f32 %v4628, %v4869
        %v4878 = vmul.f32 %v4658, %v4870
        %v4879 = vmul.f32 %v4688, %v4871
        %v4880 = vmul.f32 %v4718, %v4872
        %v4881 = vmul.f32 %v4748, %v4873
        %v4882 = vmul.f32 %v4778, %v4874
        %v4891 = vrot.slane %v4876, 7
        %v4892 = vrot.slane %v4877, 6
        %v4893 = vsel %vm1091, %v4892, %v4891
        %v4894 = vrot.slane %v4878, 5
        %v4895 = vsel %vm1094, %v4894, %v4893
        %v4896 = vrot.slane %v4879, 4
        %v4897 = vsel %vm1097, %v4896, %v4895
        %v4898 = vrot.slane %v4880, 3
        %v4899 = vsel %vm1100, %v4898, %v4897
        %v4900 = vrot.slane %v4881, 2
        %v4901 = vsel %vm1103, %v4900, %v4899
        %v4902 = vrot.slane %v4882, 1
        %v4903 = vsel %vm1106, %v4902, %v4901
        %4904 = vrot.lane.b32.xlu0 %v4875, 64
        %v4905 = vpop.permute.xlu0 %4904
        %4906 = vrot.lane.b32.xlu0 %v4903, 64
        %v4907 = vpop.permute.xlu0 %4906
        %vm4910 = vcmask 523271
        %4911 = vst.msk [vmem:[#allocation6 + $0x31] sm:$0x80] %vm4910, %v4905
        %vm4912 = vcmask 522240
        %4913 = vst.msk [vmem:[#allocation6 + $0x39] sm:$0x7f] %vm4912, %v4907
        %4914 = vst.msk [vmem:[#allocation2 - $0x7] sm:$0x80] %vm4910, %v4905
        %4915 = vst.msk [vmem:[#allocation2 + $0x1] sm:$0x7f] %vm4912, %v4907
        %v4924 = vrot.slane %v4860, 7
        %v4925 = vrot.slane %v4861, 6
        %v4926 = vsel %vm1091, %v4925, %v4924
        %v4927 = vrot.slane %v4862, 5
        %v4928 = vsel %vm1094, %v4927, %v4926
        %v4929 = vrot.slane %v4863, 4
        %v4930 = vsel %vm1097, %v4929, %v4928
        %v4931 = vrot.slane %v4864, 3
        %v4932 = vsel %vm1100, %v4931, %v4930
        %v4933 = vrot.slane %v4865, 2
        %v4934 = vsel %vm1103, %v4933, %v4932
        %v4935 = vrot.slane %v4866, 1
        %v4936 = vsel %vm1106, %v4935, %v4934
        %4937 = vrot.lane.b32.xlu0 %v4859, 64
        %v4938 = vpop.permute.xlu0 %4937
        %4939 = vrot.lane.b32.xlu0 %v4936, 64
        %v4940 = vpop.permute.xlu0 %4939
        %4943 = vst.msk [vmem:[#allocation3 - $0x7] sm:$0x80] %vm4910, %v4938
        %4944 = vst.msk [vmem:[#allocation3 + $0x1] sm:$0x7f] %vm4912, %v4940
        %v4945 = vld [vmem:[#allocation6] sm:$0xff]
        %v4946 = vld [vmem:[#allocation6 + $0x8] sm:$0xff]
        %v4947 = vld [vmem:[#allocation6 + $0x10] sm:$0xff]
        %v4948 = vld [vmem:[#allocation6 + $0x18] sm:$0xff]
        %v4949 = vld [vmem:[#allocation6 + $0x20] sm:$0xff]
        %v4950 = vld [vmem:[#allocation6 + $0x28] sm:$0xff]
        %v4951 = vld [vmem:[#allocation6 + $0x30] sm:$0xff]
        %v4952 = vld [vmem:[#allocation6 + $0x38] sm:$0xff]
        %v4953 = vld [vmem:[#allocation8] sm:$0xff]
        %v4954 = vld [vmem:[#allocation8 + $0x8] sm:$0xff]
        %v4955 = vld [vmem:[#allocation8 + $0x10] sm:$0xff]
        %v4956 = vld [vmem:[#allocation8 + $0x18] sm:$0xff]
        %v4957 = vld [vmem:[#allocation8 + $0x20] sm:$0xff]
        %v4958 = vld [vmem:[#allocation8 + $0x28] sm:$0xff]
        %v4959 = vld [vmem:[#allocation8 + $0x30] sm:$0xff]
        %v4960 = vld [vmem:[#allocation8 + $0x38] sm:$0xff]
        %v4961 = vld [vmem:[#allocation8 + $0x40] sm:$0xff]
        %v4962 = vld [vmem:[#allocation8 + $0x48] sm:$0xff]
        %v4963 = vld [vmem:[#allocation8 + $0x50] sm:$0xff]
        %v4964 = vld [vmem:[#allocation8 + $0x58] sm:$0xff]
        %v4965 = vld [vmem:[#allocation8 + $0x60] sm:$0xff]
        %v4966 = vld [vmem:[#allocation8 + $0x68] sm:$0xff]
        %v4967 = vld [vmem:[#allocation8 + $0x70] sm:$0xff]
        %v4968 = vld [vmem:[#allocation8 + $0x78] sm:$0xff]
        %v4969 = vld [vmem:[%s6] sm:$0x3]
        %v4971 = vperm.slane %v4969, 0
        %v4972 = vperm.slane %v4969, 1
        %v4976 = vsel %vm574, %v4945, 0
        %v4979 = vsel %vm574, %v4946, 0
        %v4982 = vsel %vm574, %v4947, 0
        %v4985 = vsel %vm574, %v4948, 0
        %v4988 = vsel %vm574, %v4949, 0
        %v4991 = vsel %vm574, %v4950, 0
        %v4994 = vsel %vm574, %v4951, 0
        %v4997 = vsel %vm574, %v4952, 0
        %4999 = vmatpush.msra.mxu0 0.0
        %5000 = vmatpush.msra.mxu0 0.0
        %5001 = vmatpush.msra.mxu0 0.0
        %5002 = vmatpush.msra.mxu0 0.0
        %5003 = vmatpush.msra.mxu0 0.0
        %5004 = vmatpush.msra.mxu0 0.0
        %5005 = vmatpush.msra.mxu0 0.0
        %5006 = vmatpush.msra.mxu0 0.0
        %5007 = vmatpush.msra.mxu0 %v4967
        %5008 = vmatpush.msra.mxu0 %v4965
        %5009 = vmatpush.msra.mxu0 %v4963
        %5010 = vmatpush.msra.mxu0 %v4961
        %5011 = vmatpush.msra.mxu0 %v4959
        %5012 = vmatpush.msra.mxu0 %v4957
        %5013 = vmatpush.msra.mxu0 %v4955
        %5014 = vmatpush.msra.mxu0 %v4953
        %5015 = vmatmul.f32.gmra.mxu0 %v4976
        %v5016 = vpop.f32.mrf.mxu0
        %v5017 = vadd.f32 %v4971, %v5016
        %5018 = vmatmul.f32.gmra.mxu0 %v4979
        %v5019 = vpop.f32.mrf.mxu0
        %v5020 = vadd.f32 %v4971, %v5019
        %5021 = vmatmul.f32.gmra.mxu0 %v4982
        %v5022 = vpop.f32.mrf.mxu0
        %v5023 = vadd.f32 %v4971, %v5022
        %5024 = vmatmul.f32.gmra.mxu0 %v4985
        %v5025 = vpop.f32.mrf.mxu0
        %v5026 = vadd.f32 %v4971, %v5025
        %5027 = vmatmul.f32.gmra.mxu0 %v4988
        %v5028 = vpop.f32.mrf.mxu0
        %v5029 = vadd.f32 %v4971, %v5028
        %5030 = vmatmul.f32.gmra.mxu0 %v4991
        %v5031 = vpop.f32.mrf.mxu0
        %v5032 = vadd.f32 %v4971, %v5031
        %5033 = vmatmul.f32.gmra.mxu0 %v4994
        %v5034 = vpop.f32.mrf.mxu0
        %v5035 = vadd.f32 %v4971, %v5034
        %5036 = vmatmul.f32.gmra.mxu0 %v4997
        %v5037 = vpop.f32.mrf.mxu0
        %v5038 = vadd.f32 %v4971, %v5037
        %5039 = vdwg.mxu0
        %5040 = vmatpush.msra.mxu0 0.0
        %5041 = vmatpush.msra.mxu0 0.0
        %5042 = vmatpush.msra.mxu0 0.0
        %5043 = vmatpush.msra.mxu0 0.0
        %5044 = vmatpush.msra.mxu0 0.0
        %5045 = vmatpush.msra.mxu0 0.0
        %5046 = vmatpush.msra.mxu0 0.0
        %5047 = vmatpush.msra.mxu0 0.0
        %5048 = vmatpush.msra.mxu0 %v4968
        %5049 = vmatpush.msra.mxu0 %v4966
        %5050 = vmatpush.msra.mxu0 %v4964
        %5051 = vmatpush.msra.mxu0 %v4962
        %5052 = vmatpush.msra.mxu0 %v4960
        %5053 = vmatpush.msra.mxu0 %v4958
        %5054 = vmatpush.msra.mxu0 %v4956
        %5055 = vmatpush.msra.mxu0 %v4954
        %5056 = vmatmul.f32.gmra.mxu0 %v4976
        %v5057 = vpop.f32.mrf.mxu0
        %v5058 = vadd.f32 %v4972, %v5057
        %5059 = vmatmul.f32.gmra.mxu0 %v4979
        %v5060 = vpop.f32.mrf.mxu0
        %v5061 = vadd.f32 %v4972, %v5060
        %5062 = vmatmul.f32.gmra.mxu0 %v4982
        %v5063 = vpop.f32.mrf.mxu0
        %v5064 = vadd.f32 %v4972, %v5063
        %5065 = vmatmul.f32.gmra.mxu0 %v4985
        %v5066 = vpop.f32.mrf.mxu0
        %v5067 = vadd.f32 %v4972, %v5066
        %5068 = vmatmul.f32.gmra.mxu0 %v4988
        %v5069 = vpop.f32.mrf.mxu0
        %v5070 = vadd.f32 %v4972, %v5069
        %5071 = vmatmul.f32.gmra.mxu0 %v4991
        %v5072 = vpop.f32.mrf.mxu0
        %v5073 = vadd.f32 %v4972, %v5072
        %5074 = vmatmul.f32.gmra.mxu0 %v4994
        %v5075 = vpop.f32.mrf.mxu0
        %v5076 = vadd.f32 %v4972, %v5075
        %5077 = vmatmul.f32.gmra.mxu0 %v4997
        %v5078 = vpop.f32.mrf.mxu0
        %v5079 = vadd.f32 %v4972, %v5078
        %5080 = vdwg.mxu0
        %v5081 = vld [vmem:[#allocation11] sm:$0xff]
        %v5082 = vld [vmem:[#allocation11 + $0x8] sm:$0xff]
        %v5083 = vld [vmem:[#allocation11 + $0x10] sm:$0xff]
        %v5084 = vld [vmem:[#allocation11 + $0x18] sm:$0xff]
        %v5085 = vld [vmem:[#allocation11 + $0x20] sm:$0xff]
        %v5086 = vld [vmem:[#allocation11 + $0x28] sm:$0xff]
        %v5087 = vld [vmem:[#allocation11 + $0x30] sm:$0xff]
        %v5088 = vld [vmem:[#allocation11 + $0x38] sm:$0xff]
        %v5089 = vld [vmem:[#allocation11 + $0x40] sm:$0xff]
        %v5090 = vld [vmem:[#allocation11 + $0x48] sm:$0xff]
        %v5091 = vld [vmem:[#allocation11 + $0x50] sm:$0xff]
        %v5092 = vld [vmem:[#allocation11 + $0x58] sm:$0xff]
        %v5093 = vld [vmem:[#allocation11 + $0x60] sm:$0xff]
        %v5094 = vld [vmem:[#allocation11 + $0x68] sm:$0xff]
        %v5095 = vld [vmem:[#allocation11 + $0x70] sm:$0xff]
        %v5096 = vld [vmem:[#allocation11 + $0x78] sm:$0xff]
        %v5097 = vld [vmem:[#allocation4] sm:$0xff]
        %v5098 = vld [vmem:[#allocation5] sm:$0xff]
        %v5100 = vsel %vm574, %v5097, 0
        %5102 = vmatpush.msra.mxu0 0.0
        %5103 = vmatpush.msra.mxu0 0.0
        %5104 = vmatpush.msra.mxu0 0.0
        %5105 = vmatpush.msra.mxu0 0.0
        %5106 = vmatpush.msra.mxu0 0.0
        %5107 = vmatpush.msra.mxu0 0.0
        %5108 = vmatpush.msra.mxu0 0.0
        %5109 = vmatpush.msra.mxu0 0.0
        %5110 = vmatpush.msra.mxu0 %v5095
        %5111 = vmatpush.msra.mxu0 %v5093
        %5112 = vmatpush.msra.mxu0 %v5091
        %5113 = vmatpush.msra.mxu0 %v5089
        %5114 = vmatpush.msra.mxu0 %v5087
        %5115 = vmatpush.msra.mxu0 %v5085
        %5116 = vmatpush.msra.mxu0 %v5083
        %5117 = vmatpush.msra.mxu0 %v5081
        %5118 = vmatmul.f32.gmra.mxu0 %v5100
        %v5119 = vpop.f32.mrf.mxu0
        %v5120 = vadd.f32 0.0, %v5119
        %5121 = vdwg.mxu0
        %5122 = vmatpush.msra.mxu0 0.0
        %5123 = vmatpush.msra.mxu0 0.0
        %5124 = vmatpush.msra.mxu0 0.0
        %5125 = vmatpush.msra.mxu0 0.0
        %5126 = vmatpush.msra.mxu0 0.0
        %5127 = vmatpush.msra.mxu0 0.0
        %5128 = vmatpush.msra.mxu0 0.0
        %5129 = vmatpush.msra.mxu0 0.0
        %5130 = vmatpush.msra.mxu0 %v5096
        %5131 = vmatpush.msra.mxu0 %v5094
        %5132 = vmatpush.msra.mxu0 %v5092
        %5133 = vmatpush.msra.mxu0 %v5090
        %5134 = vmatpush.msra.mxu0 %v5088
        %5135 = vmatpush.msra.mxu0 %v5086
        %5136 = vmatpush.msra.mxu0 %v5084
        %5137 = vmatpush.msra.mxu0 %v5082
        %5138 = vmatmul.f32.gmra.mxu0 %v5100
        %v5139 = vpop.f32.mrf.mxu0
        %v5140 = vadd.f32 0.0, %v5139
        %5141 = vdwg.mxu0
        %v5142 = vadd.f32 %v5017, %v5120
        %v5143 = vadd.f32 %v5058, %v5140
        %v5144 = vxor.u32 %v5142, 2147483648
        %v5145 = vxor.u32 %v5143, 2147483648
        %v5146 = vmul.f32 %v5144, 1.442695
        %v5147 = vpow.pop %v5146
        %v5148 = vmul.f32 %v5145, 1.442695
        %v5149 = vpow.pop %v5148
        %v5150 = vadd.f32 %v5147, 1.0
        %v5151 = vadd.f32 %v5149, 1.0
        %v5152 = vrcp.pop %v5150
        %v5153 = vmul.f32 %v5150, %v5152
        %v5154 = vsub.f32 1.0, %v5153
        %v5155 = vmul.f32 %v5152, %v5154
        %v5156 = vadd.f32 %v5152, %v5155
        %vm5157 = vweird.f32 %v5150
        %vm5158 = vweird.f32 %v5152
        %vm5159 = vmor %vm5157, %vm5158
        %v5160 = vsel %vm5159, %v5152, %v5156
        %v5161 = vand.u32 2147483647, %v5150
        %vm5162 = vcmp.eq.f32.partialorder %v5161, 8.507059e+37
        %v5163 = vand.u32 %v5150, 2147483648
        %v5164 = vor.u32 1.1754944e-38, %v5163
        %v5165 = vsel %vm5162, %v5164, %v5160
        %v5166 = vmul.f32 1.0, %v5165
        %v5167 = vrcp.pop %v5151
        %v5168 = vmul.f32 %v5151, %v5167
        %v5169 = vsub.f32 1.0, %v5168
        %v5170 = vmul.f32 %v5167, %v5169
        %v5171 = vadd.f32 %v5167, %v5170
        %vm5172 = vweird.f32 %v5151
        %vm5173 = vweird.f32 %v5167
        %vm5174 = vmor %vm5172, %vm5173
        %v5175 = vsel %vm5174, %v5167, %v5171
        %v5176 = vand.u32 2147483647, %v5151
        %vm5177 = vcmp.eq.f32.partialorder %v5176, 8.507059e+37
        %v5178 = vand.u32 %v5151, 2147483648
        %v5179 = vor.u32 1.1754944e-38, %v5178
        %v5180 = vsel %vm5177, %v5179, %v5175
        %v5181 = vmul.f32 1.0, %v5180
        %v5182 = vtanh.pop %v5143
        %5184 = vrot.lane.b32.xlu0 %v5098, 64
        %v5185 = vpop.permute.xlu0 %5184
        %v5187 = vmul.f32 %v5166, %v5185
        %v5188 = vmul.f32 %v5166, %v5182
        %5190 = vrot.lane.b32.xlu0 %v5188, 64
        %v5191 = vpop.permute.xlu0 %5190
        %v5193 = vadd.f32 %v5187, %v5191
        %v5194 = vtanh.pop %v5193
        %v5195 = vmul.f32 %v5181, %v5194
        %5197 = vrot.lane.b32.xlu0 %v5195, 64
        %v5198 = vpop.permute.xlu0 %5197
        %v5199 = vsel %vm574, %v5198, 0
        %5201 = vmatpush.msra.mxu0 0.0
        %5202 = vmatpush.msra.mxu0 0.0
        %5203 = vmatpush.msra.mxu0 0.0
        %5204 = vmatpush.msra.mxu0 0.0
        %5205 = vmatpush.msra.mxu0 0.0
        %5206 = vmatpush.msra.mxu0 0.0
        %5207 = vmatpush.msra.mxu0 0.0
        %5208 = vmatpush.msra.mxu0 0.0
        %5209 = vmatpush.msra.mxu0 %v5095
        %5210 = vmatpush.msra.mxu0 %v5093
        %5211 = vmatpush.msra.mxu0 %v5091
        %5212 = vmatpush.msra.mxu0 %v5089
        %5213 = vmatpush.msra.mxu0 %v5087
        %5214 = vmatpush.msra.mxu0 %v5085
        %5215 = vmatpush.msra.mxu0 %v5083
        %5216 = vmatpush.msra.mxu0 %v5081
        %5217 = vmatmul.f32.gmra.mxu0 %v5199
        %v5218 = vpop.f32.mrf.mxu0
        %v5219 = vadd.f32 0.0, %v5218
        %5220 = vdwg.mxu0
        %5221 = vmatpush.msra.mxu0 0.0
        %5222 = vmatpush.msra.mxu0 0.0
        %5223 = vmatpush.msra.mxu0 0.0
        %5224 = vmatpush.msra.mxu0 0.0
        %5225 = vmatpush.msra.mxu0 0.0
        %5226 = vmatpush.msra.mxu0 0.0
        %5227 = vmatpush.msra.mxu0 0.0
        %5228 = vmatpush.msra.mxu0 0.0
        %5229 = vmatpush.msra.mxu0 %v5096
        %5230 = vmatpush.msra.mxu0 %v5094
        %5231 = vmatpush.msra.mxu0 %v5092
        %5232 = vmatpush.msra.mxu0 %v5090
        %5233 = vmatpush.msra.mxu0 %v5088
        %5234 = vmatpush.msra.mxu0 %v5086
        %5235 = vmatpush.msra.mxu0 %v5084
        %5236 = vmatpush.msra.mxu0 %v5082
        %5237 = vmatmul.f32.gmra.mxu0 %v5199
        %v5238 = vpop.f32.mrf.mxu0
        %v5239 = vadd.f32 0.0, %v5238
        %5240 = vdwg.mxu0
        %v5241 = vadd.f32 %v5020, %v5219
        %v5242 = vadd.f32 %v5061, %v5239
        %v5243 = vxor.u32 %v5241, 2147483648
        %v5244 = vxor.u32 %v5242, 2147483648
        %v5245 = vmul.f32 %v5243, 1.442695
        %v5246 = vpow.pop %v5245
        %v5247 = vmul.f32 %v5244, 1.442695
        %v5248 = vpow.pop %v5247
        %v5249 = vadd.f32 %v5246, 1.0
        %v5250 = vadd.f32 %v5248, 1.0
        %v5251 = vrcp.pop %v5249
        %v5252 = vmul.f32 %v5249, %v5251
        %v5253 = vsub.f32 1.0, %v5252
        %v5254 = vmul.f32 %v5251, %v5253
        %v5255 = vadd.f32 %v5251, %v5254
        %vm5256 = vweird.f32 %v5249
        %vm5257 = vweird.f32 %v5251
        %vm5258 = vmor %vm5256, %vm5257
        %v5259 = vsel %vm5258, %v5251, %v5255
        %v5260 = vand.u32 2147483647, %v5249
        %vm5261 = vcmp.eq.f32.partialorder %v5260, 8.507059e+37
        %v5262 = vand.u32 %v5249, 2147483648
        %v5263 = vor.u32 1.1754944e-38, %v5262
        %v5264 = vsel %vm5261, %v5263, %v5259
        %v5265 = vmul.f32 1.0, %v5264
        %v5266 = vrcp.pop %v5250
        %v5267 = vmul.f32 %v5250, %v5266
        %v5268 = vsub.f32 1.0, %v5267
        %v5269 = vmul.f32 %v5266, %v5268
        %v5270 = vadd.f32 %v5266, %v5269
        %vm5271 = vweird.f32 %v5250
        %vm5272 = vweird.f32 %v5266
        %vm5273 = vmor %vm5271, %vm5272
        %v5274 = vsel %vm5273, %v5266, %v5270
        %v5275 = vand.u32 2147483647, %v5250
        %vm5276 = vcmp.eq.f32.partialorder %v5275, 8.507059e+37
        %v5277 = vand.u32 %v5250, 2147483648
        %v5278 = vor.u32 1.1754944e-38, %v5277
        %v5279 = vsel %vm5276, %v5278, %v5274
        %v5280 = vmul.f32 1.0, %v5279
        %v5281 = vtanh.pop %v5242
        %v5282 = vmul.f32 %v5265, %v5193
        %v5283 = vmul.f32 %v5265, %v5281
        %5285 = vrot.lane.b32.xlu0 %v5283, 64
        %v5286 = vpop.permute.xlu0 %5285
        %v5288 = vadd.f32 %v5282, %v5286
        %v5289 = vtanh.pop %v5288
        %v5290 = vmul.f32 %v5280, %v5289
        %5292 = vrot.lane.b32.xlu0 %v5290, 64
        %v5293 = vpop.permute.xlu0 %5292
        %v5294 = vsel %vm574, %v5293, 0
        %5296 = vmatpush.msra.mxu0 0.0
        %5297 = vmatpush.msra.mxu0 0.0
        %5298 = vmatpush.msra.mxu0 0.0
        %5299 = vmatpush.msra.mxu0 0.0
        %5300 = vmatpush.msra.mxu0 0.0
        %5301 = vmatpush.msra.mxu0 0.0
        %5302 = vmatpush.msra.mxu0 0.0
        %5303 = vmatpush.msra.mxu0 0.0
        %5304 = vmatpush.msra.mxu0 %v5095
        %5305 = vmatpush.msra.mxu0 %v5093
        %5306 = vmatpush.msra.mxu0 %v5091
        %5307 = vmatpush.msra.mxu0 %v5089
        %5308 = vmatpush.msra.mxu0 %v5087
        %5309 = vmatpush.msra.mxu0 %v5085
        %5310 = vmatpush.msra.mxu0 %v5083
        %5311 = vmatpush.msra.mxu0 %v5081
        %5312 = vmatmul.f32.gmra.mxu0 %v5294
        %v5313 = vpop.f32.mrf.mxu0
        %v5314 = vadd.f32 0.0, %v5313
        %5315 = vdwg.mxu0
        %5316 = vmatpush.msra.mxu0 0.0
        %5317 = vmatpush.msra.mxu0 0.0
        %5318 = vmatpush.msra.mxu0 0.0
        %5319 = vmatpush.msra.mxu0 0.0
        %5320 = vmatpush.msra.mxu0 0.0
        %5321 = vmatpush.msra.mxu0 0.0
        %5322 = vmatpush.msra.mxu0 0.0
        %5323 = vmatpush.msra.mxu0 0.0
        %5324 = vmatpush.msra.mxu0 %v5096
        %5325 = vmatpush.msra.mxu0 %v5094
        %5326 = vmatpush.msra.mxu0 %v5092
        %5327 = vmatpush.msra.mxu0 %v5090
        %5328 = vmatpush.msra.mxu0 %v5088
        %5329 = vmatpush.msra.mxu0 %v5086
        %5330 = vmatpush.msra.mxu0 %v5084
        %5331 = vmatpush.msra.mxu0 %v5082
        %5332 = vmatmul.f32.gmra.mxu0 %v5294
        %v5333 = vpop.f32.mrf.mxu0
        %v5334 = vadd.f32 0.0, %v5333
        %5335 = vdwg.mxu0
        %v5336 = vadd.f32 %v5023, %v5314
        %v5337 = vadd.f32 %v5064, %v5334
        %v5338 = vxor.u32 %v5336, 2147483648
        %v5339 = vxor.u32 %v5337, 2147483648
        %v5340 = vmul.f32 %v5338, 1.442695
        %v5341 = vpow.pop %v5340
        %v5342 = vmul.f32 %v5339, 1.442695
        %v5343 = vpow.pop %v5342
        %v5344 = vadd.f32 %v5341, 1.0
        %v5345 = vadd.f32 %v5343, 1.0
        %v5346 = vrcp.pop %v5344
        %v5347 = vmul.f32 %v5344, %v5346
        %v5348 = vsub.f32 1.0, %v5347
        %v5349 = vmul.f32 %v5346, %v5348
        %v5350 = vadd.f32 %v5346, %v5349
        %vm5351 = vweird.f32 %v5344
        %vm5352 = vweird.f32 %v5346
        %vm5353 = vmor %vm5351, %vm5352
        %v5354 = vsel %vm5353, %v5346, %v5350
        %v5355 = vand.u32 2147483647, %v5344
        %vm5356 = vcmp.eq.f32.partialorder %v5355, 8.507059e+37
        %v5357 = vand.u32 %v5344, 2147483648
        %v5358 = vor.u32 1.1754944e-38, %v5357
        %v5359 = vsel %vm5356, %v5358, %v5354
        %v5360 = vmul.f32 1.0, %v5359
        %v5361 = vrcp.pop %v5345
        %v5362 = vmul.f32 %v5345, %v5361
        %v5363 = vsub.f32 1.0, %v5362
        %v5364 = vmul.f32 %v5361, %v5363
        %v5365 = vadd.f32 %v5361, %v5364
        %vm5366 = vweird.f32 %v5345
        %vm5367 = vweird.f32 %v5361
        %vm5368 = vmor %vm5366, %vm5367
        %v5369 = vsel %vm5368, %v5361, %v5365
        %v5370 = vand.u32 2147483647, %v5345
        %vm5371 = vcmp.eq.f32.partialorder %v5370, 8.507059e+37
        %v5372 = vand.u32 %v5345, 2147483648
        %v5373 = vor.u32 1.1754944e-38, %v5372
        %v5374 = vsel %vm5371, %v5373, %v5369
        %v5375 = vmul.f32 1.0, %v5374
        %v5376 = vtanh.pop %v5337
        %v5377 = vmul.f32 %v5360, %v5288
        %v5378 = vmul.f32 %v5360, %v5376
        %5380 = vrot.lane.b32.xlu0 %v5378, 64
        %v5381 = vpop.permute.xlu0 %5380
        %v5383 = vadd.f32 %v5377, %v5381
        %v5384 = vtanh.pop %v5383
        %v5385 = vmul.f32 %v5375, %v5384
        %5387 = vrot.lane.b32.xlu0 %v5385, 64
        %v5388 = vpop.permute.xlu0 %5387
        %v5389 = vsel %vm574, %v5388, 0
        %5391 = vmatpush.msra.mxu0 0.0
        %5392 = vmatpush.msra.mxu0 0.0
        %5393 = vmatpush.msra.mxu0 0.0
        %5394 = vmatpush.msra.mxu0 0.0
        %5395 = vmatpush.msra.mxu0 0.0
        %5396 = vmatpush.msra.mxu0 0.0
        %5397 = vmatpush.msra.mxu0 0.0
        %5398 = vmatpush.msra.mxu0 0.0
        %5399 = vmatpush.msra.mxu0 %v5095
        %5400 = vmatpush.msra.mxu0 %v5093
        %5401 = vmatpush.msra.mxu0 %v5091
        %5402 = vmatpush.msra.mxu0 %v5089
        %5403 = vmatpush.msra.mxu0 %v5087
        %5404 = vmatpush.msra.mxu0 %v5085
        %5405 = vmatpush.msra.mxu0 %v5083
        %5406 = vmatpush.msra.mxu0 %v5081
        %5407 = vmatmul.f32.gmra.mxu0 %v5389
        %v5408 = vpop.f32.mrf.mxu0
        %v5409 = vadd.f32 0.0, %v5408
        %5410 = vdwg.mxu0
        %5411 = vmatpush.msra.mxu0 0.0
        %5412 = vmatpush.msra.mxu0 0.0
        %5413 = vmatpush.msra.mxu0 0.0
        %5414 = vmatpush.msra.mxu0 0.0
        %5415 = vmatpush.msra.mxu0 0.0
        %5416 = vmatpush.msra.mxu0 0.0
        %5417 = vmatpush.msra.mxu0 0.0
        %5418 = vmatpush.msra.mxu0 0.0
        %5419 = vmatpush.msra.mxu0 %v5096
        %5420 = vmatpush.msra.mxu0 %v5094
        %5421 = vmatpush.msra.mxu0 %v5092
        %5422 = vmatpush.msra.mxu0 %v5090
        %5423 = vmatpush.msra.mxu0 %v5088
        %5424 = vmatpush.msra.mxu0 %v5086
        %5425 = vmatpush.msra.mxu0 %v5084
        %5426 = vmatpush.msra.mxu0 %v5082
        %5427 = vmatmul.f32.gmra.mxu0 %v5389
        %v5428 = vpop.f32.mrf.mxu0
        %v5429 = vadd.f32 0.0, %v5428
        %5430 = vdwg.mxu0
        %v5431 = vadd.f32 %v5026, %v5409
        %v5432 = vadd.f32 %v5067, %v5429
        %v5433 = vxor.u32 %v5431, 2147483648
        %v5434 = vxor.u32 %v5432, 2147483648
        %v5435 = vmul.f32 %v5433, 1.442695
        %v5436 = vpow.pop %v5435
        %v5437 = vmul.f32 %v5434, 1.442695
        %v5438 = vpow.pop %v5437
        %v5439 = vadd.f32 %v5436, 1.0
        %v5440 = vadd.f32 %v5438, 1.0
        %v5441 = vrcp.pop %v5439
        %v5442 = vmul.f32 %v5439, %v5441
        %v5443 = vsub.f32 1.0, %v5442
        %v5444 = vmul.f32 %v5441, %v5443
        %v5445 = vadd.f32 %v5441, %v5444
        %vm5446 = vweird.f32 %v5439
        %vm5447 = vweird.f32 %v5441
        %vm5448 = vmor %vm5446, %vm5447
        %v5449 = vsel %vm5448, %v5441, %v5445
        %v5450 = vand.u32 2147483647, %v5439
        %vm5451 = vcmp.eq.f32.partialorder %v5450, 8.507059e+37
        %v5452 = vand.u32 %v5439, 2147483648
        %v5453 = vor.u32 1.1754944e-38, %v5452
        %v5454 = vsel %vm5451, %v5453, %v5449
        %v5455 = vmul.f32 1.0, %v5454
        %v5456 = vrcp.pop %v5440
        %v5457 = vmul.f32 %v5440, %v5456
        %v5458 = vsub.f32 1.0, %v5457
        %v5459 = vmul.f32 %v5456, %v5458
        %v5460 = vadd.f32 %v5456, %v5459
        %vm5461 = vweird.f32 %v5440
        %vm5462 = vweird.f32 %v5456
        %vm5463 = vmor %vm5461, %vm5462
        %v5464 = vsel %vm5463, %v5456, %v5460
        %v5465 = vand.u32 2147483647, %v5440
        %vm5466 = vcmp.eq.f32.partialorder %v5465, 8.507059e+37
        %v5467 = vand.u32 %v5440, 2147483648
        %v5468 = vor.u32 1.1754944e-38, %v5467
        %v5469 = vsel %vm5466, %v5468, %v5464
        %v5470 = vmul.f32 1.0, %v5469
        %v5471 = vtanh.pop %v5432
        %v5472 = vmul.f32 %v5455, %v5383
        %v5473 = vmul.f32 %v5455, %v5471
        %5475 = vrot.lane.b32.xlu0 %v5473, 64
        %v5476 = vpop.permute.xlu0 %5475
        %v5478 = vadd.f32 %v5472, %v5476
        %v5479 = vtanh.pop %v5478
        %v5480 = vmul.f32 %v5470, %v5479
        %5482 = vrot.lane.b32.xlu0 %v5480, 64
        %v5483 = vpop.permute.xlu0 %5482
        %v5484 = vsel %vm574, %v5483, 0
        %5486 = vmatpush.msra.mxu0 0.0
        %5487 = vmatpush.msra.mxu0 0.0
        %5488 = vmatpush.msra.mxu0 0.0
        %5489 = vmatpush.msra.mxu0 0.0
        %5490 = vmatpush.msra.mxu0 0.0
        %5491 = vmatpush.msra.mxu0 0.0
        %5492 = vmatpush.msra.mxu0 0.0
        %5493 = vmatpush.msra.mxu0 0.0
        %5494 = vmatpush.msra.mxu0 %v5095
        %5495 = vmatpush.msra.mxu0 %v5093
        %5496 = vmatpush.msra.mxu0 %v5091
        %5497 = vmatpush.msra.mxu0 %v5089
        %5498 = vmatpush.msra.mxu0 %v5087
        %5499 = vmatpush.msra.mxu0 %v5085
        %5500 = vmatpush.msra.mxu0 %v5083
        %5501 = vmatpush.msra.mxu0 %v5081
        %5502 = vmatmul.f32.gmra.mxu0 %v5484
        %v5503 = vpop.f32.mrf.mxu0
        %v5504 = vadd.f32 0.0, %v5503
        %5505 = vdwg.mxu0
        %5506 = vmatpush.msra.mxu0 0.0
        %5507 = vmatpush.msra.mxu0 0.0
        %5508 = vmatpush.msra.mxu0 0.0
        %5509 = vmatpush.msra.mxu0 0.0
        %5510 = vmatpush.msra.mxu0 0.0
        %5511 = vmatpush.msra.mxu0 0.0
        %5512 = vmatpush.msra.mxu0 0.0
        %5513 = vmatpush.msra.mxu0 0.0
        %5514 = vmatpush.msra.mxu0 %v5096
        %5515 = vmatpush.msra.mxu0 %v5094
        %5516 = vmatpush.msra.mxu0 %v5092
        %5517 = vmatpush.msra.mxu0 %v5090
        %5518 = vmatpush.msra.mxu0 %v5088
        %5519 = vmatpush.msra.mxu0 %v5086
        %5520 = vmatpush.msra.mxu0 %v5084
        %5521 = vmatpush.msra.mxu0 %v5082
        %5522 = vmatmul.f32.gmra.mxu0 %v5484
        %v5523 = vpop.f32.mrf.mxu0
        %v5524 = vadd.f32 0.0, %v5523
        %5525 = vdwg.mxu0
        %v5526 = vadd.f32 %v5029, %v5504
        %v5527 = vadd.f32 %v5070, %v5524
        %v5528 = vxor.u32 %v5526, 2147483648
        %v5529 = vxor.u32 %v5527, 2147483648
        %v5530 = vmul.f32 %v5528, 1.442695
        %v5531 = vpow.pop %v5530
        %v5532 = vmul.f32 %v5529, 1.442695
        %v5533 = vpow.pop %v5532
        %v5534 = vadd.f32 %v5531, 1.0
        %v5535 = vadd.f32 %v5533, 1.0
        %v5536 = vrcp.pop %v5534
        %v5537 = vmul.f32 %v5534, %v5536
        %v5538 = vsub.f32 1.0, %v5537
        %v5539 = vmul.f32 %v5536, %v5538
        %v5540 = vadd.f32 %v5536, %v5539
        %vm5541 = vweird.f32 %v5534
        %vm5542 = vweird.f32 %v5536
        %vm5543 = vmor %vm5541, %vm5542
        %v5544 = vsel %vm5543, %v5536, %v5540
        %v5545 = vand.u32 2147483647, %v5534
        %vm5546 = vcmp.eq.f32.partialorder %v5545, 8.507059e+37
        %v5547 = vand.u32 %v5534, 2147483648
        %v5548 = vor.u32 1.1754944e-38, %v5547
        %v5549 = vsel %vm5546, %v5548, %v5544
        %v5550 = vmul.f32 1.0, %v5549
        %v5551 = vrcp.pop %v5535
        %v5552 = vmul.f32 %v5535, %v5551
        %v5553 = vsub.f32 1.0, %v5552
        %v5554 = vmul.f32 %v5551, %v5553
        %v5555 = vadd.f32 %v5551, %v5554
        %vm5556 = vweird.f32 %v5535
        %vm5557 = vweird.f32 %v5551
        %vm5558 = vmor %vm5556, %vm5557
        %v5559 = vsel %vm5558, %v5551, %v5555
        %v5560 = vand.u32 2147483647, %v5535
        %vm5561 = vcmp.eq.f32.partialorder %v5560, 8.507059e+37
        %v5562 = vand.u32 %v5535, 2147483648
        %v5563 = vor.u32 1.1754944e-38, %v5562
        %v5564 = vsel %vm5561, %v5563, %v5559
        %v5565 = vmul.f32 1.0, %v5564
        %v5566 = vtanh.pop %v5527
        %v5567 = vmul.f32 %v5550, %v5478
        %v5568 = vmul.f32 %v5550, %v5566
        %5570 = vrot.lane.b32.xlu0 %v5568, 64
        %v5571 = vpop.permute.xlu0 %5570
        %v5573 = vadd.f32 %v5567, %v5571
        %v5574 = vtanh.pop %v5573
        %v5575 = vmul.f32 %v5565, %v5574
        %5577 = vrot.lane.b32.xlu0 %v5575, 64
        %v5578 = vpop.permute.xlu0 %5577
        %v5579 = vsel %vm574, %v5578, 0
        %5581 = vmatpush.msra.mxu0 0.0
        %5582 = vmatpush.msra.mxu0 0.0
        %5583 = vmatpush.msra.mxu0 0.0
        %5584 = vmatpush.msra.mxu0 0.0
        %5585 = vmatpush.msra.mxu0 0.0
        %5586 = vmatpush.msra.mxu0 0.0
        %5587 = vmatpush.msra.mxu0 0.0
        %5588 = vmatpush.msra.mxu0 0.0
        %5589 = vmatpush.msra.mxu0 %v5095
        %5590 = vmatpush.msra.mxu0 %v5093
        %5591 = vmatpush.msra.mxu0 %v5091
        %5592 = vmatpush.msra.mxu0 %v5089
        %5593 = vmatpush.msra.mxu0 %v5087
        %5594 = vmatpush.msra.mxu0 %v5085
        %5595 = vmatpush.msra.mxu0 %v5083
        %5596 = vmatpush.msra.mxu0 %v5081
        %5597 = vmatmul.f32.gmra.mxu0 %v5579
        %v5598 = vpop.f32.mrf.mxu0
        %v5599 = vadd.f32 0.0, %v5598
        %5600 = vdwg.mxu0
        %5601 = vmatpush.msra.mxu0 0.0
        %5602 = vmatpush.msra.mxu0 0.0
        %5603 = vmatpush.msra.mxu0 0.0
        %5604 = vmatpush.msra.mxu0 0.0
        %5605 = vmatpush.msra.mxu0 0.0
        %5606 = vmatpush.msra.mxu0 0.0
        %5607 = vmatpush.msra.mxu0 0.0
        %5608 = vmatpush.msra.mxu0 0.0
        %5609 = vmatpush.msra.mxu0 %v5096
        %5610 = vmatpush.msra.mxu0 %v5094
        %5611 = vmatpush.msra.mxu0 %v5092
        %5612 = vmatpush.msra.mxu0 %v5090
        %5613 = vmatpush.msra.mxu0 %v5088
        %5614 = vmatpush.msra.mxu0 %v5086
        %5615 = vmatpush.msra.mxu0 %v5084
        %5616 = vmatpush.msra.mxu0 %v5082
        %5617 = vmatmul.f32.gmra.mxu0 %v5579
        %v5618 = vpop.f32.mrf.mxu0
        %v5619 = vadd.f32 0.0, %v5618
        %5620 = vdwg.mxu0
        %v5621 = vadd.f32 %v5032, %v5599
        %v5622 = vadd.f32 %v5073, %v5619
        %v5623 = vxor.u32 %v5621, 2147483648
        %v5624 = vxor.u32 %v5622, 2147483648
        %v5625 = vmul.f32 %v5623, 1.442695
        %v5626 = vpow.pop %v5625
        %v5627 = vmul.f32 %v5624, 1.442695
        %v5628 = vpow.pop %v5627
        %v5629 = vadd.f32 %v5626, 1.0
        %v5630 = vadd.f32 %v5628, 1.0
        %v5631 = vrcp.pop %v5629
        %v5632 = vmul.f32 %v5629, %v5631
        %v5633 = vsub.f32 1.0, %v5632
        %v5634 = vmul.f32 %v5631, %v5633
        %v5635 = vadd.f32 %v5631, %v5634
        %vm5636 = vweird.f32 %v5629
        %vm5637 = vweird.f32 %v5631
        %vm5638 = vmor %vm5636, %vm5637
        %v5639 = vsel %vm5638, %v5631, %v5635
        %v5640 = vand.u32 2147483647, %v5629
        %vm5641 = vcmp.eq.f32.partialorder %v5640, 8.507059e+37
        %v5642 = vand.u32 %v5629, 2147483648
        %v5643 = vor.u32 1.1754944e-38, %v5642
        %v5644 = vsel %vm5641, %v5643, %v5639
        %v5645 = vmul.f32 1.0, %v5644
        %v5646 = vrcp.pop %v5630
        %v5647 = vmul.f32 %v5630, %v5646
        %v5648 = vsub.f32 1.0, %v5647
        %v5649 = vmul.f32 %v5646, %v5648
        %v5650 = vadd.f32 %v5646, %v5649
        %vm5651 = vweird.f32 %v5630
        %vm5652 = vweird.f32 %v5646
        %vm5653 = vmor %vm5651, %vm5652
        %v5654 = vsel %vm5653, %v5646, %v5650
        %v5655 = vand.u32 2147483647, %v5630
        %vm5656 = vcmp.eq.f32.partialorder %v5655, 8.507059e+37
        %v5657 = vand.u32 %v5630, 2147483648
        %v5658 = vor.u32 1.1754944e-38, %v5657
        %v5659 = vsel %vm5656, %v5658, %v5654
        %v5660 = vmul.f32 1.0, %v5659
        %v5661 = vtanh.pop %v5622
        %v5662 = vmul.f32 %v5645, %v5573
        %v5663 = vmul.f32 %v5645, %v5661
        %5665 = vrot.lane.b32.xlu0 %v5663, 64
        %v5666 = vpop.permute.xlu0 %5665
        %v5668 = vadd.f32 %v5662, %v5666
        %v5669 = vtanh.pop %v5668
        %v5670 = vmul.f32 %v5660, %v5669
        %5672 = vrot.lane.b32.xlu0 %v5670, 64
        %v5673 = vpop.permute.xlu0 %5672
        %v5674 = vsel %vm574, %v5673, 0
        %5676 = vmatpush.msra.mxu0 0.0
        %5677 = vmatpush.msra.mxu0 0.0
        %5678 = vmatpush.msra.mxu0 0.0
        %5679 = vmatpush.msra.mxu0 0.0
        %5680 = vmatpush.msra.mxu0 0.0
        %5681 = vmatpush.msra.mxu0 0.0
        %5682 = vmatpush.msra.mxu0 0.0
        %5683 = vmatpush.msra.mxu0 0.0
        %5684 = vmatpush.msra.mxu0 %v5095
        %5685 = vmatpush.msra.mxu0 %v5093
        %5686 = vmatpush.msra.mxu0 %v5091
        %5687 = vmatpush.msra.mxu0 %v5089
        %5688 = vmatpush.msra.mxu0 %v5087
        %5689 = vmatpush.msra.mxu0 %v5085
        %5690 = vmatpush.msra.mxu0 %v5083
        %5691 = vmatpush.msra.mxu0 %v5081
        %5692 = vmatmul.f32.gmra.mxu0 %v5674
        %v5693 = vpop.f32.mrf.mxu0
        %v5694 = vadd.f32 0.0, %v5693
        %5695 = vdwg.mxu0
        %5696 = vmatpush.msra.mxu0 0.0
        %5697 = vmatpush.msra.mxu0 0.0
        %5698 = vmatpush.msra.mxu0 0.0
        %5699 = vmatpush.msra.mxu0 0.0
        %5700 = vmatpush.msra.mxu0 0.0
        %5701 = vmatpush.msra.mxu0 0.0
        %5702 = vmatpush.msra.mxu0 0.0
        %5703 = vmatpush.msra.mxu0 0.0
        %5704 = vmatpush.msra.mxu0 %v5096
        %5705 = vmatpush.msra.mxu0 %v5094
        %5706 = vmatpush.msra.mxu0 %v5092
        %5707 = vmatpush.msra.mxu0 %v5090
        %5708 = vmatpush.msra.mxu0 %v5088
        %5709 = vmatpush.msra.mxu0 %v5086
        %5710 = vmatpush.msra.mxu0 %v5084
        %5711 = vmatpush.msra.mxu0 %v5082
        %5712 = vmatmul.f32.gmra.mxu0 %v5674
        %v5713 = vpop.f32.mrf.mxu0
        %v5714 = vadd.f32 0.0, %v5713
        %5715 = vdwg.mxu0
        %v5716 = vadd.f32 %v5035, %v5694
        %v5717 = vadd.f32 %v5076, %v5714
        %v5718 = vxor.u32 %v5716, 2147483648
        %v5719 = vxor.u32 %v5717, 2147483648
        %v5720 = vmul.f32 %v5718, 1.442695
        %v5721 = vpow.pop %v5720
        %v5722 = vmul.f32 %v5719, 1.442695
        %v5723 = vpow.pop %v5722
        %v5724 = vadd.f32 %v5721, 1.0
        %v5725 = vadd.f32 %v5723, 1.0
        %v5726 = vrcp.pop %v5724
        %v5727 = vmul.f32 %v5724, %v5726
        %v5728 = vsub.f32 1.0, %v5727
        %v5729 = vmul.f32 %v5726, %v5728
        %v5730 = vadd.f32 %v5726, %v5729
        %vm5731 = vweird.f32 %v5724
        %vm5732 = vweird.f32 %v5726
        %vm5733 = vmor %vm5731, %vm5732
        %v5734 = vsel %vm5733, %v5726, %v5730
        %v5735 = vand.u32 2147483647, %v5724
        %vm5736 = vcmp.eq.f32.partialorder %v5735, 8.507059e+37
        %v5737 = vand.u32 %v5724, 2147483648
        %v5738 = vor.u32 1.1754944e-38, %v5737
        %v5739 = vsel %vm5736, %v5738, %v5734
        %v5740 = vmul.f32 1.0, %v5739
        %v5741 = vrcp.pop %v5725
        %v5742 = vmul.f32 %v5725, %v5741
        %v5743 = vsub.f32 1.0, %v5742
        %v5744 = vmul.f32 %v5741, %v5743
        %v5745 = vadd.f32 %v5741, %v5744
        %vm5746 = vweird.f32 %v5725
        %vm5747 = vweird.f32 %v5741
        %vm5748 = vmor %vm5746, %vm5747
        %v5749 = vsel %vm5748, %v5741, %v5745
        %v5750 = vand.u32 2147483647, %v5725
        %vm5751 = vcmp.eq.f32.partialorder %v5750, 8.507059e+37
        %v5752 = vand.u32 %v5725, 2147483648
        %v5753 = vor.u32 1.1754944e-38, %v5752
        %v5754 = vsel %vm5751, %v5753, %v5749
        %v5755 = vmul.f32 1.0, %v5754
        %v5756 = vtanh.pop %v5717
        %v5757 = vmul.f32 %v5740, %v5668
        %v5758 = vmul.f32 %v5740, %v5756
        %5760 = vrot.lane.b32.xlu0 %v5758, 64
        %v5761 = vpop.permute.xlu0 %5760
        %v5763 = vadd.f32 %v5757, %v5761
        %v5764 = vtanh.pop %v5763
        %v5765 = vmul.f32 %v5755, %v5764
        %5767 = vrot.lane.b32.xlu0 %v5765, 64
        %v5768 = vpop.permute.xlu0 %5767
        %v5769 = vsel %vm574, %v5768, 0
        %5771 = vmatpush.msra.mxu0 0.0
        %5772 = vmatpush.msra.mxu0 0.0
        %5773 = vmatpush.msra.mxu0 0.0
        %5774 = vmatpush.msra.mxu0 0.0
        %5775 = vmatpush.msra.mxu0 0.0
        %5776 = vmatpush.msra.mxu0 0.0
        %5777 = vmatpush.msra.mxu0 0.0
        %5778 = vmatpush.msra.mxu0 0.0
        %5779 = vmatpush.msra.mxu0 %v5095
        %5780 = vmatpush.msra.mxu0 %v5093
        %5781 = vmatpush.msra.mxu0 %v5091
        %5782 = vmatpush.msra.mxu0 %v5089
        %5783 = vmatpush.msra.mxu0 %v5087
        %5784 = vmatpush.msra.mxu0 %v5085
        %5785 = vmatpush.msra.mxu0 %v5083
        %5786 = vmatpush.msra.mxu0 %v5081
        %5787 = vmatmul.f32.gmra.mxu0 %v5769
        %v5788 = vpop.f32.mrf.mxu0
        %v5789 = vadd.f32 0.0, %v5788
        %5790 = vdwg.mxu0
        %5791 = vmatpush.msra.mxu0 0.0
        %5792 = vmatpush.msra.mxu0 0.0
        %5793 = vmatpush.msra.mxu0 0.0
        %5794 = vmatpush.msra.mxu0 0.0
        %5795 = vmatpush.msra.mxu0 0.0
        %5796 = vmatpush.msra.mxu0 0.0
        %5797 = vmatpush.msra.mxu0 0.0
        %5798 = vmatpush.msra.mxu0 0.0
        %5799 = vmatpush.msra.mxu0 %v5096
        %5800 = vmatpush.msra.mxu0 %v5094
        %5801 = vmatpush.msra.mxu0 %v5092
        %5802 = vmatpush.msra.mxu0 %v5090
        %5803 = vmatpush.msra.mxu0 %v5088
        %5804 = vmatpush.msra.mxu0 %v5086
        %5805 = vmatpush.msra.mxu0 %v5084
        %5806 = vmatpush.msra.mxu0 %v5082
        %5807 = vmatmul.f32.gmra.mxu0 %v5769
        %v5808 = vpop.f32.mrf.mxu0
        %v5809 = vadd.f32 0.0, %v5808
        %5810 = vdwg.mxu0
        %v5811 = vadd.f32 %v5038, %v5789
        %v5812 = vadd.f32 %v5079, %v5809
        %v5813 = vxor.u32 %v5811, 2147483648
        %v5814 = vxor.u32 %v5812, 2147483648
        %v5815 = vmul.f32 %v5813, 1.442695
        %v5816 = vpow.pop %v5815
        %v5817 = vmul.f32 %v5814, 1.442695
        %v5818 = vpow.pop %v5817
        %v5819 = vadd.f32 %v5816, 1.0
        %v5820 = vadd.f32 %v5818, 1.0
        %v5821 = vrcp.pop %v5819
        %v5822 = vmul.f32 %v5819, %v5821
        %v5823 = vsub.f32 1.0, %v5822
        %v5824 = vmul.f32 %v5821, %v5823
        %v5825 = vadd.f32 %v5821, %v5824
        %vm5826 = vweird.f32 %v5819
        %vm5827 = vweird.f32 %v5821
        %vm5828 = vmor %vm5826, %vm5827
        %v5829 = vsel %vm5828, %v5821, %v5825
        %v5830 = vand.u32 2147483647, %v5819
        %vm5831 = vcmp.eq.f32.partialorder %v5830, 8.507059e+37
        %v5832 = vand.u32 %v5819, 2147483648
        %v5833 = vor.u32 1.1754944e-38, %v5832
        %v5834 = vsel %vm5831, %v5833, %v5829
        %v5835 = vmul.f32 1.0, %v5834
        %v5836 = vrcp.pop %v5820
        %v5837 = vmul.f32 %v5820, %v5836
        %v5838 = vsub.f32 1.0, %v5837
        %v5839 = vmul.f32 %v5836, %v5838
        %v5840 = vadd.f32 %v5836, %v5839
        %vm5841 = vweird.f32 %v5820
        %vm5842 = vweird.f32 %v5836
        %vm5843 = vmor %vm5841, %vm5842
        %v5844 = vsel %vm5843, %v5836, %v5840
        %v5845 = vand.u32 2147483647, %v5820
        %vm5846 = vcmp.eq.f32.partialorder %v5845, 8.507059e+37
        %v5847 = vand.u32 %v5820, 2147483648
        %v5848 = vor.u32 1.1754944e-38, %v5847
        %v5849 = vsel %vm5846, %v5848, %v5844
        %v5850 = vmul.f32 1.0, %v5849
        %v5851 = vtanh.pop %v5812
        %v5852 = vmul.f32 %v5835, %v5763
        %v5853 = vmul.f32 %v5835, %v5851
        %5855 = vrot.lane.b32.xlu0 %v5853, 64
        %v5856 = vpop.permute.xlu0 %5855
        %v5858 = vadd.f32 %v5852, %v5856
        %v5859 = vtanh.pop %v5858
        %v5860 = vmul.f32 %v5850, %v5859
        %5862 = vrot.lane.b32.xlu0 %v5860, 64
        %v5863 = vpop.permute.xlu0 %5862
        %5865 = vst.msk [vmem:[#allocation4] sm:$0xff] %vm574, %v5863
        %5867 = vrot.lane.b32.xlu0 %v5858, 64
        %v5868 = vpop.permute.xlu0 %5867
        %5870 = vst.msk [vmem:[#allocation5] sm:$0xff] %vm574, %v5868
        %p5871 = scmp.eq.s32.totalorder %s23, 1
        // Predicated region
        $region107: #{tpu_custom_call.1} parent=89 // pred_check
          %p5872 = pneg %p5871
        $region108: #{tpu_custom_call.1} parent=89 // pred_check_branch
          %5874 = sbr.rel (%p5872) target = $region110
        $region109: #{tpu_custom_call.1} parent=89 // pred_region
          %v5875 = vld [vmem:[#allocation4] sm:$0xff]
          %v5876 = vld [vmem:[%s7] sm:$0xff]
          %v5877 = vld [vmem:[%s7 + $0x8] sm:$0xff]
          %v5878 = vld [vmem:[%s7 + $0x10] sm:$0xff]
          %v5879 = vld [vmem:[%s7 + $0x18] sm:$0xff]
          %v5880 = vld [vmem:[%s7 + $0x20] sm:$0xff]
          %v5881 = vld [vmem:[%s7 + $0x28] sm:$0xff]
          %v5882 = vld [vmem:[%s7 + $0x30] sm:$0xff]
          %v5883 = vld [vmem:[%s7 + $0x38] sm:$0xff]
          %v5884 = vld [vmem:[%s8] sm:$0x1]
          %v5886 = vperm.slane %v5884, 0
          %v5889 = vsel %vm574, %v5875, 0
          %5891 = vmatpush.msra.mxu0 0.0
          %5892 = vmatpush.msra.mxu0 0.0
          %5893 = vmatpush.msra.mxu0 0.0
          %5894 = vmatpush.msra.mxu0 0.0
          %5895 = vmatpush.msra.mxu0 0.0
          %5896 = vmatpush.msra.mxu0 0.0
          %5897 = vmatpush.msra.mxu0 0.0
          %5898 = vmatpush.msra.mxu0 0.0
          %5899 = vmatpush.msra.mxu0 %v5883
          %5900 = vmatpush.msra.mxu0 %v5882
          %5901 = vmatpush.msra.mxu0 %v5881
          %5902 = vmatpush.msra.mxu0 %v5880
          %5903 = vmatpush.msra.mxu0 %v5879
          %5904 = vmatpush.msra.mxu0 %v5878
          %5905 = vmatpush.msra.mxu0 %v5877
          %5906 = vmatpush.msra.mxu0 %v5876
          %5907 = vmatmul.f32.gmra.mxu0 %v5889
          %v5908 = vpop.f32.mrf.mxu0
          %v5909 = vadd.f32 %v5886, %v5908
          %5910 = vdwg.mxu0
          %vm5911 = vcmask 392192
          %5912 = vst.msk [vmem:[#allocation13] sm:$0xff] %vm5911, %v5909
        $region110: #{tpu_custom_call.1} parent=89 // pred_fallthru
          _
        // Predicated region
        $region111: #{tpu_custom_call.1} parent=89 // pred_check
          %p5913 = pneg %p230
        $region112: #{tpu_custom_call.1} parent=89 // pred_check_branch
          %5915 = sbr.rel (%p5913) target = $region114
        $region113: #{tpu_custom_call.1} parent=89 // pred_region
          %5917 = vsyncadd [#allocation10], 0
          %s5919 = sshll.u32 [#allocation13], 4
          %s5920 = int_to_ptr.vmem [resolvable:$true] %s5919
          %s5921 = sshll.u32 %s9, 4
          %s5922 = int_to_ptr.hbm [resolvable:$true] %s5921
          %5924 = dma.vmem_to_hbm [thread:$0]  %s5920, 128, %s5922, [#allocation10]
        $region114: #{tpu_custom_call.1} parent=89 // pred_fallthru
          _
        // Predicated region
        $region115: #{tpu_custom_call.1} parent=89 // pred_check
          %p5925 = pneg %p230
        $region116: #{tpu_custom_call.1} parent=89 // pred_check_branch
          %5927 = sbr.rel (%p5925) target = $region118
        $region117: #{tpu_custom_call.1} parent=89 // pred_region
          %5929 = dma.done [#allocation10], 128
        $region118: #{tpu_custom_call.1} parent=89 // pred_fallthru
          _
      $region90: #{tpu_custom_call.1} parent=5 // pred_fallthru
        _
      %p5930 = scmp.le.s32.totalorder 2, %s18
      // Predicated region
      $region119: #{tpu_custom_call.1} parent=5 // pred_check
        %p5931 = pneg %p5930
      $region120: #{tpu_custom_call.1} parent=5 // pred_check_branch
        %5933 = sbr.rel (%p5931) target = $region122
      $region121: #{tpu_custom_call.1} parent=5 // pred_region
        %s5934 = ssub.s32 %s18, 2
      $region122: #{tpu_custom_call.1} parent=5 // pred_fallthru
        _
    $region6: #{tpu_custom_call.1} parent=1 // loop_footer
      %s22 = sadd.s32 1, %s18
    $region7: #{tpu_custom_call.1} parent=1 // loop_footer_branch
      %17 = sbr.rel target = $region3
    $region8: #{tpu_custom_call.1} parent=1 // loop_exit
      _
    %5935 = vsyncpa [#allocation9], 1
    %s5936 = scalar_lea.sflag [#allocation9], 1
    %5937 = vsyncpa %s5936, 1
    %5938 = vsyncpa [#allocation12], 1
    %5939 = vsyncpa [#allocation10], 1
    %s5940 = scalar_lea.sflag [#allocation10], 1
    %5941 = vsyncpa %s5940, 1

</llo_original>
